<compile_context>
chip_gen: v7x
topology: tpu7x:2x2x1
jax: 0.10.0
libtpu: 0.0.40
codegen_flags: <defaults>
</compile_context>

<pallas_src>
import functools

import jax
import jax.numpy as jnp
from jax.experimental import pallas as pl
from jax.experimental.pallas import tpu as pltpu


def _round_up(x, m):
    return (x + m - 1) // m * m


# ---------------------------------------------------------------------------
# Kernel: one (batch, hw-tile) grid step.  All activations are (C, T) tiles.
# ---------------------------------------------------------------------------
def _spatial_ocr_kernel(x_ref, p_ref,
                        wq1, bq1, wq2, bq2,
                        wk1, bk1, wk2, bk2,
                        wv, bv, wo, bo,
                        wfa, wfb, bf,
                        out_ref, *, inv_sqrt_ck):
    xb = x_ref[0]                                  # (Cin, T)  bf16 from HBM
    pb = p_ref[0]                                  # (Cin, K)  bf16 from HBM

    def cba(inp_b16, w_ref, b_ref):
        # conv1x1 (BN scale pre-folded into w) + bias + ReLU, f32 accumulation.
        # Output is consumed only as an MXU operand => return bf16 directly so
        # the f32 copy is never kept live alongside the bf16 one.
        y = jnp.dot(w_ref[...], inp_b16, preferred_element_type=jnp.float32)
        return jnp.maximum(y + b_ref[...], 0.0).astype(jnp.bfloat16)

    # Projections (key_channels padded to Ckp, a multiple of 16).
    q = cba(cba(xb, wq1, bq1), wq2, bq2)           # (Ckp, T)
    k = cba(cba(pb, wk1, bk1), wk2, bk2)           # (Ckp, K)
    v = cba(pb, wv, bv)                            # (Ckp, K)

    # (K, T) attention layout: proxy axis on sublanes, spatial tile on lanes.
    # sim[j, t] = (k[:, j] . q[:, t]) * Ck**-0.5 ; softmax over proxy axis j.
    sim = jax.lax.dot_general(
        k, q, dimension_numbers=(((0,), (0,)), ((), ())),
        preferred_element_type=jnp.float32) * inv_sqrt_ck          # (K, T)
    sim = sim - jnp.max(sim, axis=0, keepdims=True)                # sublane max
    e = jnp.exp(sim)                                               # lane-dense EUP
    attn = (e * pl.reciprocal(jnp.sum(e, axis=0, keepdims=True),
                              approx=True)).astype(jnp.bfloat16)   # (K, T)

    # ctx[c, t] = sum_j v[c, j] * attn[j, t]   (no relayout needed)
    ctx = jax.lax.dot_general(
        v, attn, dimension_numbers=(((1,), (0,)), ((), ())),
        preferred_element_type=jnp.float32)                        # (Ckp, T)

    context = cba(ctx.astype(jnp.bfloat16), wo, bo)                # (Cin, T)

    # Final conv_bn_act on concat([context, x]) as a split matmul.
    y = jnp.dot(wfa[...], context, preferred_element_type=jnp.float32)
    y = y + jnp.dot(wfb[...], xb, preferred_element_type=jnp.float32)
    out_ref[0] = jnp.maximum(y + bf[...], 0.0).astype(out_ref.dtype)


# ---------------------------------------------------------------------------
# Parameter preparation: fold BN scale into weights, transpose for the
# channels-on-sublanes layout, pad key_channels to the bf16 sublane size (16).
# ---------------------------------------------------------------------------
def prepare_kernel_params(params, ck_align=16):
    ck = params["wq1"].shape[1]
    ckp = _round_up(ck, ck_align)
    pc = ckp - ck
    wdt = jnp.bfloat16

    def foldw(w, s):                    # (Cin_l, Cout_l) * (1, Cout_l)
        return (w * s).astype(jnp.float32)

    def pad_cols(w):
        return jnp.pad(w, ((0, 0), (0, pc)))

    def pad_rows(w):
        return jnp.pad(w, ((0, pc), (0, 0)))

    def bias_col(b, pad=0):             # (1, C) -> (C+pad, 1), padded with 0
        return jnp.pad(b, ((0, 0), (0, pad))).reshape(-1, 1).astype(jnp.float32)

    kp = {}
    kp["wq1"] = pad_cols(foldw(params["wq1"], params["sq1"])).T.astype(wdt)   # (Ckp, Cin)
    kp["bq1"] = bias_col(params["bq1"], pc)
    kp["wq2"] = jnp.pad(foldw(params["wq2"], params["sq2"]),
                        ((0, pc), (0, pc))).T.astype(wdt)                     # (Ckp, Ckp)
    kp["bq2"] = bias_col(params["bq2"], pc)
    kp["wk1"] = pad_cols(foldw(params["wk1"], params["sk1"])).T.astype(wdt)
    kp["bk1"] = bias_col(params["bk1"], pc)
    kp["wk2"] = jnp.pad(foldw(params["wk2"], params["sk2"]),
                        ((0, pc), (0, pc))).T.astype(wdt)
    kp["bk2"] = bias_col(params["bk2"], pc)
    kp["wv"] = pad_cols(foldw(params["wv"], params["sv"])).T.astype(wdt)
    kp["bv"] = bias_col(params["bv"], pc)
    kp["wo"] = pad_rows(foldw(params["wo"], params["so"])).T.astype(wdt)      # (Cin, Ckp)
    kp["bo"] = bias_col(params["bo"])
    kp["wfa"] = foldw(params["wfa"], params["sf"]).T.astype(wdt)              # (Cout, Cin)
    kp["wfb"] = foldw(params["wfb"], params["sf"]).T.astype(wdt)
    kp["bf"] = bias_col(params["bf"])
    return kp, ck, ckp


# ---------------------------------------------------------------------------
# VMEM budgeting / tile selection (per TPU generation).
# ---------------------------------------------------------------------------
def _vmem_budgets():
    """Returns (tile budget bytes, vmem_limit_bytes) for this TPU generation."""
    try:
        cap = int(pltpu.get_tpu_info().vmem_capacity_bytes)
    except Exception:
        cap = 64 * 1024 * 1024                    # conservative (v7x-sized) fallback
    if cap >= 100 * 1024 * 1024:                  # v5e / v6e: 128 MiB physical VMEM
        return 96 * 1024 * 1024, 110 * 1024 * 1024
    return 40 * 1024 * 1024, 48 * 1024 * 1024     # v7x: 64 MiB physical VMEM


def _resident_weight_bytes(kp):
    """VMEM bytes occupied by weights/biases (lane/sublane padded)."""
    total = 0
    for a in kp.values():
        r, c = a.shape
        itm = jnp.dtype(a.dtype).itemsize
        sub = 8 * (4 // itm)                       # f32 -> 8 sublanes, bf16 -> 16
        total += _round_up(r, sub) * _round_up(c, 128) * itm
    # Budget as if double-buffered even though the specs request Buffered(1).
    return 2 * total


def _bytes_per_column(cin, cout, ckp, k):
    """Conservative per-HW-lane VMEM footprint of one grid step."""
    b = 0
    b += 2 * (2 * cin)          # x tile (bf16), double-buffered input
    b += 2 * (4 * cout)         # out tile (f32), double-buffered output
    b += 2 * (2 * ckp)          # bf16 hidden + q projections
    b += 2 * (4 * ckp)          # transient f32 projection epilogue + f32 ctx
    b += 2 * ckp                # ctx cast to bf16
    b += 2 * cin + 4 * cin      # context bf16 + transient f32
    b += 2 * (4 * cout)         # final y f32 (+ ReLU temp)
    b += 3 * (4 * k) + 2 * k    # sim / e / attn (K sublane rows) + attn bf16
    return b


def _pick_tile_hw(hw, per_col, resident, budget):
    """Largest 128-aligned HW tile that fits the per-generation VMEM budget."""
    avail = max(budget - resident, 4 * 1024 * 1024)
    cap = max(128, (avail // per_col) // 128 * 128)
    return min(_round_up(hw, 128), cap)


# ---------------------------------------------------------------------------
# Wrapper
# ---------------------------------------------------------------------------
def spatial_ocr_forward(x_nchw, proxy_nchw, params):
    """x_nchw: (B, Cin, H, W); proxy_nchw: (B, Cin, K, 1) -> (B, Cout, H, W)."""
    B, Cin, H, W = x_nchw.shape
    K = proxy_nchw.shape[2]
    HW = H * W
    Cout = params["wfa"].shape[1]

    kp, ck, ckp = prepare_kernel_params(params)

    budget, vmem_limit = _vmem_budgets()
    tile_hw = _pick_tile_hw(HW, _bytes_per_column(Cin, Cout, ckp, K),
                            _resident_weight_bytes(kp), budget)
    hw_pad = pl.cdiv(HW, tile_hw) * tile_hw

    # bf16 activations at the pallas_call boundary (halves HBM DMA bytes);
    # reshapes are free; zero-padding HW keeps every tile 128-lane aligned
    # (padded columns are independent and sliced off afterwards).
    x_f = x_nchw.reshape(B, Cin, HW).astype(jnp.bfloat16)
    p_f = proxy_nchw.reshape(B, Cin, K).astype(jnp.bfloat16)
    if hw_pad != HW:
        x_f = jnp.pad(x_f, ((0, 0), (0, 0), (0, hw_pad - HW)))

    grid = (B, hw_pad // tile_hw)
    names = ["wq1", "bq1", "wq2", "bq2", "wk1", "bk1", "wk2", "bk2",
             "wv", "bv", "wo", "bo", "wfa", "wfb", "bf"]
    kernel = functools.partial(_spatial_ocr_kernel, inv_sqrt_ck=float(ck) ** -0.5)

    def call(single_buffer_weights):
        if single_buffer_weights and hasattr(pl, "Buffered"):
            w_specs = [pl.BlockSpec(kp[n].shape, lambda b, t: (0, 0),
                                    pipeline_mode=pl.Buffered(1)) for n in names]
        else:
            w_specs = [pl.BlockSpec(kp[n].shape, lambda b, t: (0, 0)) for n in names]
        return pl.pallas_call(
            kernel,
            out_shape=jax.ShapeDtypeStruct((B, Cout, hw_pad), jnp.float32),
            grid_spec=pltpu.PrefetchScalarGridSpec(
                num_scalar_prefetch=0,
                grid=grid,
                in_specs=[pl.BlockSpec((1, Cin, tile_hw), lambda b, t: (b, 0, t)),
                          pl.BlockSpec((1, Cin, K), lambda b, t: (b, 0, 0))] + w_specs,
                out_specs=pl.BlockSpec((1, Cout, tile_hw), lambda b, t: (b, 0, t)),
            ),
            compiler_params=pltpu.CompilerParams(
                dimension_semantics=("parallel", "parallel"),
                vmem_limit_bytes=vmem_limit,
            ),
        )(x_f, p_f, *[kp[n] for n in names])

    try:
        # Grid-invariant weights/biases single-buffered (saves a few MiB VMEM).
        out = jax.block_until_ready(call(True))
    except Exception:
        # pipeline_mode=pl.Buffered(1) unsupported on this jax version:
        # fall back to default double-buffered weight pipelining.
        out = call(False)

    return out[:, :, :HW].reshape(B, Cout, H, W)


# ---------------------------------------------------------------------------
# Synthetic parameters (conv weights + folded-BN scale/bias) and reference
# ---------------------------------------------------------------------------
def make_params(key, in_channels, key_channels, out_channels):
    ks = jax.random.split(key, 16)
    eps = 1e-5

    def conv_w(k, cin, cout):
        return jax.random.normal(k, (cin, cout), jnp.float32) * 0.05

    def bn_fold(k, c):
        k1, k2 = jax.random.split(k)
        gamma = 1.0 + 0.1 * jax.random.normal(k1, (1, c), jnp.float32)
        beta = 0.1 * jax.random.normal(k2, (1, c), jnp.float32)
        mean = jnp.zeros((1, c), jnp.float32)
        var = jnp.ones((1, c), jnp.float32)
        scale = gamma / jnp.sqrt(var + eps)
        bias = beta - mean * scale
        return scale, bias

    p = {}
    p["wq1"] = conv_w(ks[0], in_channels, key_channels)
    p["sq1"], p["bq1"] = bn_fold(ks[1], key_channels)
    p["wq2"] = conv_w(ks[2], key_channels, key_channels)
    p["sq2"], p["bq2"] = bn_fold(ks[3], key_channels)
    p["wk1"] = conv_w(ks[4], in_channels, key_channels)
    p["sk1"], p["bk1"] = bn_fold(ks[5], key_channels)
    p["wk2"] = conv_w(ks[6], key_channels, key_channels)
    p["sk2"], p["bk2"] = bn_fold(ks[7], key_channels)
    p["wv"] = conv_w(ks[8], in_channels, key_channels)
    p["sv"], p["bv"] = bn_fold(ks[9], key_channels)
    p["wo"] = conv_w(ks[10], key_channels, in_channels)
    p["so"], p["bo"] = bn_fold(ks[11], in_channels)
    p["wfa"] = conv_w(ks[12], in_channels, out_channels)   # applied to context
    p["wfb"] = conv_w(ks[13], in_channels, out_channels)   # applied to x
    p["sf"], p["bf"] = bn_fold(ks[14], out_channels)
    return p


def reference_forward(x_nchw, proxy_nchw, params):
    """Pure-JAX f32 reference mirroring the PyTorch module math."""
    B, Cin, H, W = x_nchw.shape
    K = proxy_nchw.shape[2]
    x = jnp.transpose(x_nchw.reshape(B, Cin, H * W), (0, 2, 1))
    p = jnp.transpose(proxy_nchw.reshape(B, Cin, K), (0, 2, 1))

    def cba(inp, w, s, b):
        return jnp.maximum(inp @ w * s + b, 0.0)

    q = cba(cba(x, params["wq1"], params["sq1"], params["bq1"]),
            params["wq2"], params["sq2"], params["bq2"])
    k = cba(cba(p, params["wk1"], params["sk1"], params["bk1"]),
            params["wk2"], params["sk2"], params["bk2"])
    v = cba(p, params["wv"], params["sv"], params["bv"])
    ck = q.shape[-1]
    sim = jnp.einsum("bqc,bkc->bqk", q, k) * (ck ** -0.5)
    attn = jax.nn.softmax(sim, axis=-1)
    ctx = jnp.einsum("bqk,bkc->bqc", attn, v)
    context = cba(ctx, params["wo"], params["so"], params["bo"])
    y = context @ params["wfa"] + x @ params["wfb"]
    y = jnp.maximum(y * params["sf"] + params["bf"], 0.0)
    Cout = y.shape[-1]
    return jnp.transpose(y, (0, 2, 1)).reshape(B, Cout, H, W)


if __name__ == "__main__":
    B = 2
    in_channels = 32
    key_channels = 16
    out_channels = 32
    H = W = 16
    K = 8            # number of object/proxy regions (proxy_feats: (B, Cin, K, 1))

    root = jax.random.PRNGKey(0)
    kx, kpx, kw = jax.random.split(root, 3)
    x = jax.random.normal(kx, (B, in_channels, H, W), jnp.float32)
    proxy_feats = jax.random.normal(kpx, (B, in_channels, K, 1), jnp.float32)
    params = make_params(kw, in_channels, key_channels, out_channels)

    out = spatial_ocr_forward(x, proxy_feats, params)
    out = jax.block_until_ready(out)

    ref = reference_forward(x, proxy_feats, params)
    assert out.shape == (B, out_channels, H, W)
    # bf16 MXU operands + approx reciprocal vs f32 reference => loose tolerance.
    max_err = float(jnp.max(jnp.abs(out - ref)))
    assert jnp.allclose(out, ref, atol=3e-2, rtol=3e-2), \
        f"mismatch vs reference (max abs err {max_err})"
    print("KERNEL_OK")
</pallas_src>

<mosaic_0001>
module attributes {stable_mosaic.version = 11 : i64} {
  func.func @_spatial_ocr_kernel(%arg0: i32, %arg1: i32, %arg2: memref<1x32x256xbf16, #tpu.memory_space<vmem>>, %arg3: memref<1x32x8xbf16, #tpu.memory_space<vmem>>, %arg4: memref<16x32xbf16, #tpu.memory_space<vmem>>, %arg5: memref<16x1xf32, #tpu.memory_space<vmem>>, %arg6: memref<16x16xbf16, #tpu.memory_space<vmem>>, %arg7: memref<16x1xf32, #tpu.memory_space<vmem>>, %arg8: memref<16x32xbf16, #tpu.memory_space<vmem>>, %arg9: memref<16x1xf32, #tpu.memory_space<vmem>>, %arg10: memref<16x16xbf16, #tpu.memory_space<vmem>>, %arg11: memref<16x1xf32, #tpu.memory_space<vmem>>, %arg12: memref<16x32xbf16, #tpu.memory_space<vmem>>, %arg13: memref<16x1xf32, #tpu.memory_space<vmem>>, %arg14: memref<32x16xbf16, #tpu.memory_space<vmem>>, %arg15: memref<32x1xf32, #tpu.memory_space<vmem>>, %arg16: memref<32x32xbf16, #tpu.memory_space<vmem>>, %arg17: memref<32x32xbf16, #tpu.memory_space<vmem>>, %arg18: memref<32x1xf32, #tpu.memory_space<vmem>>, %arg19: memref<1x32x256xf32, #tpu.memory_space<vmem>>) attributes {dimension_semantics = [#tpu.dimension_semantics<parallel>, #tpu.dimension_semantics<parallel>], iteration_bounds = array<i64: 2, 1>, scalar_prefetch = 0 : i64, scratch_operands = 0 : i64, tpu.core_type = #tpu.core_type<tc>, window_params = [{transform_indices = @transform_0, window_bounds = array<i64: 1, 32, 256>}, {transform_indices = @transform_1, window_bounds = array<i64: 1, 32, 8>}, {pipeline_mode = #tpu.pipeline_mode<synchronous>, transform_indices = @transform_2, window_bounds = array<i64: 16, 32>}, {pipeline_mode = #tpu.pipeline_mode<synchronous>, transform_indices = @transform_3, window_bounds = array<i64: 16, 1>}, {pipeline_mode = #tpu.pipeline_mode<synchronous>, transform_indices = @transform_4, window_bounds = array<i64: 16, 16>}, {pipeline_mode = #tpu.pipeline_mode<synchronous>, transform_indices = @transform_5, window_bounds = array<i64: 16, 1>}, {pipeline_mode = #tpu.pipeline_mode<synchronous>, transform_indices = @transform_6, window_bounds = array<i64: 16, 32>}, {pipeline_mode = #tpu.pipeline_mode<synchronous>, transform_indices = @transform_7, window_bounds = array<i64: 16, 1>}, {pipeline_mode = #tpu.pipeline_mode<synchronous>, transform_indices = @transform_8, window_bounds = array<i64: 16, 16>}, {pipeline_mode = #tpu.pipeline_mode<synchronous>, transform_indices = @transform_9, window_bounds = array<i64: 16, 1>}, {pipeline_mode = #tpu.pipeline_mode<synchronous>, transform_indices = @transform_10, window_bounds = array<i64: 16, 32>}, {pipeline_mode = #tpu.pipeline_mode<synchronous>, transform_indices = @transform_11, window_bounds = array<i64: 16, 1>}, {pipeline_mode = #tpu.pipeline_mode<synchronous>, transform_indices = @transform_12, window_bounds = array<i64: 32, 16>}, {pipeline_mode = #tpu.pipeline_mode<synchronous>, transform_indices = @transform_13, window_bounds = array<i64: 32, 1>}, {pipeline_mode = #tpu.pipeline_mode<synchronous>, transform_indices = @transform_14, window_bounds = array<i64: 32, 32>}, {pipeline_mode = #tpu.pipeline_mode<synchronous>, transform_indices = @transform_15, window_bounds = array<i64: 32, 32>}, {pipeline_mode = #tpu.pipeline_mode<synchronous>, transform_indices = @transform_16, window_bounds = array<i64: 32, 1>}, {transform_indices = @transform_17, window_bounds = array<i64: 1, 32, 256>}]} {
    %c0 = arith.constant 0 : index
    %c0_0 = arith.constant 0 : index
    %c0_1 = arith.constant 0 : index
    %0 = vector.load %arg2[%c0, %c0_0, %c0_1] : memref<1x32x256xbf16, #tpu.memory_space<vmem>>, vector<1x32x256xbf16>
    %1 = vector.shape_cast %0 : vector<1x32x256xbf16> to vector<32x256xbf16>
    %c0_2 = arith.constant 0 : index
    %c0_3 = arith.constant 0 : index
    %c0_4 = arith.constant 0 : index
    %2 = vector.load %arg3[%c0_2, %c0_3, %c0_4] : memref<1x32x8xbf16, #tpu.memory_space<vmem>>, vector<1x32x8xbf16>
    %3 = vector.shape_cast %2 : vector<1x32x8xbf16> to vector<32x8xbf16>
    %c0_5 = arith.constant 0 : index
    %c0_6 = arith.constant 0 : index
    %4 = vector.load %arg4[%c0_5, %c0_6] : memref<16x32xbf16, #tpu.memory_space<vmem>>, vector<16x32xbf16>
    %cst = arith.constant dense<0.000000e+00> : vector<16x256xf32>
    %5 = tpu.matmul %4, %1, %cst {dimension_numbers = #tpu.dot_dimension_numbers<[1], [0], [0], [1], [0, 0, 1, 1], [], []>} : vector<16x32xbf16>, vector<32x256xbf16>, vector<16x256xf32> -> vector<16x256xf32>
    %c0_7 = arith.constant 0 : index
    %c0_8 = arith.constant 0 : index
    %6 = vector.load %arg5[%c0_7, %c0_8] : memref<16x1xf32, #tpu.memory_space<vmem>>, vector<16x1xf32>
    %7 = vector.broadcast %6 : vector<16x1xf32> to vector<16x256xf32>
    %8 = arith.addf %5, %7 : vector<16x256xf32>
    %cst_9 = arith.constant 0.000000e+00 : f32
    %9 = vector.broadcast %cst_9 : f32 to vector<16x256xf32>
    %10 = arith.maximumf %8, %9 : vector<16x256xf32>
    %11 = arith.truncf %10 : vector<16x256xf32> to vector<16x256xbf16>
    %c0_10 = arith.constant 0 : index
    %c0_11 = arith.constant 0 : index
    %12 = vector.load %arg6[%c0_10, %c0_11] : memref<16x16xbf16, #tpu.memory_space<vmem>>, vector<16x16xbf16>
    %cst_12 = arith.constant dense<0.000000e+00> : vector<16x256xf32>
    %13 = tpu.matmul %12, %11, %cst_12 {dimension_numbers = #tpu.dot_dimension_numbers<[1], [0], [0], [1], [0, 0, 1, 1], [], []>} : vector<16x16xbf16>, vector<16x256xbf16>, vector<16x256xf32> -> vector<16x256xf32>
    %c0_13 = arith.constant 0 : index
    %c0_14 = arith.constant 0 : index
    %14 = vector.load %arg7[%c0_13, %c0_14] : memref<16x1xf32, #tpu.memory_space<vmem>>, vector<16x1xf32>
    %15 = vector.broadcast %14 : vector<16x1xf32> to vector<16x256xf32>
    %16 = arith.addf %13, %15 : vector<16x256xf32>
    %cst_15 = arith.constant 0.000000e+00 : f32
    %17 = vector.broadcast %cst_15 : f32 to vector<16x256xf32>
    %18 = arith.maximumf %16, %17 : vector<16x256xf32>
    %19 = arith.truncf %18 : vector<16x256xf32> to vector<16x256xbf16>
    %c0_16 = arith.constant 0 : index
    %c0_17 = arith.constant 0 : index
    %20 = vector.load %arg8[%c0_16, %c0_17] : memref<16x32xbf16, #tpu.memory_space<vmem>>, vector<16x32xbf16>
    %cst_18 = arith.constant dense<0.000000e+00> : vector<16x8xf32>
    %21 = tpu.matmul %20, %3, %cst_18 {dimension_numbers = #tpu.dot_dimension_numbers<[1], [0], [0], [1], [0, 0, 1, 1], [], []>} : vector<16x32xbf16>, vector<32x8xbf16>, vector<16x8xf32> -> vector<16x8xf32>
    %c0_19 = arith.constant 0 : index
    %c0_20 = arith.constant 0 : index
    %22 = vector.load %arg9[%c0_19, %c0_20] : memref<16x1xf32, #tpu.memory_space<vmem>>, vector<16x1xf32>
    %23 = vector.broadcast %22 : vector<16x1xf32> to vector<16x8xf32>
    %24 = arith.addf %21, %23 : vector<16x8xf32>
    %cst_21 = arith.constant 0.000000e+00 : f32
    %25 = vector.broadcast %cst_21 : f32 to vector<16x8xf32>
    %26 = arith.maximumf %24, %25 : vector<16x8xf32>
    %27 = arith.truncf %26 : vector<16x8xf32> to vector<16x8xbf16>
    %c0_22 = arith.constant 0 : index
    %c0_23 = arith.constant 0 : index
    %28 = vector.load %arg10[%c0_22, %c0_23] : memref<16x16xbf16, #tpu.memory_space<vmem>>, vector<16x16xbf16>
    %cst_24 = arith.constant dense<0.000000e+00> : vector<16x8xf32>
    %29 = tpu.matmul %28, %27, %cst_24 {dimension_numbers = #tpu.dot_dimension_numbers<[1], [0], [0], [1], [0, 0, 1, 1], [], []>} : vector<16x16xbf16>, vector<16x8xbf16>, vector<16x8xf32> -> vector<16x8xf32>
    %c0_25 = arith.constant 0 : index
    %c0_26 = arith.constant 0 : index
    %30 = vector.load %arg11[%c0_25, %c0_26] : memref<16x1xf32, #tpu.memory_space<vmem>>, vector<16x1xf32>
    %31 = vector.broadcast %30 : vector<16x1xf32> to vector<16x8xf32>
    %32 = arith.addf %29, %31 : vector<16x8xf32>
    %cst_27 = arith.constant 0.000000e+00 : f32
    %33 = vector.broadcast %cst_27 : f32 to vector<16x8xf32>
    %34 = arith.maximumf %32, %33 : vector<16x8xf32>
    %35 = arith.truncf %34 : vector<16x8xf32> to vector<16x8xbf16>
    %c0_28 = arith.constant 0 : index
    %c0_29 = arith.constant 0 : index
    %36 = vector.load %arg12[%c0_28, %c0_29] : memref<16x32xbf16, #tpu.memory_space<vmem>>, vector<16x32xbf16>
    %cst_30 = arith.constant dense<0.000000e+00> : vector<16x8xf32>
    %37 = tpu.matmul %36, %3, %cst_30 {dimension_numbers = #tpu.dot_dimension_numbers<[1], [0], [0], [1], [0, 0, 1, 1], [], []>} : vector<16x32xbf16>, vector<32x8xbf16>, vector<16x8xf32> -> vector<16x8xf32>
    %c0_31 = arith.constant 0 : index
    %c0_32 = arith.constant 0 : index
    %38 = vector.load %arg13[%c0_31, %c0_32] : memref<16x1xf32, #tpu.memory_space<vmem>>, vector<16x1xf32>
    %39 = vector.broadcast %38 : vector<16x1xf32> to vector<16x8xf32>
    %40 = arith.addf %37, %39 : vector<16x8xf32>
    %cst_33 = arith.constant 0.000000e+00 : f32
    %41 = vector.broadcast %cst_33 : f32 to vector<16x8xf32>
    %42 = arith.maximumf %40, %41 : vector<16x8xf32>
    %43 = arith.truncf %42 : vector<16x8xf32> to vector<16x8xbf16>
    %cst_34 = arith.constant dense<0.000000e+00> : vector<8x256xf32>
    %44 = tpu.matmul %35, %19, %cst_34 {dimension_numbers = #tpu.dot_dimension_numbers<[0], [0], [1], [1], [0, 1, 1, 1], [], []>} : vector<16x8xbf16>, vector<16x256xbf16>, vector<8x256xf32> -> vector<8x256xf32>
    %cst_35 = arith.constant 2.500000e-01 : f32
    %45 = vector.broadcast %cst_35 : f32 to vector<8x256xf32>
    %46 = arith.mulf %44, %45 : vector<8x256xf32>
    %cst_36 = arith.constant dense<0xFF800000> : vector<256xf32>
    %47 = vector.multi_reduction <maximumf>, %46, %cst_36 [0] : vector<8x256xf32> to vector<256xf32>
    %48 = vector.shape_cast %47 : vector<256xf32> to vector<1x256xf32>
    %49 = vector.broadcast %48 : vector<1x256xf32> to vector<8x256xf32>
    %50 = arith.subf %46, %49 : vector<8x256xf32>
    %51 = math.exp %50 : vector<8x256xf32>
    %cst_37 = arith.constant dense<0.000000e+00> : vector<256xf32>
    %52 = vector.multi_reduction <add>, %51, %cst_37 [0] : vector<8x256xf32> to vector<256xf32>
    %53 = vector.shape_cast %52 : vector<256xf32> to vector<1x256xf32>
    %54 = tpu.reciprocal %53 {approx = true} : vector<1x256xf32> -> vector<1x256xf32>
    %55 = vector.broadcast %54 : vector<1x256xf32> to vector<8x256xf32>
    %56 = arith.mulf %51, %55 : vector<8x256xf32>
    %57 = arith.truncf %56 : vector<8x256xf32> to vector<8x256xbf16>
    %cst_38 = arith.constant dense<0.000000e+00> : vector<16x256xf32>
    %58 = tpu.matmul %43, %57, %cst_38 {dimension_numbers = #tpu.dot_dimension_numbers<[1], [0], [0], [1], [0, 0, 1, 1], [], []>} : vector<16x8xbf16>, vector<8x256xbf16>, vector<16x256xf32> -> vector<16x256xf32>
    %59 = arith.truncf %58 : vector<16x256xf32> to vector<16x256xbf16>
    %c0_39 = arith.constant 0 : index
    %c0_40 = arith.constant 0 : index
    %60 = vector.load %arg14[%c0_39, %c0_40] : memref<32x16xbf16, #tpu.memory_space<vmem>>, vector<32x16xbf16>
    %cst_41 = arith.constant dense<0.000000e+00> : vector<32x256xf32>
    %61 = tpu.matmul %60, %59, %cst_41 {dimension_numbers = #tpu.dot_dimension_numbers<[1], [0], [0], [1], [0, 0, 1, 1], [], []>} : vector<32x16xbf16>, vector<16x256xbf16>, vector<32x256xf32> -> vector<32x256xf32>
    %c0_42 = arith.constant 0 : index
    %c0_43 = arith.constant 0 : index
    %62 = vector.load %arg15[%c0_42, %c0_43] : memref<32x1xf32, #tpu.memory_space<vmem>>, vector<32x1xf32>
    %63 = vector.broadcast %62 : vector<32x1xf32> to vector<32x256xf32>
    %64 = arith.addf %61, %63 : vector<32x256xf32>
    %cst_44 = arith.constant 0.000000e+00 : f32
    %65 = vector.broadcast %cst_44 : f32 to vector<32x256xf32>
    %66 = arith.maximumf %64, %65 : vector<32x256xf32>
    %67 = arith.truncf %66 : vector<32x256xf32> to vector<32x256xbf16>
    %c0_45 = arith.constant 0 : index
    %c0_46 = arith.constant 0 : index
    %68 = vector.load %arg16[%c0_45, %c0_46] : memref<32x32xbf16, #tpu.memory_space<vmem>>, vector<32x32xbf16>
    %cst_47 = arith.constant dense<0.000000e+00> : vector<32x256xf32>
    %69 = tpu.matmul %68, %67, %cst_47 {dimension_numbers = #tpu.dot_dimension_numbers<[1], [0], [0], [1], [0, 0, 1, 1], [], []>} : vector<32x32xbf16>, vector<32x256xbf16>, vector<32x256xf32> -> vector<32x256xf32>
    %c0_48 = arith.constant 0 : index
    %c0_49 = arith.constant 0 : index
    %70 = vector.load %arg17[%c0_48, %c0_49] : memref<32x32xbf16, #tpu.memory_space<vmem>>, vector<32x32xbf16>
    %cst_50 = arith.constant dense<0.000000e+00> : vector<32x256xf32>
    %71 = tpu.matmul %70, %1, %cst_50 {dimension_numbers = #tpu.dot_dimension_numbers<[1], [0], [0], [1], [0, 0, 1, 1], [], []>} : vector<32x32xbf16>, vector<32x256xbf16>, vector<32x256xf32> -> vector<32x256xf32>
    %72 = arith.addf %69, %71 : vector<32x256xf32>
    %c0_51 = arith.constant 0 : index
    %c0_52 = arith.constant 0 : index
    %73 = vector.load %arg18[%c0_51, %c0_52] : memref<32x1xf32, #tpu.memory_space<vmem>>, vector<32x1xf32>
    %74 = vector.broadcast %73 : vector<32x1xf32> to vector<32x256xf32>
    %75 = arith.addf %72, %74 : vector<32x256xf32>
    %cst_53 = arith.constant 0.000000e+00 : f32
    %76 = vector.broadcast %cst_53 : f32 to vector<32x256xf32>
    %77 = arith.maximumf %75, %76 : vector<32x256xf32>
    %c0_54 = arith.constant 0 : index
    %c0_55 = arith.constant 0 : index
    %c0_56 = arith.constant 0 : index
    %78 = vector.load %arg19[%c0_54, %c0_55, %c0_56] : memref<1x32x256xf32, #tpu.memory_space<vmem>>, vector<1x32x256xf32>
    %79 = vector.shape_cast %78 : vector<1x32x256xf32> to vector<32x256xf32>
    %80 = vector.shape_cast %77 : vector<32x256xf32> to vector<1x32x256xf32>
    tpu.vector_store %arg19[%c0_54, %c0_55, %c0_56], %80 {strides = array<i32>} : memref<1x32x256xf32, #tpu.memory_space<vmem>>, vector<1x32x256xf32>,
    return
  }
  func.func @transform_0(%arg0: i32, %arg1: i32) -> (i32, i32, i32) {
    %c0_i32 = arith.constant 0 : i32
    %c0_i32_0 = arith.constant 0 : i32
    return %arg0, %c0_i32, %arg1 : i32, i32, i32
  }
  func.func @transform_1(%arg0: i32, %arg1: i32) -> (i32, i32, i32) {
    %c0_i32 = arith.constant 0 : i32
    %c0_i32_0 = arith.constant 0 : i32
    %c0_i32_1 = arith.constant 0 : i32
    return %arg0, %c0_i32, %c0_i32_0 : i32, i32, i32
  }
  func.func @transform_2(%arg0: i32, %arg1: i32) -> (i32, i32) {
    %c0_i32 = arith.constant 0 : i32
    %c0_i32_0 = arith.constant 0 : i32
    %c0_i32_1 = arith.constant 0 : i32
    return %c0_i32, %c0_i32_0 : i32, i32
  }
  func.func @transform_3(%arg0: i32, %arg1: i32) -> (i32, i32) {
    %c0_i32 = arith.constant 0 : i32
    %c0_i32_0 = arith.constant 0 : i32
    %c0_i32_1 = arith.constant 0 : i32
    return %c0_i32, %c0_i32_0 : i32, i32
  }
  func.func @transform_4(%arg0: i32, %arg1: i32) -> (i32, i32) {
    %c0_i32 = arith.constant 0 : i32
    %c0_i32_0 = arith.constant 0 : i32
    %c0_i32_1 = arith.constant 0 : i32
    return %c0_i32, %c0_i32_0 : i32, i32
  }
  func.func @transform_5(%arg0: i32, %arg1: i32) -> (i32, i32) {
    %c0_i32 = arith.constant 0 : i32
    %c0_i32_0 = arith.constant 0 : i32
    %c0_i32_1 = arith.constant 0 : i32
    return %c0_i32, %c0_i32_0 : i32, i32
  }
  func.func @transform_6(%arg0: i32, %arg1: i32) -> (i32, i32) {
    %c0_i32 = arith.constant 0 : i32
    %c0_i32_0 = arith.constant 0 : i32
    %c0_i32_1 = arith.constant 0 : i32
    return %c0_i32, %c0_i32_0 : i32, i32
  }
  func.func @transform_7(%arg0: i32, %arg1: i32) -> (i32, i32) {
    %c0_i32 = arith.constant 0 : i32
    %c0_i32_0 = arith.constant 0 : i32
    %c0_i32_1 = arith.constant 0 : i32
    return %c0_i32, %c0_i32_0 : i32, i32
  }
  func.func @transform_8(%arg0: i32, %arg1: i32) -> (i32, i32) {
    %c0_i32 = arith.constant 0 : i32
    %c0_i32_0 = arith.constant 0 : i32
    %c0_i32_1 = arith.constant 0 : i32
    return %c0_i32, %c0_i32_0 : i32, i32
  }
  func.func @transform_9(%arg0: i32, %arg1: i32) -> (i32, i32) {
    %c0_i32 = arith.constant 0 : i32
    %c0_i32_0 = arith.constant 0 : i32
    %c0_i32_1 = arith.constant 0 : i32
    return %c0_i32, %c0_i32_0 : i32, i32
  }
  func.func @transform_10(%arg0: i32, %arg1: i32) -> (i32, i32) {
    %c0_i32 = arith.constant 0 : i32
    %c0_i32_0 = arith.constant 0 : i32
    %c0_i32_1 = arith.constant 0 : i32
    return %c0_i32, %c0_i32_0 : i32, i32
  }
  func.func @transform_11(%arg0: i32, %arg1: i32) -> (i32, i32) {
    %c0_i32 = arith.constant 0 : i32
    %c0_i32_0 = arith.constant 0 : i32
    %c0_i32_1 = arith.constant 0 : i32
    return %c0_i32, %c0_i32_0 : i32, i32
  }
  func.func @transform_12(%arg0: i32, %arg1: i32) -> (i32, i32) {
    %c0_i32 = arith.constant 0 : i32
    %c0_i32_0 = arith.constant 0 : i32
    %c0_i32_1 = arith.constant 0 : i32
    return %c0_i32, %c0_i32_0 : i32, i32
  }
  func.func @transform_13(%arg0: i32, %arg1: i32) -> (i32, i32) {
    %c0_i32 = arith.constant 0 : i32
    %c0_i32_0 = arith.constant 0 : i32
    %c0_i32_1 = arith.constant 0 : i32
    return %c0_i32, %c0_i32_0 : i32, i32
  }
  func.func @transform_14(%arg0: i32, %arg1: i32) -> (i32, i32) {
    %c0_i32 = arith.constant 0 : i32
    %c0_i32_0 = arith.constant 0 : i32
    %c0_i32_1 = arith.constant 0 : i32
    return %c0_i32, %c0_i32_0 : i32, i32
  }
  func.func @transform_15(%arg0: i32, %arg1: i32) -> (i32, i32) {
    %c0_i32 = arith.constant 0 : i32
    %c0_i32_0 = arith.constant 0 : i32
    %c0_i32_1 = arith.constant 0 : i32
    return %c0_i32, %c0_i32_0 : i32, i32
  }
  func.func @transform_16(%arg0: i32, %arg1: i32) -> (i32, i32) {
    %c0_i32 = arith.constant 0 : i32
    %c0_i32_0 = arith.constant 0 : i32
    %c0_i32_1 = arith.constant 0 : i32
    return %c0_i32, %c0_i32_0 : i32, i32
  }
  func.func @transform_17(%arg0: i32, %arg1: i32) -> (i32, i32, i32) {
    %c0_i32 = arith.constant 0 : i32
    %c0_i32_0 = arith.constant 0 : i32
    return %arg0, %c0_i32, %arg1 : i32, i32, i32
  }
}

module attributes {stable_mosaic.version = 11 : i64} {
  func.func @_spatial_ocr_kernel(%arg0: i32, %arg1: i32, %arg2: memref<1x32x256xbf16, #tpu.memory_space<vmem>>, %arg3: memref<1x32x8xbf16, #tpu.memory_space<vmem>>, %arg4: memref<16x32xbf16, #tpu.memory_space<vmem>>, %arg5: memref<16x1xf32, #tpu.memory_space<vmem>>, %arg6: memref<16x16xbf16, #tpu.memory_space<vmem>>, %arg7: memref<16x1xf32, #tpu.memory_space<vmem>>, %arg8: memref<16x32xbf16, #tpu.memory_space<vmem>>, %arg9: memref<16x1xf32, #tpu.memory_space<vmem>>, %arg10: memref<16x16xbf16, #tpu.memory_space<vmem>>, %arg11: memref<16x1xf32, #tpu.memory_space<vmem>>, %arg12: memref<16x32xbf16, #tpu.memory_space<vmem>>, %arg13: memref<16x1xf32, #tpu.memory_space<vmem>>, %arg14: memref<32x16xbf16, #tpu.memory_space<vmem>>, %arg15: memref<32x1xf32, #tpu.memory_space<vmem>>, %arg16: memref<32x32xbf16, #tpu.memory_space<vmem>>, %arg17: memref<32x32xbf16, #tpu.memory_space<vmem>>, %arg18: memref<32x1xf32, #tpu.memory_space<vmem>>, %arg19: memref<1x32x256xf32, #tpu.memory_space<vmem>>) attributes {dimension_semantics = [#tpu.dimension_semantics<parallel>, #tpu.dimension_semantics<parallel>], iteration_bounds = array<i64: 2, 1>, scalar_prefetch = 0 : i64, scratch_operands = 0 : i64, tpu.core_type = #tpu.core_type<tc>, window_params = [{transform_indices = @transform_0, window_bounds = array<i64: 1, 32, 256>}, {transform_indices = @transform_1, window_bounds = array<i64: 1, 32, 8>}, {pipeline_mode = #tpu.pipeline_mode<synchronous>, transform_indices = @transform_2, window_bounds = array<i64: 16, 32>}, {pipeline_mode = #tpu.pipeline_mode<synchronous>, transform_indices = @transform_3, window_bounds = array<i64: 16, 1>}, {pipeline_mode = #tpu.pipeline_mode<synchronous>, transform_indices = @transform_4, window_bounds = array<i64: 16, 16>}, {pipeline_mode = #tpu.pipeline_mode<synchronous>, transform_indices = @transform_5, window_bounds = array<i64: 16, 1>}, {pipeline_mode = #tpu.pipeline_mode<synchronous>, transform_indices = @transform_6, window_bounds = array<i64: 16, 32>}, {pipeline_mode = #tpu.pipeline_mode<synchronous>, transform_indices = @transform_7, window_bounds = array<i64: 16, 1>}, {pipeline_mode = #tpu.pipeline_mode<synchronous>, transform_indices = @transform_8, window_bounds = array<i64: 16, 16>}, {pipeline_mode = #tpu.pipeline_mode<synchronous>, transform_indices = @transform_9, window_bounds = array<i64: 16, 1>}, {pipeline_mode = #tpu.pipeline_mode<synchronous>, transform_indices = @transform_10, window_bounds = array<i64: 16, 32>}, {pipeline_mode = #tpu.pipeline_mode<synchronous>, transform_indices = @transform_11, window_bounds = array<i64: 16, 1>}, {pipeline_mode = #tpu.pipeline_mode<synchronous>, transform_indices = @transform_12, window_bounds = array<i64: 32, 16>}, {pipeline_mode = #tpu.pipeline_mode<synchronous>, transform_indices = @transform_13, window_bounds = array<i64: 32, 1>}, {pipeline_mode = #tpu.pipeline_mode<synchronous>, transform_indices = @transform_14, window_bounds = array<i64: 32, 32>}, {pipeline_mode = #tpu.pipeline_mode<synchronous>, transform_indices = @transform_15, window_bounds = array<i64: 32, 32>}, {pipeline_mode = #tpu.pipeline_mode<synchronous>, transform_indices = @transform_16, window_bounds = array<i64: 32, 1>}, {transform_indices = @transform_17, window_bounds = array<i64: 1, 32, 256>}]} {
    %c0 = arith.constant 0 : index
    %c0_0 = arith.constant 0 : index
    %c0_1 = arith.constant 0 : index
    %0 = vector.load %arg2[%c0, %c0_0, %c0_1] : memref<1x32x256xbf16, #tpu.memory_space<vmem>>, vector<1x32x256xbf16>
    %1 = vector.shape_cast %0 : vector<1x32x256xbf16> to vector<32x256xbf16>
    %c0_2 = arith.constant 0 : index
    %c0_3 = arith.constant 0 : index
    %c0_4 = arith.constant 0 : index
    %2 = vector.load %arg3[%c0_2, %c0_3, %c0_4] : memref<1x32x8xbf16, #tpu.memory_space<vmem>>, vector<1x32x8xbf16>
    %3 = vector.shape_cast %2 : vector<1x32x8xbf16> to vector<32x8xbf16>
    %c0_5 = arith.constant 0 : index
    %c0_6 = arith.constant 0 : index
    %4 = vector.load %arg4[%c0_5, %c0_6] : memref<16x32xbf16, #tpu.memory_space<vmem>>, vector<16x32xbf16>
    %cst = arith.constant dense<0.000000e+00> : vector<16x256xf32>
    %5 = tpu.matmul %4, %1, %cst {dimension_numbers = #tpu.dot_dimension_numbers<[1], [0], [0], [1], [0, 0, 1, 1], [], []>} : vector<16x32xbf16>, vector<32x256xbf16>, vector<16x256xf32> -> vector<16x256xf32>
    %c0_7 = arith.constant 0 : index
    %c0_8 = arith.constant 0 : index
    %6 = vector.load %arg5[%c0_7, %c0_8] : memref<16x1xf32, #tpu.memory_space<vmem>>, vector<16x1xf32>
    %7 = vector.broadcast %6 : vector<16x1xf32> to vector<16x256xf32>
    %8 = arith.addf %5, %7 : vector<16x256xf32>
    %cst_9 = arith.constant 0.000000e+00 : f32
    %9 = vector.broadcast %cst_9 : f32 to vector<16x256xf32>
    %10 = arith.maximumf %8, %9 : vector<16x256xf32>
    %11 = arith.truncf %10 : vector<16x256xf32> to vector<16x256xbf16>
    %c0_10 = arith.constant 0 : index
    %c0_11 = arith.constant 0 : index
    %12 = vector.load %arg6[%c0_10, %c0_11] : memref<16x16xbf16, #tpu.memory_space<vmem>>, vector<16x16xbf16>
    %cst_12 = arith.constant dense<0.000000e+00> : vector<16x256xf32>
    %13 = tpu.matmul %12, %11, %cst_12 {dimension_numbers = #tpu.dot_dimension_numbers<[1], [0], [0], [1], [0, 0, 1, 1], [], []>} : vector<16x16xbf16>, vector<16x256xbf16>, vector<16x256xf32> -> vector<16x256xf32>
    %c0_13 = arith.constant 0 : index
    %c0_14 = arith.constant 0 : index
    %14 = vector.load %arg7[%c0_13, %c0_14] : memref<16x1xf32, #tpu.memory_space<vmem>>, vector<16x1xf32>
    %15 = vector.broadcast %14 : vector<16x1xf32> to vector<16x256xf32>
    %16 = arith.addf %13, %15 : vector<16x256xf32>
    %cst_15 = arith.constant 0.000000e+00 : f32
    %17 = vector.broadcast %cst_15 : f32 to vector<16x256xf32>
    %18 = arith.maximumf %16, %17 : vector<16x256xf32>
    %19 = arith.truncf %18 : vector<16x256xf32> to vector<16x256xbf16>
    %c0_16 = arith.constant 0 : index
    %c0_17 = arith.constant 0 : index
    %20 = vector.load %arg8[%c0_16, %c0_17] : memref<16x32xbf16, #tpu.memory_space<vmem>>, vector<16x32xbf16>
    %cst_18 = arith.constant dense<0.000000e+00> : vector<16x8xf32>
    %21 = tpu.matmul %20, %3, %cst_18 {dimension_numbers = #tpu.dot_dimension_numbers<[1], [0], [0], [1], [0, 0, 1, 1], [], []>} : vector<16x32xbf16>, vector<32x8xbf16>, vector<16x8xf32> -> vector<16x8xf32>
    %c0_19 = arith.constant 0 : index
    %c0_20 = arith.constant 0 : index
    %22 = vector.load %arg9[%c0_19, %c0_20] : memref<16x1xf32, #tpu.memory_space<vmem>>, vector<16x1xf32>
    %23 = vector.broadcast %22 : vector<16x1xf32> to vector<16x8xf32>
    %24 = arith.addf %21, %23 : vector<16x8xf32>
    %cst_21 = arith.constant 0.000000e+00 : f32
    %25 = vector.broadcast %cst_21 : f32 to vector<16x8xf32>
    %26 = arith.maximumf %24, %25 : vector<16x8xf32>
    %27 = arith.truncf %26 : vector<16x8xf32> to vector<16x8xbf16>
    %c0_22 = arith.constant 0 : index
    %c0_23 = arith.constant 0 : index
    %28 = vector.load %arg10[%c0_22, %c0_23] : memref<16x16xbf16, #tpu.memory_space<vmem>>, vector<16x16xbf16>
    %cst_24 = arith.constant dense<0.000000e+00> : vector<16x8xf32>
    %29 = tpu.matmul %28, %27, %cst_24 {dimension_numbers = #tpu.dot_dimension_numbers<[1], [0], [0], [1], [0, 0, 1, 1], [], []>} : vector<16x16xbf16>, vector<16x8xbf16>, vector<16x8xf32> -> vector<16x8xf32>
    %c0_25 = arith.constant 0 : index
    %c0_26 = arith.constant 0 : index
    %30 = vector.load %arg11[%c0_25, %c0_26] : memref<16x1xf32, #tpu.memory_space<vmem>>, vector<16x1xf32>
    %31 = vector.broadcast %30 : vector<16x1xf32> to vector<16x8xf32>
    %32 = arith.addf %29, %31 : vector<16x8xf32>
    %cst_27 = arith.constant 0.000000e+00 : f32
    %33 = vector.broadcast %cst_27 : f32 to vector<16x8xf32>
    %34 = arith.maximumf %32, %33 : vector<16x8xf32>
    %35 = arith.truncf %34 : vector<16x8xf32> to vector<16x8xbf16>
    %c0_28 = arith.constant 0 : index
    %c0_29 = arith.constant 0 : index
    %36 = vector.load %arg12[%c0_28, %c0_29] : memref<16x32xbf16, #tpu.memory_space<vmem>>, vector<16x32xbf16>
    %cst_30 = arith.constant dense<0.000000e+00> : vector<16x8xf32>
    %37 = tpu.matmul %36, %3, %cst_30 {dimension_numbers = #tpu.dot_dimension_numbers<[1], [0], [0], [1], [0, 0, 1, 1], [], []>} : vector<16x32xbf16>, vector<32x8xbf16>, vector<16x8xf32> -> vector<16x8xf32>
    %c0_31 = arith.constant 0 : index
    %c0_32 = arith.constant 0 : index
    %38 = vector.load %arg13[%c0_31, %c0_32] : memref<16x1xf32, #tpu.memory_space<vmem>>, vector<16x1xf32>
    %39 = vector.broadcast %38 : vector<16x1xf32> to vector<16x8xf32>
    %40 = arith.addf %37, %39 : vector<16x8xf32>
    %cst_33 = arith.constant 0.000000e+00 : f32
    %41 = vector.broadcast %cst_33 : f32 to vector<16x8xf32>
    %42 = arith.maximumf %40, %41 : vector<16x8xf32>
    %43 = arith.truncf %42 : vector<16x8xf32> to vector<16x8xbf16>
    %cst_34 = arith.constant dense<0.000000e+00> : vector<8x256xf32>
    %44 = tpu.matmul %35, %19, %cst_34 {dimension_numbers = #tpu.dot_dimension_numbers<[0], [0], [1], [1], [0, 1, 1, 1], [], []>} : vector<16x8xbf16>, vector<16x256xbf16>, vector<8x256xf32> -> vector<8x256xf32>
    %cst_35 = arith.constant 2.500000e-01 : f32
    %45 = vector.broadcast %cst_35 : f32 to vector<8x256xf32>
    %46 = arith.mulf %44, %45 : vector<8x256xf32>
    %cst_36 = arith.constant dense<0xFF800000> : vector<256xf32>
    %47 = vector.multi_reduction <maximumf>, %46, %cst_36 [0] : vector<8x256xf32> to vector<256xf32>
    %48 = vector.shape_cast %47 : vector<256xf32> to vector<1x256xf32>
    %49 = vector.broadcast %48 : vector<1x256xf32> to vector<8x256xf32>
    %50 = arith.subf %46, %49 : vector<8x256xf32>
    %51 = math.exp %50 : vector<8x256xf32>
    %cst_37 = arith.constant dense<0.000000e+00> : vector<256xf32>
    %52 = vector.multi_reduction <add>, %51, %cst_37 [0] : vector<8x256xf32> to vector<256xf32>
    %53 = vector.shape_cast %52 : vector<256xf32> to vector<1x256xf32>
    %54 = tpu.reciprocal %53 {approx = true} : vector<1x256xf32> -> vector<1x256xf32>
    %55 = vector.broadcast %54 : vector<1x256xf32> to vector<8x256xf32>
    %56 = arith.mulf %51, %55 : vector<8x256xf32>
    %57 = arith.truncf %56 : vector<8x256xf32> to vector<8x256xbf16>
    %cst_38 = arith.constant dense<0.000000e+00> : vector<16x256xf32>
    %58 = tpu.matmul %43, %57, %cst_38 {dimension_numbers = #tpu.dot_dimension_numbers<[1], [0], [0], [1], [0, 0, 1, 1], [], []>} : vector<16x8xbf16>, vector<8x256xbf16>, vector<16x256xf32> -> vector<16x256xf32>
    %59 = arith.truncf %58 : vector<16x256xf32> to vector<16x256xbf16>
    %c0_39 = arith.constant 0 : index
    %c0_40 = arith.constant 0 : index
    %60 = vector.load %arg14[%c0_39, %c0_40] : memref<32x16xbf16, #tpu.memory_space<vmem>>, vector<32x16xbf16>
    %cst_41 = arith.constant dense<0.000000e+00> : vector<32x256xf32>
    %61 = tpu.matmul %60, %59, %cst_41 {dimension_numbers = #tpu.dot_dimension_numbers<[1], [0], [0], [1], [0, 0, 1, 1], [], []>} : vector<32x16xbf16>, vector<16x256xbf16>, vector<32x256xf32> -> vector<32x256xf32>
    %c0_42 = arith.constant 0 : index
    %c0_43 = arith.constant 0 : index
    %62 = vector.load %arg15[%c0_42, %c0_43] : memref<32x1xf32, #tpu.memory_space<vmem>>, vector<32x1xf32>
    %63 = vector.broadcast %62 : vector<32x1xf32> to vector<32x256xf32>
    %64 = arith.addf %61, %63 : vector<32x256xf32>
    %cst_44 = arith.constant 0.000000e+00 : f32
    %65 = vector.broadcast %cst_44 : f32 to vector<32x256xf32>
    %66 = arith.maximumf %64, %65 : vector<32x256xf32>
    %67 = arith.truncf %66 : vector<32x256xf32> to vector<32x256xbf16>
    %c0_45 = arith.constant 0 : index
    %c0_46 = arith.constant 0 : index
    %68 = vector.load %arg16[%c0_45, %c0_46] : memref<32x32xbf16, #tpu.memory_space<vmem>>, vector<32x32xbf16>
    %cst_47 = arith.constant dense<0.000000e+00> : vector<32x256xf32>
    %69 = tpu.matmul %68, %67, %cst_47 {dimension_numbers = #tpu.dot_dimension_numbers<[1], [0], [0], [1], [0, 0, 1, 1], [], []>} : vector<32x32xbf16>, vector<32x256xbf16>, vector<32x256xf32> -> vector<32x256xf32>
    %c0_48 = arith.constant 0 : index
    %c0_49 = arith.constant 0 : index
    %70 = vector.load %arg17[%c0_48, %c0_49] : memref<32x32xbf16, #tpu.memory_space<vmem>>, vector<32x32xbf16>
    %cst_50 = arith.constant dense<0.000000e+00> : vector<32x256xf32>
    %71 = tpu.matmul %70, %1, %cst_50 {dimension_numbers = #tpu.dot_dimension_numbers<[1], [0], [0], [1], [0, 0, 1, 1], [], []>} : vector<32x32xbf16>, vector<32x256xbf16>, vector<32x256xf32> -> vector<32x256xf32>
    %72 = arith.addf %69, %71 : vector<32x256xf32>
    %c0_51 = arith.constant 0 : index
    %c0_52 = arith.constant 0 : index
    %73 = vector.load %arg18[%c0_51, %c0_52] : memref<32x1xf32, #tpu.memory_space<vmem>>, vector<32x1xf32>
    %74 = vector.broadcast %73 : vector<32x1xf32> to vector<32x256xf32>
    %75 = arith.addf %72, %74 : vector<32x256xf32>
    %cst_53 = arith.constant 0.000000e+00 : f32
    %76 = vector.broadcast %cst_53 : f32 to vector<32x256xf32>
    %77 = arith.maximumf %75, %76 : vector<32x256xf32>
    %c0_54 = arith.constant 0 : index
    %c0_55 = arith.constant 0 : index
    %c0_56 = arith.constant 0 : index
    %78 = vector.load %arg19[%c0_54, %c0_55, %c0_56] : memref<1x32x256xf32, #tpu.memory_space<vmem>>, vector<1x32x256xf32>
    %79 = vector.shape_cast %78 : vector<1x32x256xf32> to vector<32x256xf32>
    %80 = vector.shape_cast %77 : vector<32x256xf32> to vector<1x32x256xf32>
    tpu.vector_store %arg19[%c0_54, %c0_55, %c0_56], %80 {strides = array<i32>} : memref<1x32x256xf32, #tpu.memory_space<vmem>>, vector<1x32x256xf32>,
    return
  }
  func.func @transform_0(%arg0: i32, %arg1: i32) -> (i32, i32, i32) {
    %c0_i32 = arith.constant 0 : i32
    %c0_i32_0 = arith.constant 0 : i32
    return %arg0, %c0_i32, %arg1 : i32, i32, i32
  }
  func.func @transform_1(%arg0: i32, %arg1: i32) -> (i32, i32, i32) {
    %c0_i32 = arith.constant 0 : i32
    %c0_i32_0 = arith.constant 0 : i32
    %c0_i32_1 = arith.constant 0 : i32
    return %arg0, %c0_i32, %c0_i32_0 : i32, i32, i32
  }
  func.func @transform_2(%arg0: i32, %arg1: i32) -> (i32, i32) {
    %c0_i32 = arith.constant 0 : i32
    %c0_i32_0 = arith.constant 0 : i32
    %c0_i32_1 = arith.constant 0 : i32
    return %c0_i32, %c0_i32_0 : i32, i32
  }
  func.func @transform_3(%arg0: i32, %arg1: i32) -> (i32, i32) {
    %c0_i32 = arith.constant 0 : i32
    %c0_i32_0 = arith.constant 0 : i32
    %c0_i32_1 = arith.constant 0 : i32
    return %c0_i32, %c0_i32_0 : i32, i32
  }
  func.func @transform_4(%arg0: i32, %arg1: i32) -> (i32, i32) {
    %c0_i32 = arith.constant 0 : i32
    %c0_i32_0 = arith.constant 0 : i32
    %c0_i32_1 = arith.constant 0 : i32
    return %c0_i32, %c0_i32_0 : i32, i32
  }
  func.func @transform_5(%arg0: i32, %arg1: i32) -> (i32, i32) {
    %c0_i32 = arith.constant 0 : i32
    %c0_i32_0 = arith.constant 0 : i32
    %c0_i32_1 = arith.constant 0 : i32
    return %c0_i32, %c0_i32_0 : i32, i32
  }
  func.func @transform_6(%arg0: i32, %arg1: i32) -> (i32, i32) {
    %c0_i32 = arith.constant 0 : i32
    %c0_i32_0 = arith.constant 0 : i32
    %c0_i32_1 = arith.constant 0 : i32
    return %c0_i32, %c0_i32_0 : i32, i32
  }
  func.func @transform_7(%arg0: i32, %arg1: i32) -> (i32, i32) {
    %c0_i32 = arith.constant 0 : i32
    %c0_i32_0 = arith.constant 0 : i32
    %c0_i32_1 = arith.constant 0 : i32
    return %c0_i32, %c0_i32_0 : i32, i32
  }
  func.func @transform_8(%arg0: i32, %arg1: i32) -> (i32, i32) {
    %c0_i32 = arith.constant 0 : i32
    %c0_i32_0 = arith.constant 0 : i32
    %c0_i32_1 = arith.constant 0 : i32
    return %c0_i32, %c0_i32_0 : i32, i32
  }
  func.func @transform_9(%arg0: i32, %arg1: i32) -> (i32, i32) {
    %c0_i32 = arith.constant 0 : i32
    %c0_i32_0 = arith.constant 0 : i32
    %c0_i32_1 = arith.constant 0 : i32
    return %c0_i32, %c0_i32_0 : i32, i32
  }
  func.func @transform_10(%arg0: i32, %arg1: i32) -> (i32, i32) {
    %c0_i32 = arith.constant 0 : i32
    %c0_i32_0 = arith.constant 0 : i32
    %c0_i32_1 = arith.constant 0 : i32
    return %c0_i32, %c0_i32_0 : i32, i32
  }
  func.func @transform_11(%arg0: i32, %arg1: i32) -> (i32, i32) {
    %c0_i32 = arith.constant 0 : i32
    %c0_i32_0 = arith.constant 0 : i32
    %c0_i32_1 = arith.constant 0 : i32
    return %c0_i32, %c0_i32_0 : i32, i32
  }
  func.func @transform_12(%arg0: i32, %arg1: i32) -> (i32, i32) {
    %c0_i32 = arith.constant 0 : i32
    %c0_i32_0 = arith.constant 0 : i32
    %c0_i32_1 = arith.constant 0 : i32
    return %c0_i32, %c0_i32_0 : i32, i32
  }
  func.func @transform_13(%arg0: i32, %arg1: i32) -> (i32, i32) {
    %c0_i32 = arith.constant 0 : i32
    %c0_i32_0 = arith.constant 0 : i32
    %c0_i32_1 = arith.constant 0 : i32
    return %c0_i32, %c0_i32_0 : i32, i32
  }
  func.func @transform_14(%arg0: i32, %arg1: i32) -> (i32, i32) {
    %c0_i32 = arith.constant 0 : i32
    %c0_i32_0 = arith.constant 0 : i32
    %c0_i32_1 = arith.constant 0 : i32
    return %c0_i32, %c0_i32_0 : i32, i32
  }
  func.func @transform_15(%arg0: i32, %arg1: i32) -> (i32, i32) {
    %c0_i32 = arith.constant 0 : i32
    %c0_i32_0 = arith.constant 0 : i32
    %c0_i32_1 = arith.constant 0 : i32
    return %c0_i32, %c0_i32_0 : i32, i32
  }
  func.func @transform_16(%arg0: i32, %arg1: i32) -> (i32, i32) {
    %c0_i32 = arith.constant 0 : i32
    %c0_i32_0 = arith.constant 0 : i32
    %c0_i32_1 = arith.constant 0 : i32
    return %c0_i32, %c0_i32_0 : i32, i32
  }
  func.func @transform_17(%arg0: i32, %arg1: i32) -> (i32, i32, i32) {
    %c0_i32 = arith.constant 0 : i32
    %c0_i32_0 = arith.constant 0 : i32
    return %arg0, %c0_i32, %arg1 : i32, i32, i32
  }
}

</mosaic_0001>

<llo_original>
// kernel: tpu_custom_call.1
$region0: #{tpu_custom_call.1}
  #allocation0 [shape = 'u32[]', space=smem, size = 0x4, offset = 0x4, fixed_abs, tag = 'smem constant byte address 0x4 - core index']
  #allocation1 [shape = 'u32[144,128]{1,0:T(1,128)}', space=vmem, size = 0x12000, scoped, tag = 'internal scratch']
  %s0 = inlined_call_operand.vmem [shape: bf16[2,32,256], index: 0, kind: input, shape index: {}]
  %s1 = inlined_call_operand.vmem [shape: bf16[2,32,8], index: 1, kind: input, shape index: {}]
  %s2 = inlined_call_operand.vmem [shape: bf16[16,32], index: 2, kind: input, shape index: {}]
  %s3 = inlined_call_operand.vmem [shape: f32[16,1], index: 3, kind: input, shape index: {}]
  %s4 = inlined_call_operand.vmem [shape: bf16[16,16], index: 4, kind: input, shape index: {}]
  %s5 = inlined_call_operand.vmem [shape: f32[16,1], index: 5, kind: input, shape index: {}]
  %s6 = inlined_call_operand.vmem [shape: bf16[16,32], index: 6, kind: input, shape index: {}]
  %s7 = inlined_call_operand.vmem [shape: f32[16,1], index: 7, kind: input, shape index: {}]
  %s8 = inlined_call_operand.vmem [shape: bf16[16,16], index: 8, kind: input, shape index: {}]
  %s9 = inlined_call_operand.vmem [shape: f32[16,1], index: 9, kind: input, shape index: {}]
  %s10 = inlined_call_operand.vmem [shape: bf16[16,32], index: 10, kind: input, shape index: {}]
  %s11 = inlined_call_operand.vmem [shape: f32[16,1], index: 11, kind: input, shape index: {}]
  %s12 = inlined_call_operand.vmem [shape: bf16[32,16], index: 12, kind: input, shape index: {}]
  %s13 = inlined_call_operand.vmem [shape: f32[32,1], index: 13, kind: input, shape index: {}]
  %s14 = inlined_call_operand.vmem [shape: bf16[32,32], index: 14, kind: input, shape index: {}]
  %s15 = inlined_call_operand.vmem [shape: bf16[32,32], index: 15, kind: input, shape index: {}]
  %s16 = inlined_call_operand.vmem [shape: f32[32,1], index: 16, kind: input, shape index: {}]
  %s17 = inlined_call_operand.hbm [shape: f32[2,32,256], index: 17, kind: output, shape index: {}]
  %s18 = sld [smem:[#allocation0]]
  $region101: #{tpu_custom_call.1} parent=0
    _
  %s20 = ssub.s32 1, %s18
  %s21 = scalar_select 0, %s20, %s18
  $region1: #{tpu_custom_call.1} parent=0
    #allocation2 [shape = 'u8[65536]{0}', space=vmem, size = 0x10000, scoped, tag = 'output window, operand 0']
    #allocation3 [shape = 's32[2]{0}', space=sflag, size = 0x8, scoped, tag = 'scoped memory for tpu_custom_call.1']
    %22 = vsyncpa [#allocation3], 0
    %s23 = scalar_lea.sflag [#allocation3], 1
    %24 = vsyncpa %s23, 0
    loop: start=0, step=1, limit=4
    $region2: #{tpu_custom_call.1} parent=1 // loop_pre_header
      _
    $region3: #{tpu_custom_call.1} parent=1 // loop_header
      %s26 = sphi 0, %s30
      %p27 = scmp.ge.s32.totalorder %s26, 4
      %s33 = sphi 0, %s45
      %s34 = sphi 0, %s41
      %s35 = sphi 0, %s33
      %s36 = sphi 0, %s34
      %s37 = sphi 0, %s35
      %s38 = sphi 0, %s36
      %s50 = sphi 0, %s52
      %s53 = sphi 0, %s50
      %s54 = sphi 0, %s53
      %s70 = sphi 0, %s54
      %s76 = sphi 0, %s78
      %s79 = sphi 0, %s76
      %s80 = sphi 0, %s79
      %s96 = sphi 0, %s80
      %s100 = sphi 0, %s100
      %s102 = sphi 0, %s100
      %s103 = sphi 0, %s102
      %s117 = sphi 0, %s103
      %s121 = sphi 0, %s121
      %s123 = sphi 0, %s121
      %s124 = sphi 0, %s123
      %s138 = sphi 0, %s124
      %s142 = sphi 0, %s142
      %s144 = sphi 0, %s142
      %s145 = sphi 0, %s144
      %s159 = sphi 0, %s145
      %s163 = sphi 0, %s163
      %s165 = sphi 0, %s163
      %s166 = sphi 0, %s165
      %s180 = sphi 0, %s166
      %s184 = sphi 0, %s184
      %s186 = sphi 0, %s184
      %s187 = sphi 0, %s186
      %s201 = sphi 0, %s187
      %s205 = sphi 0, %s205
      %s207 = sphi 0, %s205
      %s208 = sphi 0, %s207
      %s222 = sphi 0, %s208
      %s226 = sphi 0, %s226
      %s228 = sphi 0, %s226
      %s229 = sphi 0, %s228
      %s243 = sphi 0, %s229
      %s247 = sphi 0, %s247
      %s249 = sphi 0, %s247
      %s250 = sphi 0, %s249
      %s264 = sphi 0, %s250
      %s268 = sphi 0, %s268
      %s270 = sphi 0, %s268
      %s271 = sphi 0, %s270
      %s285 = sphi 0, %s271
      %s289 = sphi 0, %s289
      %s291 = sphi 0, %s289
      %s292 = sphi 0, %s291
      %s306 = sphi 0, %s292
      %s310 = sphi 0, %s310
      %s312 = sphi 0, %s310
      %s313 = sphi 0, %s312
      %s327 = sphi 0, %s313
      %s331 = sphi 0, %s331
      %s333 = sphi 0, %s331
      %s334 = sphi 0, %s333
      %s348 = sphi 0, %s334
      %s352 = sphi 0, %s352
      %s354 = sphi 0, %s352
      %s355 = sphi 0, %s354
      %s369 = sphi 0, %s355
      %s373 = sphi 0, %s373
      %s375 = sphi 0, %s373
      %s376 = sphi 0, %s375
      %s390 = sphi 0, %s376
      %s394 = sphi 0, %s394
      %s396 = sphi 0, %s394
      %s397 = sphi 0, %s396
      %s411 = sphi 0, %s397
      %s419 = sphi 0, %s421
      %s422 = sphi 0, %s419
      %s423 = sphi 0, %s422
      %s439 = sphi 0, %s423
    $region4: #{tpu_custom_call.1} parent=1 // loop_header_branch
      %29 = sbr.rel (%p27) target = $region8
    $region5: #{tpu_custom_call.1} parent=1 // loop_body
      %s31 = ssub.s32 %s26, 1
      %s32 = ssub.s32 %s26, 2
      %s39 = sadd.s32 1, %s34
      %p40 = scmp.ge.s32.totalorder %s39, 1
      %s41 = scalar_select %p40, 0, %s39
      %s42 = sadd.s32 1, %s33
      %s43 = scalar_select %p40, %s42, %s33
      %p44 = scmp.ge.s32.totalorder %s43, 2
      %s45 = scalar_select %p44, 0, %s43
      %s46 = ssub.s32 %s33, %s45
      %s47 = ssub.s32 %s34, %s41
      %s48 = sor.u32 %s46, %s47
      %p49 = scmp.eq.s32.totalorder %s48, 0
      %s51 = sadd.s32 %s50, 1
      %s52 = scalar_select %p49, %s50, %s51
      %p55 = pneg %p49
      %p56 = scmp.eq.s32.totalorder %s26, 1
      %p57 = por %p55, %p56
      %p58 = scmp.ne.s32.totalorder %s50, %s53
      %p59 = scmp.eq.s32.totalorder %s26, 0
      %p60 = por %p58, %p59
      %p61 = scmp.ne.s32.totalorder %s50, %s53
      %p62 = scmp.eq.s32.totalorder %s31, 1
      %p63 = por %p61, %p62
      %p64 = scmp.ne.s32.totalorder %s53, %s54
      %p65 = scmp.eq.s32.totalorder %s31, 0
      %p66 = por %p64, %p65
      %p67 = scmp.ne.s32.totalorder %s53, %s54
      %p68 = scmp.eq.s32.totalorder %s32, 1
      %p69 = por %p67, %p68
      %p71 = scmp.ne.s32.totalorder %s54, %s70
      %p72 = scmp.eq.s32.totalorder %s32, 0
      %p73 = por %p71, %p72
      %s74 = ssub.s32 %s33, %s45
      %p75 = scmp.eq.s32.totalorder %s74, 0
      %s77 = sadd.s32 %s76, 1
      %s78 = scalar_select %p75, %s76, %s77
      %p81 = pneg %p75
      %p82 = scmp.eq.s32.totalorder %s26, 1
      %p83 = por %p81, %p82
      %p84 = scmp.ne.s32.totalorder %s76, %s79
      %p85 = scmp.eq.s32.totalorder %s26, 0
      %p86 = por %p84, %p85
      %p87 = scmp.ne.s32.totalorder %s76, %s79
      %p88 = scmp.eq.s32.totalorder %s31, 1
      %p89 = por %p87, %p88
      %p90 = scmp.ne.s32.totalorder %s79, %s80
      %p91 = scmp.eq.s32.totalorder %s31, 0
      %p92 = por %p90, %p91
      %p93 = scmp.ne.s32.totalorder %s79, %s80
      %p94 = scmp.eq.s32.totalorder %s32, 1
      %p95 = por %p93, %p94
      %p97 = scmp.ne.s32.totalorder %s80, %s96
      %p98 = scmp.eq.s32.totalorder %s32, 0
      %p99 = por %p97, %p98
      %s101 = sadd.s32 %s100, 1
      %p104 = scmp.eq.s32.totalorder %s26, 1
      %p105 = scmp.ne.s32.totalorder %s100, %s102
      %p106 = scmp.eq.s32.totalorder %s26, 0
      %p107 = por %p105, %p106
      %p108 = scmp.ne.s32.totalorder %s100, %s102
      %p109 = scmp.eq.s32.totalorder %s31, 1
      %p110 = por %p108, %p109
      %p111 = scmp.ne.s32.totalorder %s102, %s103
      %p112 = scmp.eq.s32.totalorder %s31, 0
      %p113 = por %p111, %p112
      %p114 = scmp.ne.s32.totalorder %s102, %s103
      %p115 = scmp.eq.s32.totalorder %s32, 1
      %p116 = por %p114, %p115
      %p118 = scmp.ne.s32.totalorder %s103, %s117
      %p119 = scmp.eq.s32.totalorder %s32, 0
      %p120 = por %p118, %p119
      %s122 = sadd.s32 %s121, 1
      %p125 = scmp.eq.s32.totalorder %s26, 1
      %p126 = scmp.ne.s32.totalorder %s121, %s123
      %p127 = scmp.eq.s32.totalorder %s26, 0
      %p128 = por %p126, %p127
      %p129 = scmp.ne.s32.totalorder %s121, %s123
      %p130 = scmp.eq.s32.totalorder %s31, 1
      %p131 = por %p129, %p130
      %p132 = scmp.ne.s32.totalorder %s123, %s124
      %p133 = scmp.eq.s32.totalorder %s31, 0
      %p134 = por %p132, %p133
      %p135 = scmp.ne.s32.totalorder %s123, %s124
      %p136 = scmp.eq.s32.totalorder %s32, 1
      %p137 = por %p135, %p136
      %p139 = scmp.ne.s32.totalorder %s124, %s138
      %p140 = scmp.eq.s32.totalorder %s32, 0
      %p141 = por %p139, %p140
      %s143 = sadd.s32 %s142, 1
      %p146 = scmp.eq.s32.totalorder %s26, 1
      %p147 = scmp.ne.s32.totalorder %s142, %s144
      %p148 = scmp.eq.s32.totalorder %s26, 0
      %p149 = por %p147, %p148
      %p150 = scmp.ne.s32.totalorder %s142, %s144
      %p151 = scmp.eq.s32.totalorder %s31, 1
      %p152 = por %p150, %p151
      %p153 = scmp.ne.s32.totalorder %s144, %s145
      %p154 = scmp.eq.s32.totalorder %s31, 0
      %p155 = por %p153, %p154
      %p156 = scmp.ne.s32.totalorder %s144, %s145
      %p157 = scmp.eq.s32.totalorder %s32, 1
      %p158 = por %p156, %p157
      %p160 = scmp.ne.s32.totalorder %s145, %s159
      %p161 = scmp.eq.s32.totalorder %s32, 0
      %p162 = por %p160, %p161
      %s164 = sadd.s32 %s163, 1
      %p167 = scmp.eq.s32.totalorder %s26, 1
      %p168 = scmp.ne.s32.totalorder %s163, %s165
      %p169 = scmp.eq.s32.totalorder %s26, 0
      %p170 = por %p168, %p169
      %p171 = scmp.ne.s32.totalorder %s163, %s165
      %p172 = scmp.eq.s32.totalorder %s31, 1
      %p173 = por %p171, %p172
      %p174 = scmp.ne.s32.totalorder %s165, %s166
      %p175 = scmp.eq.s32.totalorder %s31, 0
      %p176 = por %p174, %p175
      %p177 = scmp.ne.s32.totalorder %s165, %s166
      %p178 = scmp.eq.s32.totalorder %s32, 1
      %p179 = por %p177, %p178
      %p181 = scmp.ne.s32.totalorder %s166, %s180
      %p182 = scmp.eq.s32.totalorder %s32, 0
      %p183 = por %p181, %p182
      %s185 = sadd.s32 %s184, 1
      %p188 = scmp.eq.s32.totalorder %s26, 1
      %p189 = scmp.ne.s32.totalorder %s184, %s186
      %p190 = scmp.eq.s32.totalorder %s26, 0
      %p191 = por %p189, %p190
      %p192 = scmp.ne.s32.totalorder %s184, %s186
      %p193 = scmp.eq.s32.totalorder %s31, 1
      %p194 = por %p192, %p193
      %p195 = scmp.ne.s32.totalorder %s186, %s187
      %p196 = scmp.eq.s32.totalorder %s31, 0
      %p197 = por %p195, %p196
      %p198 = scmp.ne.s32.totalorder %s186, %s187
      %p199 = scmp.eq.s32.totalorder %s32, 1
      %p200 = por %p198, %p199
      %p202 = scmp.ne.s32.totalorder %s187, %s201
      %p203 = scmp.eq.s32.totalorder %s32, 0
      %p204 = por %p202, %p203
      %s206 = sadd.s32 %s205, 1
      %p209 = scmp.eq.s32.totalorder %s26, 1
      %p210 = scmp.ne.s32.totalorder %s205, %s207
      %p211 = scmp.eq.s32.totalorder %s26, 0
      %p212 = por %p210, %p211
      %p213 = scmp.ne.s32.totalorder %s205, %s207
      %p214 = scmp.eq.s32.totalorder %s31, 1
      %p215 = por %p213, %p214
      %p216 = scmp.ne.s32.totalorder %s207, %s208
      %p217 = scmp.eq.s32.totalorder %s31, 0
      %p218 = por %p216, %p217
      %p219 = scmp.ne.s32.totalorder %s207, %s208
      %p220 = scmp.eq.s32.totalorder %s32, 1
      %p221 = por %p219, %p220
      %p223 = scmp.ne.s32.totalorder %s208, %s222
      %p224 = scmp.eq.s32.totalorder %s32, 0
      %p225 = por %p223, %p224
      %s227 = sadd.s32 %s226, 1
      %p230 = scmp.eq.s32.totalorder %s26, 1
      %p231 = scmp.ne.s32.totalorder %s226, %s228
      %p232 = scmp.eq.s32.totalorder %s26, 0
      %p233 = por %p231, %p232
      %p234 = scmp.ne.s32.totalorder %s226, %s228
      %p235 = scmp.eq.s32.totalorder %s31, 1
      %p236 = por %p234, %p235
      %p237 = scmp.ne.s32.totalorder %s228, %s229
      %p238 = scmp.eq.s32.totalorder %s31, 0
      %p239 = por %p237, %p238
      %p240 = scmp.ne.s32.totalorder %s228, %s229
      %p241 = scmp.eq.s32.totalorder %s32, 1
      %p242 = por %p240, %p241
      %p244 = scmp.ne.s32.totalorder %s229, %s243
      %p245 = scmp.eq.s32.totalorder %s32, 0
      %p246 = por %p244, %p245
      %s248 = sadd.s32 %s247, 1
      %p251 = scmp.eq.s32.totalorder %s26, 1
      %p252 = scmp.ne.s32.totalorder %s247, %s249
      %p253 = scmp.eq.s32.totalorder %s26, 0
      %p254 = por %p252, %p253
      %p255 = scmp.ne.s32.totalorder %s247, %s249
      %p256 = scmp.eq.s32.totalorder %s31, 1
      %p257 = por %p255, %p256
      %p258 = scmp.ne.s32.totalorder %s249, %s250
      %p259 = scmp.eq.s32.totalorder %s31, 0
      %p260 = por %p258, %p259
      %p261 = scmp.ne.s32.totalorder %s249, %s250
      %p262 = scmp.eq.s32.totalorder %s32, 1
      %p263 = por %p261, %p262
      %p265 = scmp.ne.s32.totalorder %s250, %s264
      %p266 = scmp.eq.s32.totalorder %s32, 0
      %p267 = por %p265, %p266
      %s269 = sadd.s32 %s268, 1
      %p272 = scmp.eq.s32.totalorder %s26, 1
      %p273 = scmp.ne.s32.totalorder %s268, %s270
      %p274 = scmp.eq.s32.totalorder %s26, 0
      %p275 = por %p273, %p274
      %p276 = scmp.ne.s32.totalorder %s268, %s270
      %p277 = scmp.eq.s32.totalorder %s31, 1
      %p278 = por %p276, %p277
      %p279 = scmp.ne.s32.totalorder %s270, %s271
      %p280 = scmp.eq.s32.totalorder %s31, 0
      %p281 = por %p279, %p280
      %p282 = scmp.ne.s32.totalorder %s270, %s271
      %p283 = scmp.eq.s32.totalorder %s32, 1
      %p284 = por %p282, %p283
      %p286 = scmp.ne.s32.totalorder %s271, %s285
      %p287 = scmp.eq.s32.totalorder %s32, 0
      %p288 = por %p286, %p287
      %s290 = sadd.s32 %s289, 1
      %p293 = scmp.eq.s32.totalorder %s26, 1
      %p294 = scmp.ne.s32.totalorder %s289, %s291
      %p295 = scmp.eq.s32.totalorder %s26, 0
      %p296 = por %p294, %p295
      %p297 = scmp.ne.s32.totalorder %s289, %s291
      %p298 = scmp.eq.s32.totalorder %s31, 1
      %p299 = por %p297, %p298
      %p300 = scmp.ne.s32.totalorder %s291, %s292
      %p301 = scmp.eq.s32.totalorder %s31, 0
      %p302 = por %p300, %p301
      %p303 = scmp.ne.s32.totalorder %s291, %s292
      %p304 = scmp.eq.s32.totalorder %s32, 1
      %p305 = por %p303, %p304
      %p307 = scmp.ne.s32.totalorder %s292, %s306
      %p308 = scmp.eq.s32.totalorder %s32, 0
      %p309 = por %p307, %p308
      %s311 = sadd.s32 %s310, 1
      %p314 = scmp.eq.s32.totalorder %s26, 1
      %p315 = scmp.ne.s32.totalorder %s310, %s312
      %p316 = scmp.eq.s32.totalorder %s26, 0
      %p317 = por %p315, %p316
      %p318 = scmp.ne.s32.totalorder %s310, %s312
      %p319 = scmp.eq.s32.totalorder %s31, 1
      %p320 = por %p318, %p319
      %p321 = scmp.ne.s32.totalorder %s312, %s313
      %p322 = scmp.eq.s32.totalorder %s31, 0
      %p323 = por %p321, %p322
      %p324 = scmp.ne.s32.totalorder %s312, %s313
      %p325 = scmp.eq.s32.totalorder %s32, 1
      %p326 = por %p324, %p325
      %p328 = scmp.ne.s32.totalorder %s313, %s327
      %p329 = scmp.eq.s32.totalorder %s32, 0
      %p330 = por %p328, %p329
      %s332 = sadd.s32 %s331, 1
      %p335 = scmp.eq.s32.totalorder %s26, 1
      %p336 = scmp.ne.s32.totalorder %s331, %s333
      %p337 = scmp.eq.s32.totalorder %s26, 0
      %p338 = por %p336, %p337
      %p339 = scmp.ne.s32.totalorder %s331, %s333
      %p340 = scmp.eq.s32.totalorder %s31, 1
      %p341 = por %p339, %p340
      %p342 = scmp.ne.s32.totalorder %s333, %s334
      %p343 = scmp.eq.s32.totalorder %s31, 0
      %p344 = por %p342, %p343
      %p345 = scmp.ne.s32.totalorder %s333, %s334
      %p346 = scmp.eq.s32.totalorder %s32, 1
      %p347 = por %p345, %p346
      %p349 = scmp.ne.s32.totalorder %s334, %s348
      %p350 = scmp.eq.s32.totalorder %s32, 0
      %p351 = por %p349, %p350
      %s353 = sadd.s32 %s352, 1
      %p356 = scmp.eq.s32.totalorder %s26, 1
      %p357 = scmp.ne.s32.totalorder %s352, %s354
      %p358 = scmp.eq.s32.totalorder %s26, 0
      %p359 = por %p357, %p358
      %p360 = scmp.ne.s32.totalorder %s352, %s354
      %p361 = scmp.eq.s32.totalorder %s31, 1
      %p362 = por %p360, %p361
      %p363 = scmp.ne.s32.totalorder %s354, %s355
      %p364 = scmp.eq.s32.totalorder %s31, 0
      %p365 = por %p363, %p364
      %p366 = scmp.ne.s32.totalorder %s354, %s355
      %p367 = scmp.eq.s32.totalorder %s32, 1
      %p368 = por %p366, %p367
      %p370 = scmp.ne.s32.totalorder %s355, %s369
      %p371 = scmp.eq.s32.totalorder %s32, 0
      %p372 = por %p370, %p371
      %s374 = sadd.s32 %s373, 1
      %p377 = scmp.eq.s32.totalorder %s26, 1
      %p378 = scmp.ne.s32.totalorder %s373, %s375
      %p379 = scmp.eq.s32.totalorder %s26, 0
      %p380 = por %p378, %p379
      %p381 = scmp.ne.s32.totalorder %s373, %s375
      %p382 = scmp.eq.s32.totalorder %s31, 1
      %p383 = por %p381, %p382
      %p384 = scmp.ne.s32.totalorder %s375, %s376
      %p385 = scmp.eq.s32.totalorder %s31, 0
      %p386 = por %p384, %p385
      %p387 = scmp.ne.s32.totalorder %s375, %s376
      %p388 = scmp.eq.s32.totalorder %s32, 1
      %p389 = por %p387, %p388
      %p391 = scmp.ne.s32.totalorder %s376, %s390
      %p392 = scmp.eq.s32.totalorder %s32, 0
      %p393 = por %p391, %p392
      %s395 = sadd.s32 %s394, 1
      %p398 = scmp.eq.s32.totalorder %s26, 1
      %p399 = scmp.ne.s32.totalorder %s394, %s396
      %p400 = scmp.eq.s32.totalorder %s26, 0
      %p401 = por %p399, %p400
      %p402 = scmp.ne.s32.totalorder %s394, %s396
      %p403 = scmp.eq.s32.totalorder %s31, 1
      %p404 = por %p402, %p403
      %p405 = scmp.ne.s32.totalorder %s396, %s397
      %p406 = scmp.eq.s32.totalorder %s31, 0
      %p407 = por %p405, %p406
      %p408 = scmp.ne.s32.totalorder %s396, %s397
      %p409 = scmp.eq.s32.totalorder %s32, 1
      %p410 = por %p408, %p409
      %p412 = scmp.ne.s32.totalorder %s397, %s411
      %p413 = scmp.eq.s32.totalorder %s32, 0
      %p414 = por %p412, %p413
      %s415 = ssub.s32 %s33, %s45
      %s416 = ssub.s32 %s34, %s41
      %s417 = sor.u32 %s415, %s416
      %p418 = scmp.eq.s32.totalorder %s417, 0
      %s420 = sadd.s32 %s419, 1
      %s421 = scalar_select %p418, %s419, %s420
      %p424 = pneg %p418
      %p425 = scmp.eq.s32.totalorder %s26, 1
      %p426 = por %p424, %p425
      %p427 = scmp.ne.s32.totalorder %s419, %s422
      %p428 = scmp.eq.s32.totalorder %s26, 0
      %p429 = por %p427, %p428
      %p430 = scmp.ne.s32.totalorder %s419, %s422
      %p431 = scmp.eq.s32.totalorder %s31, 1
      %p432 = por %p430, %p431
      %p433 = scmp.ne.s32.totalorder %s422, %s423
      %p434 = scmp.eq.s32.totalorder %s31, 0
      %p435 = por %p433, %p434
      %p436 = scmp.ne.s32.totalorder %s422, %s423
      %p437 = scmp.eq.s32.totalorder %s32, 1
      %p438 = por %p436, %p437
      %p440 = scmp.ne.s32.totalorder %s423, %s439
      %p441 = scmp.eq.s32.totalorder %s32, 0
      %p442 = por %p440, %p441
      %p443 = scmp.le.s32.totalorder 1, %s26
      %p444 = scmp.lt.s32.totalorder %s26, 3
      %p445 = pnand %p443, %p444
      %p446 = pneg %p445
      // Predicated region
      $region9: #{tpu_custom_call.1} parent=5 // pred_check
        _
      $region10: #{tpu_custom_call.1} parent=5 // pred_check_branch
        %448 = sbr.rel (%p445) target = $region12
      $region11: #{tpu_custom_call.1} parent=5 // pred_region
        %s449 = ssub.s32 %s26, 1
        // Predicated region
        $region13: #{tpu_custom_call.1} parent=11 // pred_check
          %p450 = pneg %p113
        $region14: #{tpu_custom_call.1} parent=11 // pred_check_branch
          %452 = sbr.rel (%p450) target = $region16
        $region15: #{tpu_custom_call.1} parent=11 // pred_region
          _
        $region16: #{tpu_custom_call.1} parent=11 // pred_fallthru
          _
        // Predicated region
        $region17: #{tpu_custom_call.1} parent=11 // pred_check
          %p453 = pneg %p134
        $region18: #{tpu_custom_call.1} parent=11 // pred_check_branch
          %455 = sbr.rel (%p453) target = $region20
        $region19: #{tpu_custom_call.1} parent=11 // pred_region
          _
        $region20: #{tpu_custom_call.1} parent=11 // pred_fallthru
          _
        // Predicated region
        $region21: #{tpu_custom_call.1} parent=11 // pred_check
          %p456 = pneg %p155
        $region22: #{tpu_custom_call.1} parent=11 // pred_check_branch
          %458 = sbr.rel (%p456) target = $region24
        $region23: #{tpu_custom_call.1} parent=11 // pred_region
          _
        $region24: #{tpu_custom_call.1} parent=11 // pred_fallthru
          _
        // Predicated region
        $region25: #{tpu_custom_call.1} parent=11 // pred_check
          %p459 = pneg %p176
        $region26: #{tpu_custom_call.1} parent=11 // pred_check_branch
          %461 = sbr.rel (%p459) target = $region28
        $region27: #{tpu_custom_call.1} parent=11 // pred_region
          _
        $region28: #{tpu_custom_call.1} parent=11 // pred_fallthru
          _
        // Predicated region
        $region29: #{tpu_custom_call.1} parent=11 // pred_check
          %p462 = pneg %p197
        $region30: #{tpu_custom_call.1} parent=11 // pred_check_branch
          %464 = sbr.rel (%p462) target = $region32
        $region31: #{tpu_custom_call.1} parent=11 // pred_region
          _
        $region32: #{tpu_custom_call.1} parent=11 // pred_fallthru
          _
        // Predicated region
        $region33: #{tpu_custom_call.1} parent=11 // pred_check
          %p465 = pneg %p218
        $region34: #{tpu_custom_call.1} parent=11 // pred_check_branch
          %467 = sbr.rel (%p465) target = $region36
        $region35: #{tpu_custom_call.1} parent=11 // pred_region
          _
        $region36: #{tpu_custom_call.1} parent=11 // pred_fallthru
          _
        // Predicated region
        $region37: #{tpu_custom_call.1} parent=11 // pred_check
          %p468 = pneg %p239
        $region38: #{tpu_custom_call.1} parent=11 // pred_check_branch
          %470 = sbr.rel (%p468) target = $region40
        $region39: #{tpu_custom_call.1} parent=11 // pred_region
          _
        $region40: #{tpu_custom_call.1} parent=11 // pred_fallthru
          _
        // Predicated region
        $region41: #{tpu_custom_call.1} parent=11 // pred_check
          %p471 = pneg %p260
        $region42: #{tpu_custom_call.1} parent=11 // pred_check_branch
          %473 = sbr.rel (%p471) target = $region44
        $region43: #{tpu_custom_call.1} parent=11 // pred_region
          _
        $region44: #{tpu_custom_call.1} parent=11 // pred_fallthru
          _
        // Predicated region
        $region45: #{tpu_custom_call.1} parent=11 // pred_check
          %p474 = pneg %p281
        $region46: #{tpu_custom_call.1} parent=11 // pred_check_branch
          %476 = sbr.rel (%p474) target = $region48
        $region47: #{tpu_custom_call.1} parent=11 // pred_region
          _
        $region48: #{tpu_custom_call.1} parent=11 // pred_fallthru
          _
        // Predicated region
        $region49: #{tpu_custom_call.1} parent=11 // pred_check
          %p477 = pneg %p302
        $region50: #{tpu_custom_call.1} parent=11 // pred_check_branch
          %479 = sbr.rel (%p477) target = $region52
        $region51: #{tpu_custom_call.1} parent=11 // pred_region
          _
        $region52: #{tpu_custom_call.1} parent=11 // pred_fallthru
          _
        // Predicated region
        $region53: #{tpu_custom_call.1} parent=11 // pred_check
          %p480 = pneg %p323
        $region54: #{tpu_custom_call.1} parent=11 // pred_check_branch
          %482 = sbr.rel (%p480) target = $region56
        $region55: #{tpu_custom_call.1} parent=11 // pred_region
          _
        $region56: #{tpu_custom_call.1} parent=11 // pred_fallthru
          _
        // Predicated region
        $region57: #{tpu_custom_call.1} parent=11 // pred_check
          %p483 = pneg %p344
        $region58: #{tpu_custom_call.1} parent=11 // pred_check_branch
          %485 = sbr.rel (%p483) target = $region60
        $region59: #{tpu_custom_call.1} parent=11 // pred_region
          _
        $region60: #{tpu_custom_call.1} parent=11 // pred_fallthru
          _
        // Predicated region
        $region61: #{tpu_custom_call.1} parent=11 // pred_check
          %p486 = pneg %p365
        $region62: #{tpu_custom_call.1} parent=11 // pred_check_branch
          %488 = sbr.rel (%p486) target = $region64
        $region63: #{tpu_custom_call.1} parent=11 // pred_region
          _
        $region64: #{tpu_custom_call.1} parent=11 // pred_fallthru
          _
        // Predicated region
        $region65: #{tpu_custom_call.1} parent=11 // pred_check
          %p489 = pneg %p386
        $region66: #{tpu_custom_call.1} parent=11 // pred_check_branch
          %491 = sbr.rel (%p489) target = $region68
        $region67: #{tpu_custom_call.1} parent=11 // pred_region
          _
        $region68: #{tpu_custom_call.1} parent=11 // pred_fallthru
          _
        // Predicated region
        $region69: #{tpu_custom_call.1} parent=11 // pred_check
          %p492 = pneg %p407
        $region70: #{tpu_custom_call.1} parent=11 // pred_check_branch
          %494 = sbr.rel (%p492) target = $region72
        $region71: #{tpu_custom_call.1} parent=11 // pred_region
          _
        $region72: #{tpu_custom_call.1} parent=11 // pred_fallthru
          _
      $region12: #{tpu_custom_call.1} parent=5 // pred_fallthru
        _
      %p495 = scmp.lt.s32.totalorder %s26, 2
      // Predicated region
      $region73: #{tpu_custom_call.1} parent=5 // pred_check
        %p496 = pneg %p495
      $region74: #{tpu_custom_call.1} parent=5 // pred_check_branch
        %498 = sbr.rel (%p496) target = $region76
      $region75: #{tpu_custom_call.1} parent=5 // pred_region
        // Predicated region
        $region77: #{tpu_custom_call.1} parent=75 // pred_check
          %p499 = pneg %p60
        $region78: #{tpu_custom_call.1} parent=75 // pred_check_branch
          %501 = sbr.rel (%p499) target = $region80
        $region79: #{tpu_custom_call.1} parent=75 // pred_region
          %s502 = smul.u32 2, %s34
          %p503 = scmp.lt.s32.totalorder %s33, 1
          %s504 = scalar_select %p503, %s33, 1
          %p505 = scmp.lt.s32.totalorder %s502, 1
          %s506 = scalar_select %p505, %s502, 1
          %s507 = smul.addr %s504, 8
          %s508 = sadd.s32 %s506, %s507
          %s509 = smul.addr %s508, 4
          %s510 = scalar_lea.vmem %s0, %s509
          %s511 = smul.u32 2, %s34
        $region80: #{tpu_custom_call.1} parent=75 // pred_fallthru
          _
        // Predicated region
        $region81: #{tpu_custom_call.1} parent=75 // pred_check
          %p512 = pneg %p86
        $region82: #{tpu_custom_call.1} parent=75 // pred_check_branch
          %514 = sbr.rel (%p512) target = $region84
        $region83: #{tpu_custom_call.1} parent=75 // pred_region
          %p515 = scmp.lt.s32.totalorder %s33, 1
          %s516 = scalar_select %p515, %s33, 1
          %s517 = smul.addr %s516, 4
          %s518 = smul.addr %s517, 4
          %s519 = scalar_lea.vmem %s1, %s518
        $region84: #{tpu_custom_call.1} parent=75 // pred_fallthru
          _
      $region76: #{tpu_custom_call.1} parent=5 // pred_fallthru
        _
      %p520 = scmp.le.s32.totalorder 1, %s26
      %p521 = scmp.lt.s32.totalorder %s26, 3
      %p522 = pnand %p520, %p521
      %p523 = pneg %p522
      // Predicated region
      $region85: #{tpu_custom_call.1} parent=5 // pred_check
        _
      $region86: #{tpu_custom_call.1} parent=5 // pred_check_branch
        %525 = sbr.rel (%p522) target = $region88
      $region87: #{tpu_custom_call.1} parent=5 // pred_region
        %s526 = ssub.s32 %s26, 1
        %s527 = smul.u32 2, %s36
        %p528 = scmp.lt.s32.totalorder %s35, 1
        %s529 = scalar_select %p528, %s35, 1
        %p530 = scmp.lt.s32.totalorder %s527, 1
        %s531 = scalar_select %p530, %s527, 1
        %s532 = smul.addr %s529, 8
        %s533 = sadd.s32 %s531, %s532
        %s534 = smul.addr %s533, 4
        %s535 = scalar_lea.vmem %s0, %s534
        %p536 = pneg %p66
        %p537 = pneg %p63
        %p538 = scmp.lt.s32.totalorder %s35, 1
        %s539 = scalar_select %p538, %s35, 1
        %s540 = smul.addr %s539, 4
        %s541 = smul.addr %s540, 4
        %s542 = scalar_lea.vmem %s1, %s541
        %p543 = pneg %p92
        %p544 = pneg %p89
        %p545 = pneg %p113
        %p546 = pneg %p110
        %p547 = pneg %p134
        %p548 = pneg %p131
        %p549 = pneg %p155
        %p550 = pneg %p152
        %p551 = pneg %p176
        %p552 = pneg %p173
        %p553 = pneg %p197
        %p554 = pneg %p194
        %p555 = pneg %p218
        %p556 = pneg %p215
        %p557 = pneg %p239
        %p558 = pneg %p236
        %p559 = pneg %p260
        %p560 = pneg %p257
        %p561 = pneg %p281
        %p562 = pneg %p278
        %p563 = pneg %p302
        %p564 = pneg %p299
        %p565 = pneg %p323
        %p566 = pneg %p320
        %p567 = pneg %p344
        %p568 = pneg %p341
        %p569 = pneg %p365
        %p570 = pneg %p362
        %p571 = pneg %p386
        %p572 = pneg %p383
        %p573 = pneg %p407
        %p574 = pneg %p404
        %p575 = pneg %p435
        %p576 = pneg %p432
        %s577 = sand.u32 %s422, 1
        %s578 = scalar_lea.sflag [#allocation3], %s577
        %s579 = sand.u32 %s422, 1
        %s580 = smul.addr %s579, 64
        %s581 = scalar_lea.vmem [#allocation2], %s580
        %s582 = smul.u32 2, %s36
        %p583 = scmp.lt.s32.totalorder %s35, 1
        %s584 = scalar_select %p583, %s35, 1
        %p585 = scmp.lt.s32.totalorder %s582, 1
        %s586 = scalar_select %p585, %s582, 1
        %s587 = smul.addr %s584, 8
        %s588 = sadd.s32 %s586, %s587
        %s589 = smul.addr %s588, 4
        %s590 = scalar_lea.vmem %s0, %s589
        %s591 = smul.u32 2, %s36
        %p592 = scmp.lt.s32.totalorder %s35, 1
        %s593 = scalar_select %p592, %s35, 1
        %s594 = smul.addr %s593, 4
        %s595 = smul.addr %s594, 4
        %s596 = scalar_lea.vmem %s1, %s595
        %s597 = smul.u32 2, %s36
        %v599 = vld [vmem:[%s590] sm:$0xff]
        %v600 = vld [vmem:[%s590 + $0x8] sm:$0xff]
        %v601 = vld [vmem:[%s590 + $0x10] sm:$0xff]
        %v602 = vld [vmem:[%s590 + $0x18] sm:$0xff]
        %v603 = vld [vmem:[%s596] sm:$0xf]
        %v604 = vld [vmem:[%s596 + $0x4] sm:$0xf]
        %v605 = vld [vmem:[%s596 + $0x8] sm:$0xf]
        %v606 = vld [vmem:[%s596 + $0xc] sm:$0xf]
        %v607 = vld [vmem:[%s2] sm:$0xf]
        %v608 = vld [vmem:[%s2 + $0x4] sm:$0xf]
        %v609 = vld [vmem:[%s3] sm:$0xff]
        %v610 = vld [vmem:[%s3 + $0x8] sm:$0xff]
        %612 = vset.pattern.permute.xlu0 0
        %613 = vperm.xlu0 %612, %v609
        %v614 = vpop.permute.xlu0 %613
        %617 = vset.pattern.permute.xlu0 0
        %618 = vperm.xlu0 %617, %v610
        %v619 = vpop.permute.xlu0 %618
        %v623 = vunpack.c.l.b16 %v607
        %v624 = vunpack.c.l.b16 %v608
        %v625 = vpack.c.b16 %v624, %v623
        %v630 = vunpack.c.l.b16 %v599
        %v631 = vunpack.c.h.b16 %v599
        %v632 = vunpack.c.l.b16 %v600
        %v633 = vunpack.c.h.b16 %v600
        %v634 = vunpack.c.l.b16 %v601
        %v635 = vunpack.c.h.b16 %v601
        %v636 = vunpack.c.l.b16 %v602
        %v637 = vunpack.c.h.b16 %v602
        %v638 = vpack.c.b16 %v632, %v630
        %v639 = vpack.c.b16 %v633, %v631
        %v640 = vpack.c.b16 %v636, %v634
        %v641 = vpack.c.b16 %v637, %v635
        %vm646 = vcmask 261120
        %v648 = vsel %vm646, %v625, 0
        %650 = vmatprep.subr.bf16.mxu0 %v639
        %651 = vmatpush1.bf16.msra.mxu0 %v638
        %652 = vmatprep.subr.bf16.mxu0 %v641
        %653 = vmatpush1.bf16.msra.mxu0 %v640
        %654 = vmatprep.subr.bf16.mxu0 0
        %655 = vmatpush1.bf16.msra.mxu0 0
        %656 = vmatprep.subr.bf16.mxu0 0
        %657 = vmatpush1.bf16.msra.mxu0 0
        %658 = vmatprep.subr.bf16.mxu0 0
        %659 = vmatpush1.bf16.msra.mxu0 0
        %660 = vmatprep.subr.bf16.mxu0 0
        %661 = vmatpush1.bf16.msra.mxu0 0
        %662 = vmatprep.subr.bf16.mxu0 0
        %663 = vmatpush1.bf16.msra.mxu0 0
        %664 = vmatprep.subr.bf16.mxu0 0
        %665 = vmatpush1.bf16.msra.mxu0 0
        %666 = vmatprep.subr.bf16.mxu0 0
        %667 = vmatpush1.bf16.msra.mxu0 0
        %668 = vmatprep.subr.bf16.mxu0 0
        %669 = vmatpush1.bf16.msra.mxu0 0
        %670 = vmatprep.subr.bf16.mxu0 0
        %671 = vmatpush1.bf16.msra.mxu0 0
        %672 = vmatprep.subr.bf16.mxu0 0
        %673 = vmatpush1.bf16.msra.mxu0 0
        %674 = vmatprep.subr.bf16.mxu0 0
        %675 = vmatpush1.bf16.msra.mxu0 0
        %676 = vmatprep.subr.bf16.mxu0 0
        %677 = vmatpush1.bf16.msra.mxu0 0
        %678 = vmatprep.subr.bf16.mxu0 0
        %679 = vmatpush1.bf16.msra.mxu0 0
        %680 = vmatprep.subr.bf16.mxu0 0
        %681 = vmatpush1.bf16.msra.mxu0 0
        %682 = vmatprep.mubr.bf16.mxu0 0
        %683 = vmatmul.mubr.bf16.gmra.mrb[0].mxu0 %v648
        %v684 = vpop.f32.mrb[0].mxu0
        %v685 = vadd.f32 %v614, %v684
        %v686 = vpop.f32.mrb[0].mxu0
        %v687 = vadd.f32 %v614, %v686
        %v688 = vpop.f32.mrb[0].mxu0
        %v689 = vadd.f32 %v619, %v688
        %v690 = vpop.f32.mrb[0].mxu0
        %v691 = vadd.f32 %v619, %v690
        %692 = vdwg.mxu0
        %v693 = vmax.f32 %v685, 0.0
        %v694 = vmax.f32 %v687, 0.0
        %v695 = vmax.f32 %v689, 0.0
        %v696 = vmax.f32 %v691, 0.0
        %v697 = vpack.c.bf16 %v695, %v693
        %v698 = vpack.c.bf16 %v696, %v694
        %v699 = vld [vmem:[%s4] sm:$0xf]
        %v700 = vld [vmem:[%s4 + $0x4] sm:$0xf]
        %v701 = vld [vmem:[%s5] sm:$0xff]
        %v702 = vld [vmem:[%s5 + $0x8] sm:$0xff]
        %704 = vset.pattern.permute.xlu0 0
        %705 = vperm.xlu0 %704, %v701
        %v706 = vpop.permute.xlu0 %705
        %709 = vset.pattern.permute.xlu0 0
        %710 = vperm.xlu0 %709, %v702
        %v711 = vpop.permute.xlu0 %710
        %v715 = vunpack.c.l.b16 %v699
        %v716 = vunpack.c.l.b16 %v700
        %v717 = vpack.c.b16 %v716, %v715
        %vm718 = vcmask 130048
        %v720 = vsel %vm718, %v717, 0
        %722 = vmatprep.subr.bf16.mxu0 %v698
        %723 = vmatpush1.bf16.msra.mxu0 %v697
        %724 = vmatprep.subr.bf16.mxu0 0
        %725 = vmatpush1.bf16.msra.mxu0 0
        %726 = vmatprep.subr.bf16.mxu0 0
        %727 = vmatpush1.bf16.msra.mxu0 0
        %728 = vmatprep.subr.bf16.mxu0 0
        %729 = vmatpush1.bf16.msra.mxu0 0
        %730 = vmatprep.subr.bf16.mxu0 0
        %731 = vmatpush1.bf16.msra.mxu0 0
        %732 = vmatprep.subr.bf16.mxu0 0
        %733 = vmatpush1.bf16.msra.mxu0 0
        %734 = vmatprep.subr.bf16.mxu0 0
        %735 = vmatpush1.bf16.msra.mxu0 0
        %736 = vmatprep.subr.bf16.mxu0 0
        %737 = vmatpush1.bf16.msra.mxu0 0
        %738 = vmatprep.subr.bf16.mxu0 0
        %739 = vmatpush1.bf16.msra.mxu0 0
        %740 = vmatprep.subr.bf16.mxu0 0
        %741 = vmatpush1.bf16.msra.mxu0 0
        %742 = vmatprep.subr.bf16.mxu0 0
        %743 = vmatpush1.bf16.msra.mxu0 0
        %744 = vmatprep.subr.bf16.mxu0 0
        %745 = vmatpush1.bf16.msra.mxu0 0
        %746 = vmatprep.subr.bf16.mxu0 0
        %747 = vmatpush1.bf16.msra.mxu0 0
        %748 = vmatprep.subr.bf16.mxu0 0
        %749 = vmatpush1.bf16.msra.mxu0 0
        %750 = vmatprep.subr.bf16.mxu0 0
        %751 = vmatpush1.bf16.msra.mxu0 0
        %752 = vmatprep.subr.bf16.mxu0 0
        %753 = vmatpush1.bf16.msra.mxu0 0
        %754 = vmatprep.mubr.bf16.mxu0 0
        %755 = vmatmul.mubr.bf16.gmra.mrb[0].mxu0 %v720
        %v756 = vpop.f32.mrb[0].mxu0
        %v757 = vadd.f32 %v706, %v756
        %v758 = vpop.f32.mrb[0].mxu0
        %v759 = vadd.f32 %v706, %v758
        %v760 = vpop.f32.mrb[0].mxu0
        %v761 = vadd.f32 %v711, %v760
        %v762 = vpop.f32.mrb[0].mxu0
        %v763 = vadd.f32 %v711, %v762
        %764 = vdwg.mxu0
        %v765 = vmax.f32 %v757, 0.0
        %v766 = vmax.f32 %v759, 0.0
        %v767 = vmax.f32 %v761, 0.0
        %v768 = vmax.f32 %v763, 0.0
        %v769 = vpack.c.bf16 %v767, %v765
        %v770 = vpack.c.bf16 %v768, %v766
        %v771 = vld [vmem:[%s6] sm:$0xf]
        %v772 = vld [vmem:[%s6 + $0x4] sm:$0xf]
        %v773 = vld [vmem:[%s7] sm:$0xff]
        %v774 = vld [vmem:[%s7 + $0x8] sm:$0xff]
        %776 = vset.pattern.permute.xlu0 0
        %777 = vperm.xlu0 %776, %v773
        %v778 = vpop.permute.xlu0 %777
        %781 = vset.pattern.permute.xlu0 0
        %782 = vperm.xlu0 %781, %v774
        %v783 = vpop.permute.xlu0 %782
        %v787 = vunpack.c.l.b16 %v771
        %v788 = vunpack.c.l.b16 %v772
        %v789 = vpack.c.b16 %v788, %v787
        %v794 = vunpack.c.l.b16 %v603
        %v795 = vunpack.c.l.b16 %v604
        %v796 = vunpack.c.l.b16 %v605
        %v797 = vunpack.c.l.b16 %v606
        %v798 = vpack.c.b16 %v795, %v794
        %v799 = vpack.c.b16 %v797, %v796
        %v803 = vsel %vm646, %v789, 0
        %805 = vmatprep.subr.bf16.mxu0 0
        %806 = vmatpush1.bf16.msra.mxu0 %v798
        %807 = vmatprep.subr.bf16.mxu0 0
        %808 = vmatpush1.bf16.msra.mxu0 %v799
        %809 = vmatprep.subr.bf16.mxu0 0
        %810 = vmatpush1.bf16.msra.mxu0 0
        %811 = vmatprep.subr.bf16.mxu0 0
        %812 = vmatpush1.bf16.msra.mxu0 0
        %813 = vmatprep.subr.bf16.mxu0 0
        %814 = vmatpush1.bf16.msra.mxu0 0
        %815 = vmatprep.subr.bf16.mxu0 0
        %816 = vmatpush1.bf16.msra.mxu0 0
        %817 = vmatprep.subr.bf16.mxu0 0
        %818 = vmatpush1.bf16.msra.mxu0 0
        %819 = vmatprep.subr.bf16.mxu0 0
        %820 = vmatpush1.bf16.msra.mxu0 0
        %821 = vmatprep.subr.bf16.mxu0 0
        %822 = vmatpush1.bf16.msra.mxu0 0
        %823 = vmatprep.subr.bf16.mxu0 0
        %824 = vmatpush1.bf16.msra.mxu0 0
        %825 = vmatprep.subr.bf16.mxu0 0
        %826 = vmatpush1.bf16.msra.mxu0 0
        %827 = vmatprep.subr.bf16.mxu0 0
        %828 = vmatpush1.bf16.msra.mxu0 0
        %829 = vmatprep.subr.bf16.mxu0 0
        %830 = vmatpush1.bf16.msra.mxu0 0
        %831 = vmatprep.subr.bf16.mxu0 0
        %832 = vmatpush1.bf16.msra.mxu0 0
        %833 = vmatprep.subr.bf16.mxu0 0
        %834 = vmatpush1.bf16.msra.mxu0 0
        %835 = vmatprep.subr.bf16.mxu0 0
        %836 = vmatpush1.bf16.msra.mxu0 0
        %837 = vmatprep.mubr.bf16.mxu0 0
        %838 = vmatmul.mubr.bf16.gmra.mrb[0].mxu0 %v803
        %v839 = vpop.f32.mrb[0].mxu0
        %v840 = vadd.f32 %v778, %v839
        %v841 = vpop.f32.mrb[0].mxu0
        %v842 = vpop.f32.mrb[0].mxu0
        %v843 = vadd.f32 %v783, %v842
        %v844 = vpop.f32.mrb[0].mxu0
        %845 = vdwg.mxu0
        %v846 = vmax.f32 %v840, 0.0
        %v847 = vmax.f32 %v843, 0.0
        %v848 = vpack.c.bf16 %v847, %v846
        %v849 = vld [vmem:[%s8] sm:$0xf]
        %v850 = vld [vmem:[%s8 + $0x4] sm:$0xf]
        %v851 = vld [vmem:[%s9] sm:$0xff]
        %v852 = vld [vmem:[%s9 + $0x8] sm:$0xff]
        %854 = vset.pattern.permute.xlu0 0
        %855 = vperm.xlu0 %854, %v851
        %v856 = vpop.permute.xlu0 %855
        %859 = vset.pattern.permute.xlu0 0
        %860 = vperm.xlu0 %859, %v852
        %v861 = vpop.permute.xlu0 %860
        %v865 = vunpack.c.l.b16 %v849
        %v866 = vunpack.c.l.b16 %v850
        %v867 = vpack.c.b16 %v866, %v865
        %v869 = vsel %vm718, %v867, 0
        %871 = vmatprep.subr.bf16.mxu0 0
        %872 = vmatpush1.bf16.msra.mxu0 %v848
        %873 = vmatprep.subr.bf16.mxu0 0
        %874 = vmatpush1.bf16.msra.mxu0 0
        %875 = vmatprep.subr.bf16.mxu0 0
        %876 = vmatpush1.bf16.msra.mxu0 0
        %877 = vmatprep.subr.bf16.mxu0 0
        %878 = vmatpush1.bf16.msra.mxu0 0
        %879 = vmatprep.subr.bf16.mxu0 0
        %880 = vmatpush1.bf16.msra.mxu0 0
        %881 = vmatprep.subr.bf16.mxu0 0
        %882 = vmatpush1.bf16.msra.mxu0 0
        %883 = vmatprep.subr.bf16.mxu0 0
        %884 = vmatpush1.bf16.msra.mxu0 0
        %885 = vmatprep.subr.bf16.mxu0 0
        %886 = vmatpush1.bf16.msra.mxu0 0
        %887 = vmatprep.subr.bf16.mxu0 0
        %888 = vmatpush1.bf16.msra.mxu0 0
        %889 = vmatprep.subr.bf16.mxu0 0
        %890 = vmatpush1.bf16.msra.mxu0 0
        %891 = vmatprep.subr.bf16.mxu0 0
        %892 = vmatpush1.bf16.msra.mxu0 0
        %893 = vmatprep.subr.bf16.mxu0 0
        %894 = vmatpush1.bf16.msra.mxu0 0
        %895 = vmatprep.subr.bf16.mxu0 0
        %896 = vmatpush1.bf16.msra.mxu0 0
        %897 = vmatprep.subr.bf16.mxu0 0
        %898 = vmatpush1.bf16.msra.mxu0 0
        %899 = vmatprep.subr.bf16.mxu0 0
        %900 = vmatpush1.bf16.msra.mxu0 0
        %901 = vmatprep.subr.bf16.mxu0 0
        %902 = vmatpush1.bf16.msra.mxu0 0
        %903 = vmatprep.mubr.bf16.mxu0 0
        %904 = vmatmul.mubr.bf16.gmra.mrb[0].mxu0 %v869
        %v905 = vpop.f32.mrb[0].mxu0
        %v906 = vadd.f32 %v856, %v905
        %v907 = vpop.f32.mrb[0].mxu0
        %v908 = vpop.f32.mrb[0].mxu0
        %v909 = vadd.f32 %v861, %v908
        %v910 = vpop.f32.mrb[0].mxu0
        %911 = vdwg.mxu0
        %v912 = vmax.f32 %v906, 0.0
        %v913 = vmax.f32 %v909, 0.0
        %v914 = vpack.c.bf16 %v913, %v912
        %v915 = vld [vmem:[%s10] sm:$0xf]
        %v916 = vld [vmem:[%s10 + $0x4] sm:$0xf]
        %v917 = vld [vmem:[%s11] sm:$0xff]
        %v918 = vld [vmem:[%s11 + $0x8] sm:$0xff]
        %920 = vset.pattern.permute.xlu0 0
        %921 = vperm.xlu0 %920, %v917
        %v922 = vpop.permute.xlu0 %921
        %925 = vset.pattern.permute.xlu0 0
        %926 = vperm.xlu0 %925, %v918
        %v927 = vpop.permute.xlu0 %926
        %v931 = vunpack.c.l.b16 %v915
        %v932 = vunpack.c.l.b16 %v916
        %v933 = vpack.c.b16 %v932, %v931
        %v935 = vsel %vm646, %v933, 0
        %937 = vmatprep.subr.bf16.mxu0 0
        %938 = vmatpush1.bf16.msra.mxu0 %v798
        %939 = vmatprep.subr.bf16.mxu0 0
        %940 = vmatpush1.bf16.msra.mxu0 %v799
        %941 = vmatprep.subr.bf16.mxu0 0
        %942 = vmatpush1.bf16.msra.mxu0 0
        %943 = vmatprep.subr.bf16.mxu0 0
        %944 = vmatpush1.bf16.msra.mxu0 0
        %945 = vmatprep.subr.bf16.mxu0 0
        %946 = vmatpush1.bf16.msra.mxu0 0
        %947 = vmatprep.subr.bf16.mxu0 0
        %948 = vmatpush1.bf16.msra.mxu0 0
        %949 = vmatprep.subr.bf16.mxu0 0
        %950 = vmatpush1.bf16.msra.mxu0 0
        %951 = vmatprep.subr.bf16.mxu0 0
        %952 = vmatpush1.bf16.msra.mxu0 0
        %953 = vmatprep.subr.bf16.mxu0 0
        %954 = vmatpush1.bf16.msra.mxu0 0
        %955 = vmatprep.subr.bf16.mxu0 0
        %956 = vmatpush1.bf16.msra.mxu0 0
        %957 = vmatprep.subr.bf16.mxu0 0
        %958 = vmatpush1.bf16.msra.mxu0 0
        %959 = vmatprep.subr.bf16.mxu0 0
        %960 = vmatpush1.bf16.msra.mxu0 0
        %961 = vmatprep.subr.bf16.mxu0 0
        %962 = vmatpush1.bf16.msra.mxu0 0
        %963 = vmatprep.subr.bf16.mxu0 0
        %964 = vmatpush1.bf16.msra.mxu0 0
        %965 = vmatprep.subr.bf16.mxu0 0
        %966 = vmatpush1.bf16.msra.mxu0 0
        %967 = vmatprep.subr.bf16.mxu0 0
        %968 = vmatpush1.bf16.msra.mxu0 0
        %969 = vmatprep.mubr.bf16.mxu0 0
        %970 = vmatmul.mubr.bf16.gmra.mrb[0].mxu0 %v935
        %v971 = vpop.f32.mrb[0].mxu0
        %v972 = vadd.f32 %v922, %v971
        %v973 = vpop.f32.mrb[0].mxu0
        %v974 = vpop.f32.mrb[0].mxu0
        %v975 = vadd.f32 %v927, %v974
        %v976 = vpop.f32.mrb[0].mxu0
        %977 = vdwg.mxu0
        %v978 = vmax.f32 %v972, 0.0
        %v979 = vmax.f32 %v975, 0.0
        %v980 = vpack.c.bf16 %v979, %v978
        %981 = vxpose.xlu0.c.b16.start [1/8] %v914, 128
        %982 = vxpose.xlu0.c.b16.cont [2/8] 0, 128
        %983 = vxpose.xlu0.c.b16.cont [3/8] 0, 128
        %984 = vxpose.xlu0.c.b16.cont [4/8] 0, 128
        %985 = vxpose.xlu0.c.b16.cont [5/8] 0, 128
        %986 = vxpose.xlu0.c.b16.cont [6/8] 0, 128
        %987 = vxpose.xlu0.c.b16.cont [7/8] 0, 128
        %988 = vxpose.xlu0.c.b16.end [8/8] 0, 128
        %v989 = vpop.trf.xlu0
        %v990 = vpop.trf.xlu0
        %v991 = vpop.trf.xlu0
        %v992 = vpop.trf.xlu0
        %v993 = vpop.trf.xlu0
        %v994 = vpop.trf.xlu0
        %v995 = vpop.trf.xlu0
        %v996 = vpop.trf.xlu0
        %v998 = vsel %vm718, %v989, 0
        %1000 = vmatprep.subr.bf16.mxu0 %v770
        %1001 = vmatpush1.bf16.msra.mxu0 %v769
        %1002 = vmatprep.subr.bf16.mxu0 0
        %1003 = vmatpush1.bf16.msra.mxu0 0
        %1004 = vmatprep.subr.bf16.mxu0 0
        %1005 = vmatpush1.bf16.msra.mxu0 0
        %1006 = vmatprep.subr.bf16.mxu0 0
        %1007 = vmatpush1.bf16.msra.mxu0 0
        %1008 = vmatprep.subr.bf16.mxu0 0
        %1009 = vmatpush1.bf16.msra.mxu0 0
        %1010 = vmatprep.subr.bf16.mxu0 0
        %1011 = vmatpush1.bf16.msra.mxu0 0
        %1012 = vmatprep.subr.bf16.mxu0 0
        %1013 = vmatpush1.bf16.msra.mxu0 0
        %1014 = vmatprep.subr.bf16.mxu0 0
        %1015 = vmatpush1.bf16.msra.mxu0 0
        %1016 = vmatprep.subr.bf16.mxu0 0
        %1017 = vmatpush1.bf16.msra.mxu0 0
        %1018 = vmatprep.subr.bf16.mxu0 0
        %1019 = vmatpush1.bf16.msra.mxu0 0
        %1020 = vmatprep.subr.bf16.mxu0 0
        %1021 = vmatpush1.bf16.msra.mxu0 0
        %1022 = vmatprep.subr.bf16.mxu0 0
        %1023 = vmatpush1.bf16.msra.mxu0 0
        %1024 = vmatprep.subr.bf16.mxu0 0
        %1025 = vmatpush1.bf16.msra.mxu0 0
        %1026 = vmatprep.subr.bf16.mxu0 0
        %1027 = vmatpush1.bf16.msra.mxu0 0
        %1028 = vmatprep.subr.bf16.mxu0 0
        %1029 = vmatpush1.bf16.msra.mxu0 0
        %1030 = vmatprep.subr.bf16.mxu0 0
        %1031 = vmatpush1.bf16.msra.mxu0 0
        %1032 = vmatprep.mubr.bf16.mxu0 0
        %1033 = vmatmul.mubr.bf16.gmra.mrb[0].mxu0 %v998
        %v1034 = vpop.f32.mrb[0].mxu0
        %v1035 = vadd.f32 0.0, %v1034
        %v1036 = vpop.f32.mrb[0].mxu0
        %v1037 = vadd.f32 0.0, %v1036
        %v1038 = vpop.f32.mrb[0].mxu0
        %v1039 = vpop.f32.mrb[0].mxu0
        %1040 = vdwg.mxu0
        %v1041 = vmul.f32 %v1035, 0.25
        %v1042 = vmul.f32 %v1037, 0.25
        %v1043 = vrot.slane %v1041, 4
        %v1044 = vmax.f32 %v1041, %v1043
        %v1045 = vrot.slane %v1044, 2
        %v1046 = vmax.f32 %v1044, %v1045
        %v1047 = vrot.slane %v1046, 1
        %v1048 = vmax.f32 %v1046, %v1047
        %v1049 = vrot.slane %v1042, 4
        %v1050 = vmax.f32 %v1042, %v1049
        %v1051 = vrot.slane %v1050, 2
        %v1052 = vmax.f32 %v1050, %v1051
        %v1053 = vrot.slane %v1052, 1
        %v1054 = vmax.f32 %v1052, %v1053
        %v1055 = vsub.f32 %v1041, %v1048
        %v1056 = vsub.f32 %v1042, %v1054
        %v1057 = vmul.f32 %v1055, 1.442695
        %v1058 = vpow.pop %v1057
        %v1059 = vmul.f32 %v1056, 1.442695
        %v1060 = vpow.pop %v1059
        %v1061 = vrot.slane %v1058, 4
        %v1062 = vadd.f32 %v1058, %v1061
        %v1063 = vrot.slane %v1062, 2
        %v1064 = vadd.f32 %v1062, %v1063
        %v1065 = vrot.slane %v1064, 1
        %v1066 = vadd.f32 %v1064, %v1065
        %v1067 = vrot.slane %v1060, 4
        %v1068 = vadd.f32 %v1060, %v1067
        %v1069 = vrot.slane %v1068, 2
        %v1070 = vadd.f32 %v1068, %v1069
        %v1071 = vrot.slane %v1070, 1
        %v1072 = vadd.f32 %v1070, %v1071
        %v1073 = vrcp.pop %v1066
        %v1074 = vrcp.pop %v1072
        %v1075 = vmul.f32 %v1058, %v1073
        %v1076 = vmul.f32 %v1060, %v1074
        %v1077 = vpack.c.bf16 %v1075, %v1075
        %v1078 = vpack.c.bf16 %v1076, %v1076
        %vm1079 = vcmask 64512
        %v1081 = vsel %vm1079, %v980, 0
        %vm1083 = vcmask 1043456
        %v1085 = vsel %vm1083, %v1077, 0
        %v1088 = vsel %vm1083, %v1078, 0
        %1090 = vmatprep.subr.bf16.mxu0 %v1088
        %1091 = vmatpush1.bf16.msra.mxu0 %v1085
        %1092 = vmatprep.subr.bf16.mxu0 0
        %1093 = vmatpush1.bf16.msra.mxu0 0
        %1094 = vmatprep.subr.bf16.mxu0 0
        %1095 = vmatpush1.bf16.msra.mxu0 0
        %1096 = vmatprep.subr.bf16.mxu0 0
        %1097 = vmatpush1.bf16.msra.mxu0 0
        %1098 = vmatprep.subr.bf16.mxu0 0
        %1099 = vmatpush1.bf16.msra.mxu0 0
        %1100 = vmatprep.subr.bf16.mxu0 0
        %1101 = vmatpush1.bf16.msra.mxu0 0
        %1102 = vmatprep.subr.bf16.mxu0 0
        %1103 = vmatpush1.bf16.msra.mxu0 0
        %1104 = vmatprep.subr.bf16.mxu0 0
        %1105 = vmatpush1.bf16.msra.mxu0 0
        %1106 = vmatprep.subr.bf16.mxu0 0
        %1107 = vmatpush1.bf16.msra.mxu0 0
        %1108 = vmatprep.subr.bf16.mxu0 0
        %1109 = vmatpush1.bf16.msra.mxu0 0
        %1110 = vmatprep.subr.bf16.mxu0 0
        %1111 = vmatpush1.bf16.msra.mxu0 0
        %1112 = vmatprep.subr.bf16.mxu0 0
        %1113 = vmatpush1.bf16.msra.mxu0 0
        %1114 = vmatprep.subr.bf16.mxu0 0
        %1115 = vmatpush1.bf16.msra.mxu0 0
        %1116 = vmatprep.subr.bf16.mxu0 0
        %1117 = vmatpush1.bf16.msra.mxu0 0
        %1118 = vmatprep.subr.bf16.mxu0 0
        %1119 = vmatpush1.bf16.msra.mxu0 0
        %1120 = vmatprep.subr.bf16.mxu0 0
        %1121 = vmatpush1.bf16.msra.mxu0 0
        %1122 = vmatprep.mubr.bf16.mxu0 0
        %1123 = vmatmul.mubr.bf16.gmra.mrb[0].mxu0 %v1081
        %v1124 = vpop.f32.mrb[0].mxu0
        %v1125 = vadd.f32 0.0, %v1124
        %v1126 = vpop.f32.mrb[0].mxu0
        %v1127 = vadd.f32 0.0, %v1126
        %v1128 = vpop.f32.mrb[0].mxu0
        %v1129 = vadd.f32 0.0, %v1128
        %v1130 = vpop.f32.mrb[0].mxu0
        %v1131 = vadd.f32 0.0, %v1130
        %1132 = vdwg.mxu0
        %v1133 = vpack.c.bf16 %v1129, %v1125
        %v1134 = vpack.c.bf16 %v1131, %v1127
        %v1135 = vld [vmem:[%s12] sm:$0xf]
        %v1136 = vld [vmem:[%s12 + $0x4] sm:$0xf]
        %v1137 = vld [vmem:[%s12 + $0x8] sm:$0xf]
        %v1138 = vld [vmem:[%s12 + $0xc] sm:$0xf]
        %v1139 = vld [vmem:[%s13] sm:$0xff]
        %v1140 = vld [vmem:[%s13 + $0x8] sm:$0xff]
        %v1141 = vld [vmem:[%s13 + $0x10] sm:$0xff]
        %v1142 = vld [vmem:[%s13 + $0x18] sm:$0xff]
        %1144 = vset.pattern.permute.xlu0 0
        %1145 = vperm.xlu0 %1144, %v1139
        %v1146 = vpop.permute.xlu0 %1145
        %1149 = vset.pattern.permute.xlu0 0
        %1150 = vperm.xlu0 %1149, %v1140
        %v1151 = vpop.permute.xlu0 %1150
        %1154 = vset.pattern.permute.xlu0 0
        %1155 = vperm.xlu0 %1154, %v1141
        %v1156 = vpop.permute.xlu0 %1155
        %1159 = vset.pattern.permute.xlu0 0
        %1160 = vperm.xlu0 %1159, %v1142
        %v1161 = vpop.permute.xlu0 %1160
        %v1167 = vunpack.c.l.b16 %v1135
        %v1168 = vunpack.c.l.b16 %v1136
        %v1169 = vunpack.c.l.b16 %v1137
        %v1170 = vunpack.c.l.b16 %v1138
        %v1171 = vpack.c.b16 %v1168, %v1167
        %v1172 = vpack.c.b16 %v1170, %v1169
        %v1174 = vsel %vm718, %v1171, 0
        %v1177 = vsel %vm718, %v1172, 0
        %1179 = vmatprep.subr.bf16.mxu0 %v1134
        %1180 = vmatpush1.bf16.msra.mxu0 %v1133
        %1181 = vmatprep.subr.bf16.mxu0 0
        %1182 = vmatpush1.bf16.msra.mxu0 0
        %1183 = vmatprep.subr.bf16.mxu0 0
        %1184 = vmatpush1.bf16.msra.mxu0 0
        %1185 = vmatprep.subr.bf16.mxu0 0
        %1186 = vmatpush1.bf16.msra.mxu0 0
        %1187 = vmatprep.subr.bf16.mxu0 0
        %1188 = vmatpush1.bf16.msra.mxu0 0
        %1189 = vmatprep.subr.bf16.mxu0 0
        %1190 = vmatpush1.bf16.msra.mxu0 0
        %1191 = vmatprep.subr.bf16.mxu0 0
        %1192 = vmatpush1.bf16.msra.mxu0 0
        %1193 = vmatprep.subr.bf16.mxu0 0
        %1194 = vmatpush1.bf16.msra.mxu0 0
        %1195 = vmatprep.subr.bf16.mxu0 0
        %1196 = vmatpush1.bf16.msra.mxu0 0
        %1197 = vmatprep.subr.bf16.mxu0 0
        %1198 = vmatpush1.bf16.msra.mxu0 0
        %1199 = vmatprep.subr.bf16.mxu0 0
        %1200 = vmatpush1.bf16.msra.mxu0 0
        %1201 = vmatprep.subr.bf16.mxu0 0
        %1202 = vmatpush1.bf16.msra.mxu0 0
        %1203 = vmatprep.subr.bf16.mxu0 0
        %1204 = vmatpush1.bf16.msra.mxu0 0
        %1205 = vmatprep.subr.bf16.mxu0 0
        %1206 = vmatpush1.bf16.msra.mxu0 0
        %1207 = vmatprep.subr.bf16.mxu0 0
        %1208 = vmatpush1.bf16.msra.mxu0 0
        %1209 = vmatprep.subr.bf16.mxu0 0
        %1210 = vmatpush1.bf16.msra.mxu0 0
        %1211 = vmatprep.mubr.bf16.mxu0 0
        %1212 = vmatmul.mubr.bf16.gmra.mrb[0].mxu0 %v1174
        %v1213 = vpop.f32.mrb[0].mxu0
        %v1214 = vadd.f32 %v1146, %v1213
        %v1215 = vpop.f32.mrb[0].mxu0
        %v1216 = vadd.f32 %v1146, %v1215
        %v1217 = vpop.f32.mrb[0].mxu0
        %v1218 = vadd.f32 %v1151, %v1217
        %v1219 = vpop.f32.mrb[0].mxu0
        %v1220 = vadd.f32 %v1151, %v1219
        %1221 = vmatprep.mubr.bf16.mxu0 0
        %1222 = vmatmul.mubr.bf16.gmra.mrb[0].mxu0 %v1177
        %v1223 = vpop.f32.mrb[0].mxu0
        %v1224 = vadd.f32 %v1156, %v1223
        %v1225 = vpop.f32.mrb[0].mxu0
        %v1226 = vadd.f32 %v1156, %v1225
        %v1227 = vpop.f32.mrb[0].mxu0
        %v1228 = vadd.f32 %v1161, %v1227
        %v1229 = vpop.f32.mrb[0].mxu0
        %v1230 = vadd.f32 %v1161, %v1229
        %1231 = vdwg.mxu0
        %v1232 = vmax.f32 %v1214, 0.0
        %v1233 = vmax.f32 %v1216, 0.0
        %v1234 = vmax.f32 %v1218, 0.0
        %v1235 = vmax.f32 %v1220, 0.0
        %v1236 = vmax.f32 %v1224, 0.0
        %v1237 = vmax.f32 %v1226, 0.0
        %v1238 = vmax.f32 %v1228, 0.0
        %v1239 = vmax.f32 %v1230, 0.0
        %v1240 = vpack.c.bf16 %v1234, %v1232
        %v1241 = vpack.c.bf16 %v1235, %v1233
        %v1242 = vpack.c.bf16 %v1238, %v1236
        %v1243 = vpack.c.bf16 %v1239, %v1237
        %v1244 = vld [vmem:[%s14] sm:$0xf]
        %v1245 = vld [vmem:[%s14 + $0x4] sm:$0xf]
        %v1246 = vld [vmem:[%s14 + $0x8] sm:$0xf]
        %v1247 = vld [vmem:[%s14 + $0xc] sm:$0xf]
        %v1248 = vld [vmem:[%s15] sm:$0xf]
        %v1249 = vld [vmem:[%s15 + $0x4] sm:$0xf]
        %v1250 = vld [vmem:[%s15 + $0x8] sm:$0xf]
        %v1251 = vld [vmem:[%s15 + $0xc] sm:$0xf]
        %v1256 = vunpack.c.l.b16 %v1248
        %v1257 = vunpack.c.l.b16 %v1249
        %v1258 = vunpack.c.l.b16 %v1250
        %v1259 = vunpack.c.l.b16 %v1251
        %v1260 = vpack.c.b16 %v1257, %v1256
        %v1261 = vpack.c.b16 %v1259, %v1258
        %v1263 = vsel %vm646, %v1260, 0
        %v1266 = vsel %vm646, %v1261, 0
        %1268 = vmatprep.subr.bf16.mxu0 %v639
        %1269 = vmatpush1.bf16.msra.mxu0 %v638
        %1270 = vmatprep.subr.bf16.mxu0 %v641
        %1271 = vmatpush1.bf16.msra.mxu0 %v640
        %1272 = vmatprep.subr.bf16.mxu0 0
        %1273 = vmatpush1.bf16.msra.mxu0 0
        %1274 = vmatprep.subr.bf16.mxu0 0
        %1275 = vmatpush1.bf16.msra.mxu0 0
        %1276 = vmatprep.subr.bf16.mxu0 0
        %1277 = vmatpush1.bf16.msra.mxu0 0
        %1278 = vmatprep.subr.bf16.mxu0 0
        %1279 = vmatpush1.bf16.msra.mxu0 0
        %1280 = vmatprep.subr.bf16.mxu0 0
        %1281 = vmatpush1.bf16.msra.mxu0 0
        %1282 = vmatprep.subr.bf16.mxu0 0
        %1283 = vmatpush1.bf16.msra.mxu0 0
        %1284 = vmatprep.subr.bf16.mxu0 0
        %1285 = vmatpush1.bf16.msra.mxu0 0
        %1286 = vmatprep.subr.bf16.mxu0 0
        %1287 = vmatpush1.bf16.msra.mxu0 0
        %1288 = vmatprep.subr.bf16.mxu0 0
        %1289 = vmatpush1.bf16.msra.mxu0 0
        %1290 = vmatprep.subr.bf16.mxu0 0
        %1291 = vmatpush1.bf16.msra.mxu0 0
        %1292 = vmatprep.subr.bf16.mxu0 0
        %1293 = vmatpush1.bf16.msra.mxu0 0
        %1294 = vmatprep.subr.bf16.mxu0 0
        %1295 = vmatpush1.bf16.msra.mxu0 0
        %1296 = vmatprep.subr.bf16.mxu0 0
        %1297 = vmatpush1.bf16.msra.mxu0 0
        %1298 = vmatprep.subr.bf16.mxu0 0
        %1299 = vmatpush1.bf16.msra.mxu0 0
        %1300 = vmatprep.mubr.bf16.mxu0 0
        %1301 = vmatmul.mubr.bf16.gmra.mrb[0].mxu0 %v1263
        %v1302 = vpop.f32.mrb[0].mxu0
        %v1303 = vadd.f32 0.0, %v1302
        %v1304 = vpop.f32.mrb[0].mxu0
        %v1305 = vadd.f32 0.0, %v1304
        %v1306 = vpop.f32.mrb[0].mxu0
        %v1307 = vadd.f32 0.0, %v1306
        %v1308 = vpop.f32.mrb[0].mxu0
        %v1309 = vadd.f32 0.0, %v1308
        %1310 = vmatprep.mubr.bf16.mxu0 0
        %1311 = vmatmul.mubr.bf16.gmra.mrb[0].mxu0 %v1266
        %v1312 = vpop.f32.mrb[0].mxu0
        %v1313 = vadd.f32 0.0, %v1312
        %v1314 = vpop.f32.mrb[0].mxu0
        %v1315 = vadd.f32 0.0, %v1314
        %v1316 = vpop.f32.mrb[0].mxu0
        %v1317 = vadd.f32 0.0, %v1316
        %v1318 = vpop.f32.mrb[0].mxu0
        %v1319 = vadd.f32 0.0, %v1318
        %1320 = vdwg.mxu0
        %v1325 = vunpack.c.l.b16 %v1244
        %v1326 = vunpack.c.l.b16 %v1245
        %v1327 = vunpack.c.l.b16 %v1246
        %v1328 = vunpack.c.l.b16 %v1247
        %v1329 = vpack.c.b16 %v1326, %v1325
        %v1330 = vpack.c.b16 %v1328, %v1327
        %v1332 = vsel %vm646, %v1329, 0
        %v1335 = vsel %vm646, %v1330, 0
        %1337 = vmatprep.subr.bf16.mxu0 %v1241
        %1338 = vmatpush1.bf16.msra.mxu0 %v1240
        %1339 = vmatprep.subr.bf16.mxu0 %v1243
        %1340 = vmatpush1.bf16.msra.mxu0 %v1242
        %1341 = vmatprep.subr.bf16.mxu0 0
        %1342 = vmatpush1.bf16.msra.mxu0 0
        %1343 = vmatprep.subr.bf16.mxu0 0
        %1344 = vmatpush1.bf16.msra.mxu0 0
        %1345 = vmatprep.subr.bf16.mxu0 0
        %1346 = vmatpush1.bf16.msra.mxu0 0
        %1347 = vmatprep.subr.bf16.mxu0 0
        %1348 = vmatpush1.bf16.msra.mxu0 0
        %1349 = vmatprep.subr.bf16.mxu0 0
        %1350 = vmatpush1.bf16.msra.mxu0 0
        %1351 = vmatprep.subr.bf16.mxu0 0
        %1352 = vmatpush1.bf16.msra.mxu0 0
        %1353 = vmatprep.subr.bf16.mxu0 0
        %1354 = vmatpush1.bf16.msra.mxu0 0
        %1355 = vmatprep.subr.bf16.mxu0 0
        %1356 = vmatpush1.bf16.msra.mxu0 0
        %1357 = vmatprep.subr.bf16.mxu0 0
        %1358 = vmatpush1.bf16.msra.mxu0 0
        %1359 = vmatprep.subr.bf16.mxu0 0
        %1360 = vmatpush1.bf16.msra.mxu0 0
        %1361 = vmatprep.subr.bf16.mxu0 0
        %1362 = vmatpush1.bf16.msra.mxu0 0
        %1363 = vmatprep.subr.bf16.mxu0 0
        %1364 = vmatpush1.bf16.msra.mxu0 0
        %1365 = vmatprep.subr.bf16.mxu0 0
        %1366 = vmatpush1.bf16.msra.mxu0 0
        %1367 = vmatprep.subr.bf16.mxu0 0
        %1368 = vmatpush1.bf16.msra.mxu0 0
        %1369 = vmatprep.mubr.bf16.mxu0 0
        %1370 = vmatmul.mubr.bf16.gmra.mrb[0].mxu0 %v1332
        %v1371 = vpop.f32.mrb[0].mxu0
        %v1372 = vadd.f32 %v1303, %v1371
        %v1373 = vpop.f32.mrb[0].mxu0
        %v1374 = vadd.f32 %v1305, %v1373
        %v1375 = vpop.f32.mrb[0].mxu0
        %v1376 = vadd.f32 %v1307, %v1375
        %v1377 = vpop.f32.mrb[0].mxu0
        %v1378 = vadd.f32 %v1309, %v1377
        %1379 = vmatprep.mubr.bf16.mxu0 0
        %1380 = vmatmul.mubr.bf16.gmra.mrb[0].mxu0 %v1335
        %v1381 = vpop.f32.mrb[0].mxu0
        %v1382 = vadd.f32 %v1313, %v1381
        %v1383 = vpop.f32.mrb[0].mxu0
        %v1384 = vadd.f32 %v1315, %v1383
        %v1385 = vpop.f32.mrb[0].mxu0
        %v1386 = vadd.f32 %v1317, %v1385
        %v1387 = vpop.f32.mrb[0].mxu0
        %v1388 = vadd.f32 %v1319, %v1387
        %1389 = vdwg.mxu0
        %v1390 = vld [vmem:[%s16] sm:$0xff]
        %v1391 = vld [vmem:[%s16 + $0x8] sm:$0xff]
        %v1392 = vld [vmem:[%s16 + $0x10] sm:$0xff]
        %v1393 = vld [vmem:[%s16 + $0x18] sm:$0xff]
        %1395 = vset.pattern.permute.xlu0 0
        %1396 = vperm.xlu0 %1395, %v1390
        %v1397 = vpop.permute.xlu0 %1396
        %1400 = vset.pattern.permute.xlu0 0
        %1401 = vperm.xlu0 %1400, %v1391
        %v1402 = vpop.permute.xlu0 %1401
        %1405 = vset.pattern.permute.xlu0 0
        %1406 = vperm.xlu0 %1405, %v1392
        %v1407 = vpop.permute.xlu0 %1406
        %1410 = vset.pattern.permute.xlu0 0
        %1411 = vperm.xlu0 %1410, %v1393
        %v1412 = vpop.permute.xlu0 %1411
        %v1414 = vadd.f32 %v1372, %v1397
        %v1415 = vadd.f32 %v1374, %v1397
        %v1416 = vadd.f32 %v1376, %v1402
        %v1417 = vadd.f32 %v1378, %v1402
        %v1418 = vadd.f32 %v1382, %v1407
        %v1419 = vadd.f32 %v1384, %v1407
        %v1420 = vadd.f32 %v1386, %v1412
        %v1421 = vadd.f32 %v1388, %v1412
        %v1422 = vmax.f32 %v1414, 0.0
        %v1423 = vmax.f32 %v1415, 0.0
        %v1424 = vmax.f32 %v1416, 0.0
        %v1425 = vmax.f32 %v1417, 0.0
        %v1426 = vmax.f32 %v1418, 0.0
        %v1427 = vmax.f32 %v1419, 0.0
        %v1428 = vmax.f32 %v1420, 0.0
        %v1429 = vmax.f32 %v1421, 0.0
        %1430 = vst [vmem:[%s581] sm:$0xff] %v1422
        %1431 = vst [vmem:[%s581 + $0x8] sm:$0xff] %v1423
        %1432 = vst [vmem:[%s581 + $0x10] sm:$0xff] %v1424
        %1433 = vst [vmem:[%s581 + $0x18] sm:$0xff] %v1425
        %1434 = vst [vmem:[%s581 + $0x20] sm:$0xff] %v1426
        %1435 = vst [vmem:[%s581 + $0x28] sm:$0xff] %v1427
        %1436 = vst [vmem:[%s581 + $0x30] sm:$0xff] %v1428
        %1437 = vst [vmem:[%s581 + $0x38] sm:$0xff] %v1429
        %s1438 = sand.u32 %s422, 1
        %s1439 = scalar_lea.sflag [#allocation3], %s1438
        %s1440 = sand.u32 %s422, 1
        %s1441 = smul.addr %s1440, 64
        %s1442 = scalar_lea.vmem [#allocation2], %s1441
        // Predicated region
        $region89: #{tpu_custom_call.1} parent=87 // pred_check
          %p1443 = pneg %p432
        $region90: #{tpu_custom_call.1} parent=87 // pred_check_branch
          %1445 = sbr.rel (%p1443) target = $region92
        $region91: #{tpu_custom_call.1} parent=87 // pred_region
          %s1446 = smul.u32 2, %s36
          %s1448 = ssub.s32 1024, 1024
          %1449 = vsyncadd %s1439, %s1448
          %s1450 = smul.addr %s35, 8
          %s1451 = sadd.s32 %s1446, %s1450
          %s1452 = smul.addr %s1451, 128
          %s1453 = scalar_lea.hbm %s17, %s1452
          %s1454 = sshll.u32 %s1442, 4
          %s1455 = int_to_ptr.vmem [resolvable:$true] %s1454
          %1460 = dma.vmem_to_hbm [thread:$0]  %s1455, 1024, %s1453, %s1439, 256, 256, 16
        $region92: #{tpu_custom_call.1} parent=87 // pred_fallthru
          _
      $region88: #{tpu_custom_call.1} parent=5 // pred_fallthru
        _
      %p1461 = scmp.le.s32.totalorder 2, %s26
      // Predicated region
      $region93: #{tpu_custom_call.1} parent=5 // pred_check
        %p1462 = pneg %p1461
      $region94: #{tpu_custom_call.1} parent=5 // pred_check_branch
        %1464 = sbr.rel (%p1462) target = $region96
      $region95: #{tpu_custom_call.1} parent=5 // pred_region
        %s1465 = ssub.s32 %s26, 2
        // Predicated region
        $region97: #{tpu_custom_call.1} parent=95 // pred_check
          %p1466 = pneg %p438
        $region98: #{tpu_custom_call.1} parent=95 // pred_check_branch
          %1468 = sbr.rel (%p1466) target = $region100
        $region99: #{tpu_custom_call.1} parent=95 // pred_region
          %s1469 = sand.u32 %s423, 1
          %s1470 = scalar_lea.sflag [#allocation3], %s1469
          %s1471 = sand.u32 %s423, 1
          %s1472 = smul.addr %s1471, 64
          %s1473 = scalar_lea.vmem [#allocation2], %s1472
          %1474 = dma.done %s1470, 1024
        $region100: #{tpu_custom_call.1} parent=95 // pred_fallthru
          _
      $region96: #{tpu_custom_call.1} parent=5 // pred_fallthru
        _
    $region6: #{tpu_custom_call.1} parent=1 // loop_footer
      %s30 = sadd.s32 1, %s26
    $region7: #{tpu_custom_call.1} parent=1 // loop_footer_branch
      %25 = sbr.rel target = $region3
    $region8: #{tpu_custom_call.1} parent=1 // loop_exit
      _
    %1475 = vsyncpa [#allocation3], 1
    %s1476 = scalar_lea.sflag [#allocation3], 1
    %1477 = vsyncpa %s1476, 1

// kernel: tpu_custom_call.1
$region0: #{tpu_custom_call.1}
  #allocation0 [shape = 'u32[]', space=smem, size = 0x4, offset = 0x4, fixed_abs, tag = 'smem constant byte address 0x4 - core index']
  #allocation1 [shape = 'u32[144,128]{1,0:T(1,128)}', space=vmem, size = 0x12000, scoped, tag = 'internal scratch']
  %s0 = inlined_call_operand.vmem [shape: bf16[2,32,256], index: 0, kind: input, shape index: {}]
  %s1 = inlined_call_operand.vmem [shape: bf16[2,32,8], index: 1, kind: input, shape index: {}]
  %s2 = inlined_call_operand.vmem [shape: bf16[16,32], index: 2, kind: input, shape index: {}]
  %s3 = inlined_call_operand.vmem [shape: f32[16,1], index: 3, kind: input, shape index: {}]
  %s4 = inlined_call_operand.vmem [shape: bf16[16,16], index: 4, kind: input, shape index: {}]
  %s5 = inlined_call_operand.vmem [shape: f32[16,1], index: 5, kind: input, shape index: {}]
  %s6 = inlined_call_operand.vmem [shape: bf16[16,32], index: 6, kind: input, shape index: {}]
  %s7 = inlined_call_operand.vmem [shape: f32[16,1], index: 7, kind: input, shape index: {}]
  %s8 = inlined_call_operand.vmem [shape: bf16[16,16], index: 8, kind: input, shape index: {}]
  %s9 = inlined_call_operand.vmem [shape: f32[16,1], index: 9, kind: input, shape index: {}]
  %s10 = inlined_call_operand.vmem [shape: bf16[16,32], index: 10, kind: input, shape index: {}]
  %s11 = inlined_call_operand.vmem [shape: f32[16,1], index: 11, kind: input, shape index: {}]
  %s12 = inlined_call_operand.vmem [shape: bf16[32,16], index: 12, kind: input, shape index: {}]
  %s13 = inlined_call_operand.vmem [shape: f32[32,1], index: 13, kind: input, shape index: {}]
  %s14 = inlined_call_operand.vmem [shape: bf16[32,32], index: 14, kind: input, shape index: {}]
  %s15 = inlined_call_operand.vmem [shape: bf16[32,32], index: 15, kind: input, shape index: {}]
  %s16 = inlined_call_operand.vmem [shape: f32[32,1], index: 16, kind: input, shape index: {}]
  %s17 = inlined_call_operand.hbm [shape: f32[2,32,256], index: 17, kind: output, shape index: {}]
  %s18 = sld [smem:[#allocation0]]
  $region101: #{tpu_custom_call.1} parent=0
    _
  %s20 = ssub.s32 1, %s18
  %s21 = scalar_select 0, %s20, %s18
  $region1: #{tpu_custom_call.1} parent=0
    #allocation2 [shape = 'u8[65536]{0}', space=vmem, size = 0x10000, scoped, tag = 'output window, operand 0']
    #allocation3 [shape = 's32[2]{0}', space=sflag, size = 0x8, scoped, tag = 'scoped memory for tpu_custom_call.1']
    %22 = vsyncpa [#allocation3], 0
    %s23 = scalar_lea.sflag [#allocation3], 1
    %24 = vsyncpa %s23, 0
    loop: start=0, step=1, limit=4
    $region2: #{tpu_custom_call.1} parent=1 // loop_pre_header
      _
    $region3: #{tpu_custom_call.1} parent=1 // loop_header
      %s26 = sphi 0, %s30
      %p27 = scmp.ge.s32.totalorder %s26, 4
      %s33 = sphi 0, %s45
      %s34 = sphi 0, %s41
      %s35 = sphi 0, %s33
      %s36 = sphi 0, %s34
      %s37 = sphi 0, %s35
      %s38 = sphi 0, %s36
      %s50 = sphi 0, %s52
      %s53 = sphi 0, %s50
      %s54 = sphi 0, %s53
      %s70 = sphi 0, %s54
      %s76 = sphi 0, %s78
      %s79 = sphi 0, %s76
      %s80 = sphi 0, %s79
      %s96 = sphi 0, %s80
      %s100 = sphi 0, %s100
      %s102 = sphi 0, %s100
      %s103 = sphi 0, %s102
      %s117 = sphi 0, %s103
      %s121 = sphi 0, %s121
      %s123 = sphi 0, %s121
      %s124 = sphi 0, %s123
      %s138 = sphi 0, %s124
      %s142 = sphi 0, %s142
      %s144 = sphi 0, %s142
      %s145 = sphi 0, %s144
      %s159 = sphi 0, %s145
      %s163 = sphi 0, %s163
      %s165 = sphi 0, %s163
      %s166 = sphi 0, %s165
      %s180 = sphi 0, %s166
      %s184 = sphi 0, %s184
      %s186 = sphi 0, %s184
      %s187 = sphi 0, %s186
      %s201 = sphi 0, %s187
      %s205 = sphi 0, %s205
      %s207 = sphi 0, %s205
      %s208 = sphi 0, %s207
      %s222 = sphi 0, %s208
      %s226 = sphi 0, %s226
      %s228 = sphi 0, %s226
      %s229 = sphi 0, %s228
      %s243 = sphi 0, %s229
      %s247 = sphi 0, %s247
      %s249 = sphi 0, %s247
      %s250 = sphi 0, %s249
      %s264 = sphi 0, %s250
      %s268 = sphi 0, %s268
      %s270 = sphi 0, %s268
      %s271 = sphi 0, %s270
      %s285 = sphi 0, %s271
      %s289 = sphi 0, %s289
      %s291 = sphi 0, %s289
      %s292 = sphi 0, %s291
      %s306 = sphi 0, %s292
      %s310 = sphi 0, %s310
      %s312 = sphi 0, %s310
      %s313 = sphi 0, %s312
      %s327 = sphi 0, %s313
      %s331 = sphi 0, %s331
      %s333 = sphi 0, %s331
      %s334 = sphi 0, %s333
      %s348 = sphi 0, %s334
      %s352 = sphi 0, %s352
      %s354 = sphi 0, %s352
      %s355 = sphi 0, %s354
      %s369 = sphi 0, %s355
      %s373 = sphi 0, %s373
      %s375 = sphi 0, %s373
      %s376 = sphi 0, %s375
      %s390 = sphi 0, %s376
      %s394 = sphi 0, %s394
      %s396 = sphi 0, %s394
      %s397 = sphi 0, %s396
      %s411 = sphi 0, %s397
      %s419 = sphi 0, %s421
      %s422 = sphi 0, %s419
      %s423 = sphi 0, %s422
      %s439 = sphi 0, %s423
    $region4: #{tpu_custom_call.1} parent=1 // loop_header_branch
      %29 = sbr.rel (%p27) target = $region8
    $region5: #{tpu_custom_call.1} parent=1 // loop_body
      %s31 = ssub.s32 %s26, 1
      %s32 = ssub.s32 %s26, 2
      %s39 = sadd.s32 1, %s34
      %p40 = scmp.ge.s32.totalorder %s39, 1
      %s41 = scalar_select %p40, 0, %s39
      %s42 = sadd.s32 1, %s33
      %s43 = scalar_select %p40, %s42, %s33
      %p44 = scmp.ge.s32.totalorder %s43, 2
      %s45 = scalar_select %p44, 0, %s43
      %s46 = ssub.s32 %s33, %s45
      %s47 = ssub.s32 %s34, %s41
      %s48 = sor.u32 %s46, %s47
      %p49 = scmp.eq.s32.totalorder %s48, 0
      %s51 = sadd.s32 %s50, 1
      %s52 = scalar_select %p49, %s50, %s51
      %p55 = pneg %p49
      %p56 = scmp.eq.s32.totalorder %s26, 1
      %p57 = por %p55, %p56
      %p58 = scmp.ne.s32.totalorder %s50, %s53
      %p59 = scmp.eq.s32.totalorder %s26, 0
      %p60 = por %p58, %p59
      %p61 = scmp.ne.s32.totalorder %s50, %s53
      %p62 = scmp.eq.s32.totalorder %s31, 1
      %p63 = por %p61, %p62
      %p64 = scmp.ne.s32.totalorder %s53, %s54
      %p65 = scmp.eq.s32.totalorder %s31, 0
      %p66 = por %p64, %p65
      %p67 = scmp.ne.s32.totalorder %s53, %s54
      %p68 = scmp.eq.s32.totalorder %s32, 1
      %p69 = por %p67, %p68
      %p71 = scmp.ne.s32.totalorder %s54, %s70
      %p72 = scmp.eq.s32.totalorder %s32, 0
      %p73 = por %p71, %p72
      %s74 = ssub.s32 %s33, %s45
      %p75 = scmp.eq.s32.totalorder %s74, 0
      %s77 = sadd.s32 %s76, 1
      %s78 = scalar_select %p75, %s76, %s77
      %p81 = pneg %p75
      %p82 = scmp.eq.s32.totalorder %s26, 1
      %p83 = por %p81, %p82
      %p84 = scmp.ne.s32.totalorder %s76, %s79
      %p85 = scmp.eq.s32.totalorder %s26, 0
      %p86 = por %p84, %p85
      %p87 = scmp.ne.s32.totalorder %s76, %s79
      %p88 = scmp.eq.s32.totalorder %s31, 1
      %p89 = por %p87, %p88
      %p90 = scmp.ne.s32.totalorder %s79, %s80
      %p91 = scmp.eq.s32.totalorder %s31, 0
      %p92 = por %p90, %p91
      %p93 = scmp.ne.s32.totalorder %s79, %s80
      %p94 = scmp.eq.s32.totalorder %s32, 1
      %p95 = por %p93, %p94
      %p97 = scmp.ne.s32.totalorder %s80, %s96
      %p98 = scmp.eq.s32.totalorder %s32, 0
      %p99 = por %p97, %p98
      %s101 = sadd.s32 %s100, 1
      %p104 = scmp.eq.s32.totalorder %s26, 1
      %p105 = scmp.ne.s32.totalorder %s100, %s102
      %p106 = scmp.eq.s32.totalorder %s26, 0
      %p107 = por %p105, %p106
      %p108 = scmp.ne.s32.totalorder %s100, %s102
      %p109 = scmp.eq.s32.totalorder %s31, 1
      %p110 = por %p108, %p109
      %p111 = scmp.ne.s32.totalorder %s102, %s103
      %p112 = scmp.eq.s32.totalorder %s31, 0
      %p113 = por %p111, %p112
      %p114 = scmp.ne.s32.totalorder %s102, %s103
      %p115 = scmp.eq.s32.totalorder %s32, 1
      %p116 = por %p114, %p115
      %p118 = scmp.ne.s32.totalorder %s103, %s117
      %p119 = scmp.eq.s32.totalorder %s32, 0
      %p120 = por %p118, %p119
      %s122 = sadd.s32 %s121, 1
      %p125 = scmp.eq.s32.totalorder %s26, 1
      %p126 = scmp.ne.s32.totalorder %s121, %s123
      %p127 = scmp.eq.s32.totalorder %s26, 0
      %p128 = por %p126, %p127
      %p129 = scmp.ne.s32.totalorder %s121, %s123
      %p130 = scmp.eq.s32.totalorder %s31, 1
      %p131 = por %p129, %p130
      %p132 = scmp.ne.s32.totalorder %s123, %s124
      %p133 = scmp.eq.s32.totalorder %s31, 0
      %p134 = por %p132, %p133
      %p135 = scmp.ne.s32.totalorder %s123, %s124
      %p136 = scmp.eq.s32.totalorder %s32, 1
      %p137 = por %p135, %p136
      %p139 = scmp.ne.s32.totalorder %s124, %s138
      %p140 = scmp.eq.s32.totalorder %s32, 0
      %p141 = por %p139, %p140
      %s143 = sadd.s32 %s142, 1
      %p146 = scmp.eq.s32.totalorder %s26, 1
      %p147 = scmp.ne.s32.totalorder %s142, %s144
      %p148 = scmp.eq.s32.totalorder %s26, 0
      %p149 = por %p147, %p148
      %p150 = scmp.ne.s32.totalorder %s142, %s144
      %p151 = scmp.eq.s32.totalorder %s31, 1
      %p152 = por %p150, %p151
      %p153 = scmp.ne.s32.totalorder %s144, %s145
      %p154 = scmp.eq.s32.totalorder %s31, 0
      %p155 = por %p153, %p154
      %p156 = scmp.ne.s32.totalorder %s144, %s145
      %p157 = scmp.eq.s32.totalorder %s32, 1
      %p158 = por %p156, %p157
      %p160 = scmp.ne.s32.totalorder %s145, %s159
      %p161 = scmp.eq.s32.totalorder %s32, 0
      %p162 = por %p160, %p161
      %s164 = sadd.s32 %s163, 1
      %p167 = scmp.eq.s32.totalorder %s26, 1
      %p168 = scmp.ne.s32.totalorder %s163, %s165
      %p169 = scmp.eq.s32.totalorder %s26, 0
      %p170 = por %p168, %p169
      %p171 = scmp.ne.s32.totalorder %s163, %s165
      %p172 = scmp.eq.s32.totalorder %s31, 1
      %p173 = por %p171, %p172
      %p174 = scmp.ne.s32.totalorder %s165, %s166
      %p175 = scmp.eq.s32.totalorder %s31, 0
      %p176 = por %p174, %p175
      %p177 = scmp.ne.s32.totalorder %s165, %s166
      %p178 = scmp.eq.s32.totalorder %s32, 1
      %p179 = por %p177, %p178
      %p181 = scmp.ne.s32.totalorder %s166, %s180
      %p182 = scmp.eq.s32.totalorder %s32, 0
      %p183 = por %p181, %p182
      %s185 = sadd.s32 %s184, 1
      %p188 = scmp.eq.s32.totalorder %s26, 1
      %p189 = scmp.ne.s32.totalorder %s184, %s186
      %p190 = scmp.eq.s32.totalorder %s26, 0
      %p191 = por %p189, %p190
      %p192 = scmp.ne.s32.totalorder %s184, %s186
      %p193 = scmp.eq.s32.totalorder %s31, 1
      %p194 = por %p192, %p193
      %p195 = scmp.ne.s32.totalorder %s186, %s187
      %p196 = scmp.eq.s32.totalorder %s31, 0
      %p197 = por %p195, %p196
      %p198 = scmp.ne.s32.totalorder %s186, %s187
      %p199 = scmp.eq.s32.totalorder %s32, 1
      %p200 = por %p198, %p199
      %p202 = scmp.ne.s32.totalorder %s187, %s201
      %p203 = scmp.eq.s32.totalorder %s32, 0
      %p204 = por %p202, %p203
      %s206 = sadd.s32 %s205, 1
      %p209 = scmp.eq.s32.totalorder %s26, 1
      %p210 = scmp.ne.s32.totalorder %s205, %s207
      %p211 = scmp.eq.s32.totalorder %s26, 0
      %p212 = por %p210, %p211
      %p213 = scmp.ne.s32.totalorder %s205, %s207
      %p214 = scmp.eq.s32.totalorder %s31, 1
      %p215 = por %p213, %p214
      %p216 = scmp.ne.s32.totalorder %s207, %s208
      %p217 = scmp.eq.s32.totalorder %s31, 0
      %p218 = por %p216, %p217
      %p219 = scmp.ne.s32.totalorder %s207, %s208
      %p220 = scmp.eq.s32.totalorder %s32, 1
      %p221 = por %p219, %p220
      %p223 = scmp.ne.s32.totalorder %s208, %s222
      %p224 = scmp.eq.s32.totalorder %s32, 0
      %p225 = por %p223, %p224
      %s227 = sadd.s32 %s226, 1
      %p230 = scmp.eq.s32.totalorder %s26, 1
      %p231 = scmp.ne.s32.totalorder %s226, %s228
      %p232 = scmp.eq.s32.totalorder %s26, 0
      %p233 = por %p231, %p232
      %p234 = scmp.ne.s32.totalorder %s226, %s228
      %p235 = scmp.eq.s32.totalorder %s31, 1
      %p236 = por %p234, %p235
      %p237 = scmp.ne.s32.totalorder %s228, %s229
      %p238 = scmp.eq.s32.totalorder %s31, 0
      %p239 = por %p237, %p238
      %p240 = scmp.ne.s32.totalorder %s228, %s229
      %p241 = scmp.eq.s32.totalorder %s32, 1
      %p242 = por %p240, %p241
      %p244 = scmp.ne.s32.totalorder %s229, %s243
      %p245 = scmp.eq.s32.totalorder %s32, 0
      %p246 = por %p244, %p245
      %s248 = sadd.s32 %s247, 1
      %p251 = scmp.eq.s32.totalorder %s26, 1
      %p252 = scmp.ne.s32.totalorder %s247, %s249
      %p253 = scmp.eq.s32.totalorder %s26, 0
      %p254 = por %p252, %p253
      %p255 = scmp.ne.s32.totalorder %s247, %s249
      %p256 = scmp.eq.s32.totalorder %s31, 1
      %p257 = por %p255, %p256
      %p258 = scmp.ne.s32.totalorder %s249, %s250
      %p259 = scmp.eq.s32.totalorder %s31, 0
      %p260 = por %p258, %p259
      %p261 = scmp.ne.s32.totalorder %s249, %s250
      %p262 = scmp.eq.s32.totalorder %s32, 1
      %p263 = por %p261, %p262
      %p265 = scmp.ne.s32.totalorder %s250, %s264
      %p266 = scmp.eq.s32.totalorder %s32, 0
      %p267 = por %p265, %p266
      %s269 = sadd.s32 %s268, 1
      %p272 = scmp.eq.s32.totalorder %s26, 1
      %p273 = scmp.ne.s32.totalorder %s268, %s270
      %p274 = scmp.eq.s32.totalorder %s26, 0
      %p275 = por %p273, %p274
      %p276 = scmp.ne.s32.totalorder %s268, %s270
      %p277 = scmp.eq.s32.totalorder %s31, 1
      %p278 = por %p276, %p277
      %p279 = scmp.ne.s32.totalorder %s270, %s271
      %p280 = scmp.eq.s32.totalorder %s31, 0
      %p281 = por %p279, %p280
      %p282 = scmp.ne.s32.totalorder %s270, %s271
      %p283 = scmp.eq.s32.totalorder %s32, 1
      %p284 = por %p282, %p283
      %p286 = scmp.ne.s32.totalorder %s271, %s285
      %p287 = scmp.eq.s32.totalorder %s32, 0
      %p288 = por %p286, %p287
      %s290 = sadd.s32 %s289, 1
      %p293 = scmp.eq.s32.totalorder %s26, 1
      %p294 = scmp.ne.s32.totalorder %s289, %s291
      %p295 = scmp.eq.s32.totalorder %s26, 0
      %p296 = por %p294, %p295
      %p297 = scmp.ne.s32.totalorder %s289, %s291
      %p298 = scmp.eq.s32.totalorder %s31, 1
      %p299 = por %p297, %p298
      %p300 = scmp.ne.s32.totalorder %s291, %s292
      %p301 = scmp.eq.s32.totalorder %s31, 0
      %p302 = por %p300, %p301
      %p303 = scmp.ne.s32.totalorder %s291, %s292
      %p304 = scmp.eq.s32.totalorder %s32, 1
      %p305 = por %p303, %p304
      %p307 = scmp.ne.s32.totalorder %s292, %s306
      %p308 = scmp.eq.s32.totalorder %s32, 0
      %p309 = por %p307, %p308
      %s311 = sadd.s32 %s310, 1
      %p314 = scmp.eq.s32.totalorder %s26, 1
      %p315 = scmp.ne.s32.totalorder %s310, %s312
      %p316 = scmp.eq.s32.totalorder %s26, 0
      %p317 = por %p315, %p316
      %p318 = scmp.ne.s32.totalorder %s310, %s312
      %p319 = scmp.eq.s32.totalorder %s31, 1
      %p320 = por %p318, %p319
      %p321 = scmp.ne.s32.totalorder %s312, %s313
      %p322 = scmp.eq.s32.totalorder %s31, 0
      %p323 = por %p321, %p322
      %p324 = scmp.ne.s32.totalorder %s312, %s313
      %p325 = scmp.eq.s32.totalorder %s32, 1
      %p326 = por %p324, %p325
      %p328 = scmp.ne.s32.totalorder %s313, %s327
      %p329 = scmp.eq.s32.totalorder %s32, 0
      %p330 = por %p328, %p329
      %s332 = sadd.s32 %s331, 1
      %p335 = scmp.eq.s32.totalorder %s26, 1
      %p336 = scmp.ne.s32.totalorder %s331, %s333
      %p337 = scmp.eq.s32.totalorder %s26, 0
      %p338 = por %p336, %p337
      %p339 = scmp.ne.s32.totalorder %s331, %s333
      %p340 = scmp.eq.s32.totalorder %s31, 1
      %p341 = por %p339, %p340
      %p342 = scmp.ne.s32.totalorder %s333, %s334
      %p343 = scmp.eq.s32.totalorder %s31, 0
      %p344 = por %p342, %p343
      %p345 = scmp.ne.s32.totalorder %s333, %s334
      %p346 = scmp.eq.s32.totalorder %s32, 1
      %p347 = por %p345, %p346
      %p349 = scmp.ne.s32.totalorder %s334, %s348
      %p350 = scmp.eq.s32.totalorder %s32, 0
      %p351 = por %p349, %p350
      %s353 = sadd.s32 %s352, 1
      %p356 = scmp.eq.s32.totalorder %s26, 1
      %p357 = scmp.ne.s32.totalorder %s352, %s354
      %p358 = scmp.eq.s32.totalorder %s26, 0
      %p359 = por %p357, %p358
      %p360 = scmp.ne.s32.totalorder %s352, %s354
      %p361 = scmp.eq.s32.totalorder %s31, 1
      %p362 = por %p360, %p361
      %p363 = scmp.ne.s32.totalorder %s354, %s355
      %p364 = scmp.eq.s32.totalorder %s31, 0
      %p365 = por %p363, %p364
      %p366 = scmp.ne.s32.totalorder %s354, %s355
      %p367 = scmp.eq.s32.totalorder %s32, 1
      %p368 = por %p366, %p367
      %p370 = scmp.ne.s32.totalorder %s355, %s369
      %p371 = scmp.eq.s32.totalorder %s32, 0
      %p372 = por %p370, %p371
      %s374 = sadd.s32 %s373, 1
      %p377 = scmp.eq.s32.totalorder %s26, 1
      %p378 = scmp.ne.s32.totalorder %s373, %s375
      %p379 = scmp.eq.s32.totalorder %s26, 0
      %p380 = por %p378, %p379
      %p381 = scmp.ne.s32.totalorder %s373, %s375
      %p382 = scmp.eq.s32.totalorder %s31, 1
      %p383 = por %p381, %p382
      %p384 = scmp.ne.s32.totalorder %s375, %s376
      %p385 = scmp.eq.s32.totalorder %s31, 0
      %p386 = por %p384, %p385
      %p387 = scmp.ne.s32.totalorder %s375, %s376
      %p388 = scmp.eq.s32.totalorder %s32, 1
      %p389 = por %p387, %p388
      %p391 = scmp.ne.s32.totalorder %s376, %s390
      %p392 = scmp.eq.s32.totalorder %s32, 0
      %p393 = por %p391, %p392
      %s395 = sadd.s32 %s394, 1
      %p398 = scmp.eq.s32.totalorder %s26, 1
      %p399 = scmp.ne.s32.totalorder %s394, %s396
      %p400 = scmp.eq.s32.totalorder %s26, 0
      %p401 = por %p399, %p400
      %p402 = scmp.ne.s32.totalorder %s394, %s396
      %p403 = scmp.eq.s32.totalorder %s31, 1
      %p404 = por %p402, %p403
      %p405 = scmp.ne.s32.totalorder %s396, %s397
      %p406 = scmp.eq.s32.totalorder %s31, 0
      %p407 = por %p405, %p406
      %p408 = scmp.ne.s32.totalorder %s396, %s397
      %p409 = scmp.eq.s32.totalorder %s32, 1
      %p410 = por %p408, %p409
      %p412 = scmp.ne.s32.totalorder %s397, %s411
      %p413 = scmp.eq.s32.totalorder %s32, 0
      %p414 = por %p412, %p413
      %s415 = ssub.s32 %s33, %s45
      %s416 = ssub.s32 %s34, %s41
      %s417 = sor.u32 %s415, %s416
      %p418 = scmp.eq.s32.totalorder %s417, 0
      %s420 = sadd.s32 %s419, 1
      %s421 = scalar_select %p418, %s419, %s420
      %p424 = pneg %p418
      %p425 = scmp.eq.s32.totalorder %s26, 1
      %p426 = por %p424, %p425
      %p427 = scmp.ne.s32.totalorder %s419, %s422
      %p428 = scmp.eq.s32.totalorder %s26, 0
      %p429 = por %p427, %p428
      %p430 = scmp.ne.s32.totalorder %s419, %s422
      %p431 = scmp.eq.s32.totalorder %s31, 1
      %p432 = por %p430, %p431
      %p433 = scmp.ne.s32.totalorder %s422, %s423
      %p434 = scmp.eq.s32.totalorder %s31, 0
      %p435 = por %p433, %p434
      %p436 = scmp.ne.s32.totalorder %s422, %s423
      %p437 = scmp.eq.s32.totalorder %s32, 1
      %p438 = por %p436, %p437
      %p440 = scmp.ne.s32.totalorder %s423, %s439
      %p441 = scmp.eq.s32.totalorder %s32, 0
      %p442 = por %p440, %p441
      %p443 = scmp.le.s32.totalorder 1, %s26
      %p444 = scmp.lt.s32.totalorder %s26, 3
      %p445 = pnand %p443, %p444
      %p446 = pneg %p445
      // Predicated region
      $region9: #{tpu_custom_call.1} parent=5 // pred_check
        _
      $region10: #{tpu_custom_call.1} parent=5 // pred_check_branch
        %448 = sbr.rel (%p445) target = $region12
      $region11: #{tpu_custom_call.1} parent=5 // pred_region
        %s449 = ssub.s32 %s26, 1
        // Predicated region
        $region13: #{tpu_custom_call.1} parent=11 // pred_check
          %p450 = pneg %p113
        $region14: #{tpu_custom_call.1} parent=11 // pred_check_branch
          %452 = sbr.rel (%p450) target = $region16
        $region15: #{tpu_custom_call.1} parent=11 // pred_region
          _
        $region16: #{tpu_custom_call.1} parent=11 // pred_fallthru
          _
        // Predicated region
        $region17: #{tpu_custom_call.1} parent=11 // pred_check
          %p453 = pneg %p134
        $region18: #{tpu_custom_call.1} parent=11 // pred_check_branch
          %455 = sbr.rel (%p453) target = $region20
        $region19: #{tpu_custom_call.1} parent=11 // pred_region
          _
        $region20: #{tpu_custom_call.1} parent=11 // pred_fallthru
          _
        // Predicated region
        $region21: #{tpu_custom_call.1} parent=11 // pred_check
          %p456 = pneg %p155
        $region22: #{tpu_custom_call.1} parent=11 // pred_check_branch
          %458 = sbr.rel (%p456) target = $region24
        $region23: #{tpu_custom_call.1} parent=11 // pred_region
          _
        $region24: #{tpu_custom_call.1} parent=11 // pred_fallthru
          _
        // Predicated region
        $region25: #{tpu_custom_call.1} parent=11 // pred_check
          %p459 = pneg %p176
        $region26: #{tpu_custom_call.1} parent=11 // pred_check_branch
          %461 = sbr.rel (%p459) target = $region28
        $region27: #{tpu_custom_call.1} parent=11 // pred_region
          _
        $region28: #{tpu_custom_call.1} parent=11 // pred_fallthru
          _
        // Predicated region
        $region29: #{tpu_custom_call.1} parent=11 // pred_check
          %p462 = pneg %p197
        $region30: #{tpu_custom_call.1} parent=11 // pred_check_branch
          %464 = sbr.rel (%p462) target = $region32
        $region31: #{tpu_custom_call.1} parent=11 // pred_region
          _
        $region32: #{tpu_custom_call.1} parent=11 // pred_fallthru
          _
        // Predicated region
        $region33: #{tpu_custom_call.1} parent=11 // pred_check
          %p465 = pneg %p218
        $region34: #{tpu_custom_call.1} parent=11 // pred_check_branch
          %467 = sbr.rel (%p465) target = $region36
        $region35: #{tpu_custom_call.1} parent=11 // pred_region
          _
        $region36: #{tpu_custom_call.1} parent=11 // pred_fallthru
          _
        // Predicated region
        $region37: #{tpu_custom_call.1} parent=11 // pred_check
          %p468 = pneg %p239
        $region38: #{tpu_custom_call.1} parent=11 // pred_check_branch
          %470 = sbr.rel (%p468) target = $region40
        $region39: #{tpu_custom_call.1} parent=11 // pred_region
          _
        $region40: #{tpu_custom_call.1} parent=11 // pred_fallthru
          _
        // Predicated region
        $region41: #{tpu_custom_call.1} parent=11 // pred_check
          %p471 = pneg %p260
        $region42: #{tpu_custom_call.1} parent=11 // pred_check_branch
          %473 = sbr.rel (%p471) target = $region44
        $region43: #{tpu_custom_call.1} parent=11 // pred_region
          _
        $region44: #{tpu_custom_call.1} parent=11 // pred_fallthru
          _
        // Predicated region
        $region45: #{tpu_custom_call.1} parent=11 // pred_check
          %p474 = pneg %p281
        $region46: #{tpu_custom_call.1} parent=11 // pred_check_branch
          %476 = sbr.rel (%p474) target = $region48
        $region47: #{tpu_custom_call.1} parent=11 // pred_region
          _
        $region48: #{tpu_custom_call.1} parent=11 // pred_fallthru
          _
        // Predicated region
        $region49: #{tpu_custom_call.1} parent=11 // pred_check
          %p477 = pneg %p302
        $region50: #{tpu_custom_call.1} parent=11 // pred_check_branch
          %479 = sbr.rel (%p477) target = $region52
        $region51: #{tpu_custom_call.1} parent=11 // pred_region
          _
        $region52: #{tpu_custom_call.1} parent=11 // pred_fallthru
          _
        // Predicated region
        $region53: #{tpu_custom_call.1} parent=11 // pred_check
          %p480 = pneg %p323
        $region54: #{tpu_custom_call.1} parent=11 // pred_check_branch
          %482 = sbr.rel (%p480) target = $region56
        $region55: #{tpu_custom_call.1} parent=11 // pred_region
          _
        $region56: #{tpu_custom_call.1} parent=11 // pred_fallthru
          _
        // Predicated region
        $region57: #{tpu_custom_call.1} parent=11 // pred_check
          %p483 = pneg %p344
        $region58: #{tpu_custom_call.1} parent=11 // pred_check_branch
          %485 = sbr.rel (%p483) target = $region60
        $region59: #{tpu_custom_call.1} parent=11 // pred_region
          _
        $region60: #{tpu_custom_call.1} parent=11 // pred_fallthru
          _
        // Predicated region
        $region61: #{tpu_custom_call.1} parent=11 // pred_check
          %p486 = pneg %p365
        $region62: #{tpu_custom_call.1} parent=11 // pred_check_branch
          %488 = sbr.rel (%p486) target = $region64
        $region63: #{tpu_custom_call.1} parent=11 // pred_region
          _
        $region64: #{tpu_custom_call.1} parent=11 // pred_fallthru
          _
        // Predicated region
        $region65: #{tpu_custom_call.1} parent=11 // pred_check
          %p489 = pneg %p386
        $region66: #{tpu_custom_call.1} parent=11 // pred_check_branch
          %491 = sbr.rel (%p489) target = $region68
        $region67: #{tpu_custom_call.1} parent=11 // pred_region
          _
        $region68: #{tpu_custom_call.1} parent=11 // pred_fallthru
          _
        // Predicated region
        $region69: #{tpu_custom_call.1} parent=11 // pred_check
          %p492 = pneg %p407
        $region70: #{tpu_custom_call.1} parent=11 // pred_check_branch
          %494 = sbr.rel (%p492) target = $region72
        $region71: #{tpu_custom_call.1} parent=11 // pred_region
          _
        $region72: #{tpu_custom_call.1} parent=11 // pred_fallthru
          _
      $region12: #{tpu_custom_call.1} parent=5 // pred_fallthru
        _
      %p495 = scmp.lt.s32.totalorder %s26, 2
      // Predicated region
      $region73: #{tpu_custom_call.1} parent=5 // pred_check
        %p496 = pneg %p495
      $region74: #{tpu_custom_call.1} parent=5 // pred_check_branch
        %498 = sbr.rel (%p496) target = $region76
      $region75: #{tpu_custom_call.1} parent=5 // pred_region
        // Predicated region
        $region77: #{tpu_custom_call.1} parent=75 // pred_check
          %p499 = pneg %p60
        $region78: #{tpu_custom_call.1} parent=75 // pred_check_branch
          %501 = sbr.rel (%p499) target = $region80
        $region79: #{tpu_custom_call.1} parent=75 // pred_region
          %s502 = smul.u32 2, %s34
          %p503 = scmp.lt.s32.totalorder %s33, 1
          %s504 = scalar_select %p503, %s33, 1
          %p505 = scmp.lt.s32.totalorder %s502, 1
          %s506 = scalar_select %p505, %s502, 1
          %s507 = smul.addr %s504, 8
          %s508 = sadd.s32 %s506, %s507
          %s509 = smul.addr %s508, 4
          %s510 = scalar_lea.vmem %s0, %s509
          %s511 = smul.u32 2, %s34
        $region80: #{tpu_custom_call.1} parent=75 // pred_fallthru
          _
        // Predicated region
        $region81: #{tpu_custom_call.1} parent=75 // pred_check
          %p512 = pneg %p86
        $region82: #{tpu_custom_call.1} parent=75 // pred_check_branch
          %514 = sbr.rel (%p512) target = $region84
        $region83: #{tpu_custom_call.1} parent=75 // pred_region
          %p515 = scmp.lt.s32.totalorder %s33, 1
          %s516 = scalar_select %p515, %s33, 1
          %s517 = smul.addr %s516, 4
          %s518 = smul.addr %s517, 4
          %s519 = scalar_lea.vmem %s1, %s518
        $region84: #{tpu_custom_call.1} parent=75 // pred_fallthru
          _
      $region76: #{tpu_custom_call.1} parent=5 // pred_fallthru
        _
      %p520 = scmp.le.s32.totalorder 1, %s26
      %p521 = scmp.lt.s32.totalorder %s26, 3
      %p522 = pnand %p520, %p521
      %p523 = pneg %p522
      // Predicated region
      $region85: #{tpu_custom_call.1} parent=5 // pred_check
        _
      $region86: #{tpu_custom_call.1} parent=5 // pred_check_branch
        %525 = sbr.rel (%p522) target = $region88
      $region87: #{tpu_custom_call.1} parent=5 // pred_region
        %s526 = ssub.s32 %s26, 1
        %s527 = smul.u32 2, %s36
        %p528 = scmp.lt.s32.totalorder %s35, 1
        %s529 = scalar_select %p528, %s35, 1
        %p530 = scmp.lt.s32.totalorder %s527, 1
        %s531 = scalar_select %p530, %s527, 1
        %s532 = smul.addr %s529, 8
        %s533 = sadd.s32 %s531, %s532
        %s534 = smul.addr %s533, 4
        %s535 = scalar_lea.vmem %s0, %s534
        %p536 = pneg %p66
        %p537 = pneg %p63
        %p538 = scmp.lt.s32.totalorder %s35, 1
        %s539 = scalar_select %p538, %s35, 1
        %s540 = smul.addr %s539, 4
        %s541 = smul.addr %s540, 4
        %s542 = scalar_lea.vmem %s1, %s541
        %p543 = pneg %p92
        %p544 = pneg %p89
        %p545 = pneg %p113
        %p546 = pneg %p110
        %p547 = pneg %p134
        %p548 = pneg %p131
        %p549 = pneg %p155
        %p550 = pneg %p152
        %p551 = pneg %p176
        %p552 = pneg %p173
        %p553 = pneg %p197
        %p554 = pneg %p194
        %p555 = pneg %p218
        %p556 = pneg %p215
        %p557 = pneg %p239
        %p558 = pneg %p236
        %p559 = pneg %p260
        %p560 = pneg %p257
        %p561 = pneg %p281
        %p562 = pneg %p278
        %p563 = pneg %p302
        %p564 = pneg %p299
        %p565 = pneg %p323
        %p566 = pneg %p320
        %p567 = pneg %p344
        %p568 = pneg %p341
        %p569 = pneg %p365
        %p570 = pneg %p362
        %p571 = pneg %p386
        %p572 = pneg %p383
        %p573 = pneg %p407
        %p574 = pneg %p404
        %p575 = pneg %p435
        %p576 = pneg %p432
        %s577 = sand.u32 %s422, 1
        %s578 = scalar_lea.sflag [#allocation3], %s577
        %s579 = sand.u32 %s422, 1
        %s580 = smul.addr %s579, 64
        %s581 = scalar_lea.vmem [#allocation2], %s580
        %s582 = smul.u32 2, %s36
        %p583 = scmp.lt.s32.totalorder %s35, 1
        %s584 = scalar_select %p583, %s35, 1
        %p585 = scmp.lt.s32.totalorder %s582, 1
        %s586 = scalar_select %p585, %s582, 1
        %s587 = smul.addr %s584, 8
        %s588 = sadd.s32 %s586, %s587
        %s589 = smul.addr %s588, 4
        %s590 = scalar_lea.vmem %s0, %s589
        %s591 = smul.u32 2, %s36
        %p592 = scmp.lt.s32.totalorder %s35, 1
        %s593 = scalar_select %p592, %s35, 1
        %s594 = smul.addr %s593, 4
        %s595 = smul.addr %s594, 4
        %s596 = scalar_lea.vmem %s1, %s595
        %s597 = smul.u32 2, %s36
        %v599 = vld [vmem:[%s590] sm:$0xff]
        %v600 = vld [vmem:[%s590 + $0x8] sm:$0xff]
        %v601 = vld [vmem:[%s590 + $0x10] sm:$0xff]
        %v602 = vld [vmem:[%s590 + $0x18] sm:$0xff]
        %v603 = vld [vmem:[%s596] sm:$0xf]
        %v604 = vld [vmem:[%s596 + $0x4] sm:$0xf]
        %v605 = vld [vmem:[%s596 + $0x8] sm:$0xf]
        %v606 = vld [vmem:[%s596 + $0xc] sm:$0xf]
        %v607 = vld [vmem:[%s2] sm:$0xf]
        %v608 = vld [vmem:[%s2 + $0x4] sm:$0xf]
        %v609 = vld [vmem:[%s3] sm:$0xff]
        %v610 = vld [vmem:[%s3 + $0x8] sm:$0xff]
        %612 = vset.pattern.permute.xlu0 0
        %613 = vperm.xlu0 %612, %v609
        %v614 = vpop.permute.xlu0 %613
        %617 = vset.pattern.permute.xlu0 0
        %618 = vperm.xlu0 %617, %v610
        %v619 = vpop.permute.xlu0 %618
        %v623 = vunpack.c.l.b16 %v607
        %v624 = vunpack.c.l.b16 %v608
        %v625 = vpack.c.b16 %v624, %v623
        %v630 = vunpack.c.l.b16 %v599
        %v631 = vunpack.c.h.b16 %v599
        %v632 = vunpack.c.l.b16 %v600
        %v633 = vunpack.c.h.b16 %v600
        %v634 = vunpack.c.l.b16 %v601
        %v635 = vunpack.c.h.b16 %v601
        %v636 = vunpack.c.l.b16 %v602
        %v637 = vunpack.c.h.b16 %v602
        %v638 = vpack.c.b16 %v632, %v630
        %v639 = vpack.c.b16 %v633, %v631
        %v640 = vpack.c.b16 %v636, %v634
        %v641 = vpack.c.b16 %v637, %v635
        %vm646 = vcmask 261120
        %v648 = vsel %vm646, %v625, 0
        %650 = vmatprep.subr.bf16.mxu0 %v639
        %651 = vmatpush1.bf16.msra.mxu0 %v638
        %652 = vmatprep.subr.bf16.mxu0 %v641
        %653 = vmatpush1.bf16.msra.mxu0 %v640
        %654 = vmatprep.subr.bf16.mxu0 0
        %655 = vmatpush1.bf16.msra.mxu0 0
        %656 = vmatprep.subr.bf16.mxu0 0
        %657 = vmatpush1.bf16.msra.mxu0 0
        %658 = vmatprep.subr.bf16.mxu0 0
        %659 = vmatpush1.bf16.msra.mxu0 0
        %660 = vmatprep.subr.bf16.mxu0 0
        %661 = vmatpush1.bf16.msra.mxu0 0
        %662 = vmatprep.subr.bf16.mxu0 0
        %663 = vmatpush1.bf16.msra.mxu0 0
        %664 = vmatprep.subr.bf16.mxu0 0
        %665 = vmatpush1.bf16.msra.mxu0 0
        %666 = vmatprep.subr.bf16.mxu0 0
        %667 = vmatpush1.bf16.msra.mxu0 0
        %668 = vmatprep.subr.bf16.mxu0 0
        %669 = vmatpush1.bf16.msra.mxu0 0
        %670 = vmatprep.subr.bf16.mxu0 0
        %671 = vmatpush1.bf16.msra.mxu0 0
        %672 = vmatprep.subr.bf16.mxu0 0
        %673 = vmatpush1.bf16.msra.mxu0 0
        %674 = vmatprep.subr.bf16.mxu0 0
        %675 = vmatpush1.bf16.msra.mxu0 0
        %676 = vmatprep.subr.bf16.mxu0 0
        %677 = vmatpush1.bf16.msra.mxu0 0
        %678 = vmatprep.subr.bf16.mxu0 0
        %679 = vmatpush1.bf16.msra.mxu0 0
        %680 = vmatprep.subr.bf16.mxu0 0
        %681 = vmatpush1.bf16.msra.mxu0 0
        %682 = vmatprep.mubr.bf16.mxu0 0
        %683 = vmatmul.mubr.bf16.gmra.mrb[0].mxu0 %v648
        %v684 = vpop.f32.mrb[0].mxu0
        %v685 = vadd.f32 %v614, %v684
        %v686 = vpop.f32.mrb[0].mxu0
        %v687 = vadd.f32 %v614, %v686
        %v688 = vpop.f32.mrb[0].mxu0
        %v689 = vadd.f32 %v619, %v688
        %v690 = vpop.f32.mrb[0].mxu0
        %v691 = vadd.f32 %v619, %v690
        %692 = vdwg.mxu0
        %v693 = vmax.f32 %v685, 0.0
        %v694 = vmax.f32 %v687, 0.0
        %v695 = vmax.f32 %v689, 0.0
        %v696 = vmax.f32 %v691, 0.0
        %v697 = vpack.c.bf16 %v695, %v693
        %v698 = vpack.c.bf16 %v696, %v694
        %v699 = vld [vmem:[%s4] sm:$0xf]
        %v700 = vld [vmem:[%s4 + $0x4] sm:$0xf]
        %v701 = vld [vmem:[%s5] sm:$0xff]
        %v702 = vld [vmem:[%s5 + $0x8] sm:$0xff]
        %704 = vset.pattern.permute.xlu0 0
        %705 = vperm.xlu0 %704, %v701
        %v706 = vpop.permute.xlu0 %705
        %709 = vset.pattern.permute.xlu0 0
        %710 = vperm.xlu0 %709, %v702
        %v711 = vpop.permute.xlu0 %710
        %v715 = vunpack.c.l.b16 %v699
        %v716 = vunpack.c.l.b16 %v700
        %v717 = vpack.c.b16 %v716, %v715
        %vm718 = vcmask 130048
        %v720 = vsel %vm718, %v717, 0
        %722 = vmatprep.subr.bf16.mxu0 %v698
        %723 = vmatpush1.bf16.msra.mxu0 %v697
        %724 = vmatprep.subr.bf16.mxu0 0
        %725 = vmatpush1.bf16.msra.mxu0 0
        %726 = vmatprep.subr.bf16.mxu0 0
        %727 = vmatpush1.bf16.msra.mxu0 0
        %728 = vmatprep.subr.bf16.mxu0 0
        %729 = vmatpush1.bf16.msra.mxu0 0
        %730 = vmatprep.subr.bf16.mxu0 0
        %731 = vmatpush1.bf16.msra.mxu0 0
        %732 = vmatprep.subr.bf16.mxu0 0
        %733 = vmatpush1.bf16.msra.mxu0 0
        %734 = vmatprep.subr.bf16.mxu0 0
        %735 = vmatpush1.bf16.msra.mxu0 0
        %736 = vmatprep.subr.bf16.mxu0 0
        %737 = vmatpush1.bf16.msra.mxu0 0
        %738 = vmatprep.subr.bf16.mxu0 0
        %739 = vmatpush1.bf16.msra.mxu0 0
        %740 = vmatprep.subr.bf16.mxu0 0
        %741 = vmatpush1.bf16.msra.mxu0 0
        %742 = vmatprep.subr.bf16.mxu0 0
        %743 = vmatpush1.bf16.msra.mxu0 0
        %744 = vmatprep.subr.bf16.mxu0 0
        %745 = vmatpush1.bf16.msra.mxu0 0
        %746 = vmatprep.subr.bf16.mxu0 0
        %747 = vmatpush1.bf16.msra.mxu0 0
        %748 = vmatprep.subr.bf16.mxu0 0
        %749 = vmatpush1.bf16.msra.mxu0 0
        %750 = vmatprep.subr.bf16.mxu0 0
        %751 = vmatpush1.bf16.msra.mxu0 0
        %752 = vmatprep.subr.bf16.mxu0 0
        %753 = vmatpush1.bf16.msra.mxu0 0
        %754 = vmatprep.mubr.bf16.mxu0 0
        %755 = vmatmul.mubr.bf16.gmra.mrb[0].mxu0 %v720
        %v756 = vpop.f32.mrb[0].mxu0
        %v757 = vadd.f32 %v706, %v756
        %v758 = vpop.f32.mrb[0].mxu0
        %v759 = vadd.f32 %v706, %v758
        %v760 = vpop.f32.mrb[0].mxu0
        %v761 = vadd.f32 %v711, %v760
        %v762 = vpop.f32.mrb[0].mxu0
        %v763 = vadd.f32 %v711, %v762
        %764 = vdwg.mxu0
        %v765 = vmax.f32 %v757, 0.0
        %v766 = vmax.f32 %v759, 0.0
        %v767 = vmax.f32 %v761, 0.0
        %v768 = vmax.f32 %v763, 0.0
        %v769 = vpack.c.bf16 %v767, %v765
        %v770 = vpack.c.bf16 %v768, %v766
        %v771 = vld [vmem:[%s6] sm:$0xf]
        %v772 = vld [vmem:[%s6 + $0x4] sm:$0xf]
        %v773 = vld [vmem:[%s7] sm:$0xff]
        %v774 = vld [vmem:[%s7 + $0x8] sm:$0xff]
        %776 = vset.pattern.permute.xlu0 0
        %777 = vperm.xlu0 %776, %v773
        %v778 = vpop.permute.xlu0 %777
        %781 = vset.pattern.permute.xlu0 0
        %782 = vperm.xlu0 %781, %v774
        %v783 = vpop.permute.xlu0 %782
        %v787 = vunpack.c.l.b16 %v771
        %v788 = vunpack.c.l.b16 %v772
        %v789 = vpack.c.b16 %v788, %v787
        %v794 = vunpack.c.l.b16 %v603
        %v795 = vunpack.c.l.b16 %v604
        %v796 = vunpack.c.l.b16 %v605
        %v797 = vunpack.c.l.b16 %v606
        %v798 = vpack.c.b16 %v795, %v794
        %v799 = vpack.c.b16 %v797, %v796
        %v803 = vsel %vm646, %v789, 0
        %805 = vmatprep.subr.bf16.mxu0 0
        %806 = vmatpush1.bf16.msra.mxu0 %v798
        %807 = vmatprep.subr.bf16.mxu0 0
        %808 = vmatpush1.bf16.msra.mxu0 %v799
        %809 = vmatprep.subr.bf16.mxu0 0
        %810 = vmatpush1.bf16.msra.mxu0 0
        %811 = vmatprep.subr.bf16.mxu0 0
        %812 = vmatpush1.bf16.msra.mxu0 0
        %813 = vmatprep.subr.bf16.mxu0 0
        %814 = vmatpush1.bf16.msra.mxu0 0
        %815 = vmatprep.subr.bf16.mxu0 0
        %816 = vmatpush1.bf16.msra.mxu0 0
        %817 = vmatprep.subr.bf16.mxu0 0
        %818 = vmatpush1.bf16.msra.mxu0 0
        %819 = vmatprep.subr.bf16.mxu0 0
        %820 = vmatpush1.bf16.msra.mxu0 0
        %821 = vmatprep.subr.bf16.mxu0 0
        %822 = vmatpush1.bf16.msra.mxu0 0
        %823 = vmatprep.subr.bf16.mxu0 0
        %824 = vmatpush1.bf16.msra.mxu0 0
        %825 = vmatprep.subr.bf16.mxu0 0
        %826 = vmatpush1.bf16.msra.mxu0 0
        %827 = vmatprep.subr.bf16.mxu0 0
        %828 = vmatpush1.bf16.msra.mxu0 0
        %829 = vmatprep.subr.bf16.mxu0 0
        %830 = vmatpush1.bf16.msra.mxu0 0
        %831 = vmatprep.subr.bf16.mxu0 0
        %832 = vmatpush1.bf16.msra.mxu0 0
        %833 = vmatprep.subr.bf16.mxu0 0
        %834 = vmatpush1.bf16.msra.mxu0 0
        %835 = vmatprep.subr.bf16.mxu0 0
        %836 = vmatpush1.bf16.msra.mxu0 0
        %837 = vmatprep.mubr.bf16.mxu0 0
        %838 = vmatmul.mubr.bf16.gmra.mrb[0].mxu0 %v803
        %v839 = vpop.f32.mrb[0].mxu0
        %v840 = vadd.f32 %v778, %v839
        %v841 = vpop.f32.mrb[0].mxu0
        %v842 = vpop.f32.mrb[0].mxu0
        %v843 = vadd.f32 %v783, %v842
        %v844 = vpop.f32.mrb[0].mxu0
        %845 = vdwg.mxu0
        %v846 = vmax.f32 %v840, 0.0
        %v847 = vmax.f32 %v843, 0.0
        %v848 = vpack.c.bf16 %v847, %v846
        %v849 = vld [vmem:[%s8] sm:$0xf]
        %v850 = vld [vmem:[%s8 + $0x4] sm:$0xf]
        %v851 = vld [vmem:[%s9] sm:$0xff]
        %v852 = vld [vmem:[%s9 + $0x8] sm:$0xff]
        %854 = vset.pattern.permute.xlu0 0
        %855 = vperm.xlu0 %854, %v851
        %v856 = vpop.permute.xlu0 %855
        %859 = vset.pattern.permute.xlu0 0
        %860 = vperm.xlu0 %859, %v852
        %v861 = vpop.permute.xlu0 %860
        %v865 = vunpack.c.l.b16 %v849
        %v866 = vunpack.c.l.b16 %v850
        %v867 = vpack.c.b16 %v866, %v865
        %v869 = vsel %vm718, %v867, 0
        %871 = vmatprep.subr.bf16.mxu0 0
        %872 = vmatpush1.bf16.msra.mxu0 %v848
        %873 = vmatprep.subr.bf16.mxu0 0
        %874 = vmatpush1.bf16.msra.mxu0 0
        %875 = vmatprep.subr.bf16.mxu0 0
        %876 = vmatpush1.bf16.msra.mxu0 0
        %877 = vmatprep.subr.bf16.mxu0 0
        %878 = vmatpush1.bf16.msra.mxu0 0
        %879 = vmatprep.subr.bf16.mxu0 0
        %880 = vmatpush1.bf16.msra.mxu0 0
        %881 = vmatprep.subr.bf16.mxu0 0
        %882 = vmatpush1.bf16.msra.mxu0 0
        %883 = vmatprep.subr.bf16.mxu0 0
        %884 = vmatpush1.bf16.msra.mxu0 0
        %885 = vmatprep.subr.bf16.mxu0 0
        %886 = vmatpush1.bf16.msra.mxu0 0
        %887 = vmatprep.subr.bf16.mxu0 0
        %888 = vmatpush1.bf16.msra.mxu0 0
        %889 = vmatprep.subr.bf16.mxu0 0
        %890 = vmatpush1.bf16.msra.mxu0 0
        %891 = vmatprep.subr.bf16.mxu0 0
        %892 = vmatpush1.bf16.msra.mxu0 0
        %893 = vmatprep.subr.bf16.mxu0 0
        %894 = vmatpush1.bf16.msra.mxu0 0
        %895 = vmatprep.subr.bf16.mxu0 0
        %896 = vmatpush1.bf16.msra.mxu0 0
        %897 = vmatprep.subr.bf16.mxu0 0
        %898 = vmatpush1.bf16.msra.mxu0 0
        %899 = vmatprep.subr.bf16.mxu0 0
        %900 = vmatpush1.bf16.msra.mxu0 0
        %901 = vmatprep.subr.bf16.mxu0 0
        %902 = vmatpush1.bf16.msra.mxu0 0
        %903 = vmatprep.mubr.bf16.mxu0 0
        %904 = vmatmul.mubr.bf16.gmra.mrb[0].mxu0 %v869
        %v905 = vpop.f32.mrb[0].mxu0
        %v906 = vadd.f32 %v856, %v905
        %v907 = vpop.f32.mrb[0].mxu0
        %v908 = vpop.f32.mrb[0].mxu0
        %v909 = vadd.f32 %v861, %v908
        %v910 = vpop.f32.mrb[0].mxu0
        %911 = vdwg.mxu0
        %v912 = vmax.f32 %v906, 0.0
        %v913 = vmax.f32 %v909, 0.0
        %v914 = vpack.c.bf16 %v913, %v912
        %v915 = vld [vmem:[%s10] sm:$0xf]
        %v916 = vld [vmem:[%s10 + $0x4] sm:$0xf]
        %v917 = vld [vmem:[%s11] sm:$0xff]
        %v918 = vld [vmem:[%s11 + $0x8] sm:$0xff]
        %920 = vset.pattern.permute.xlu0 0
        %921 = vperm.xlu0 %920, %v917
        %v922 = vpop.permute.xlu0 %921
        %925 = vset.pattern.permute.xlu0 0
        %926 = vperm.xlu0 %925, %v918
        %v927 = vpop.permute.xlu0 %926
        %v931 = vunpack.c.l.b16 %v915
        %v932 = vunpack.c.l.b16 %v916
        %v933 = vpack.c.b16 %v932, %v931
        %v935 = vsel %vm646, %v933, 0
        %937 = vmatprep.subr.bf16.mxu0 0
        %938 = vmatpush1.bf16.msra.mxu0 %v798
        %939 = vmatprep.subr.bf16.mxu0 0
        %940 = vmatpush1.bf16.msra.mxu0 %v799
        %941 = vmatprep.subr.bf16.mxu0 0
        %942 = vmatpush1.bf16.msra.mxu0 0
        %943 = vmatprep.subr.bf16.mxu0 0
        %944 = vmatpush1.bf16.msra.mxu0 0
        %945 = vmatprep.subr.bf16.mxu0 0
        %946 = vmatpush1.bf16.msra.mxu0 0
        %947 = vmatprep.subr.bf16.mxu0 0
        %948 = vmatpush1.bf16.msra.mxu0 0
        %949 = vmatprep.subr.bf16.mxu0 0
        %950 = vmatpush1.bf16.msra.mxu0 0
        %951 = vmatprep.subr.bf16.mxu0 0
        %952 = vmatpush1.bf16.msra.mxu0 0
        %953 = vmatprep.subr.bf16.mxu0 0
        %954 = vmatpush1.bf16.msra.mxu0 0
        %955 = vmatprep.subr.bf16.mxu0 0
        %956 = vmatpush1.bf16.msra.mxu0 0
        %957 = vmatprep.subr.bf16.mxu0 0
        %958 = vmatpush1.bf16.msra.mxu0 0
        %959 = vmatprep.subr.bf16.mxu0 0
        %960 = vmatpush1.bf16.msra.mxu0 0
        %961 = vmatprep.subr.bf16.mxu0 0
        %962 = vmatpush1.bf16.msra.mxu0 0
        %963 = vmatprep.subr.bf16.mxu0 0
        %964 = vmatpush1.bf16.msra.mxu0 0
        %965 = vmatprep.subr.bf16.mxu0 0
        %966 = vmatpush1.bf16.msra.mxu0 0
        %967 = vmatprep.subr.bf16.mxu0 0
        %968 = vmatpush1.bf16.msra.mxu0 0
        %969 = vmatprep.mubr.bf16.mxu0 0
        %970 = vmatmul.mubr.bf16.gmra.mrb[0].mxu0 %v935
        %v971 = vpop.f32.mrb[0].mxu0
        %v972 = vadd.f32 %v922, %v971
        %v973 = vpop.f32.mrb[0].mxu0
        %v974 = vpop.f32.mrb[0].mxu0
        %v975 = vadd.f32 %v927, %v974
        %v976 = vpop.f32.mrb[0].mxu0
        %977 = vdwg.mxu0
        %v978 = vmax.f32 %v972, 0.0
        %v979 = vmax.f32 %v975, 0.0
        %v980 = vpack.c.bf16 %v979, %v978
        %981 = vxpose.xlu0.c.b16.start [1/8] %v914, 128
        %982 = vxpose.xlu0.c.b16.cont [2/8] 0, 128
        %983 = vxpose.xlu0.c.b16.cont [3/8] 0, 128
        %984 = vxpose.xlu0.c.b16.cont [4/8] 0, 128
        %985 = vxpose.xlu0.c.b16.cont [5/8] 0, 128
        %986 = vxpose.xlu0.c.b16.cont [6/8] 0, 128
        %987 = vxpose.xlu0.c.b16.cont [7/8] 0, 128
        %988 = vxpose.xlu0.c.b16.end [8/8] 0, 128
        %v989 = vpop.trf.xlu0
        %v990 = vpop.trf.xlu0
        %v991 = vpop.trf.xlu0
        %v992 = vpop.trf.xlu0
        %v993 = vpop.trf.xlu0
        %v994 = vpop.trf.xlu0
        %v995 = vpop.trf.xlu0
        %v996 = vpop.trf.xlu0
        %v998 = vsel %vm718, %v989, 0
        %1000 = vmatprep.subr.bf16.mxu0 %v770
        %1001 = vmatpush1.bf16.msra.mxu0 %v769
        %1002 = vmatprep.subr.bf16.mxu0 0
        %1003 = vmatpush1.bf16.msra.mxu0 0
        %1004 = vmatprep.subr.bf16.mxu0 0
        %1005 = vmatpush1.bf16.msra.mxu0 0
        %1006 = vmatprep.subr.bf16.mxu0 0
        %1007 = vmatpush1.bf16.msra.mxu0 0
        %1008 = vmatprep.subr.bf16.mxu0 0
        %1009 = vmatpush1.bf16.msra.mxu0 0
        %1010 = vmatprep.subr.bf16.mxu0 0
        %1011 = vmatpush1.bf16.msra.mxu0 0
        %1012 = vmatprep.subr.bf16.mxu0 0
        %1013 = vmatpush1.bf16.msra.mxu0 0
        %1014 = vmatprep.subr.bf16.mxu0 0
        %1015 = vmatpush1.bf16.msra.mxu0 0
        %1016 = vmatprep.subr.bf16.mxu0 0
        %1017 = vmatpush1.bf16.msra.mxu0 0
        %1018 = vmatprep.subr.bf16.mxu0 0
        %1019 = vmatpush1.bf16.msra.mxu0 0
        %1020 = vmatprep.subr.bf16.mxu0 0
        %1021 = vmatpush1.bf16.msra.mxu0 0
        %1022 = vmatprep.subr.bf16.mxu0 0
        %1023 = vmatpush1.bf16.msra.mxu0 0
        %1024 = vmatprep.subr.bf16.mxu0 0
        %1025 = vmatpush1.bf16.msra.mxu0 0
        %1026 = vmatprep.subr.bf16.mxu0 0
        %1027 = vmatpush1.bf16.msra.mxu0 0
        %1028 = vmatprep.subr.bf16.mxu0 0
        %1029 = vmatpush1.bf16.msra.mxu0 0
        %1030 = vmatprep.subr.bf16.mxu0 0
        %1031 = vmatpush1.bf16.msra.mxu0 0
        %1032 = vmatprep.mubr.bf16.mxu0 0
        %1033 = vmatmul.mubr.bf16.gmra.mrb[0].mxu0 %v998
        %v1034 = vpop.f32.mrb[0].mxu0
        %v1035 = vadd.f32 0.0, %v1034
        %v1036 = vpop.f32.mrb[0].mxu0
        %v1037 = vadd.f32 0.0, %v1036
        %v1038 = vpop.f32.mrb[0].mxu0
        %v1039 = vpop.f32.mrb[0].mxu0
        %1040 = vdwg.mxu0
        %v1041 = vmul.f32 %v1035, 0.25
        %v1042 = vmul.f32 %v1037, 0.25
        %v1043 = vrot.slane %v1041, 4
        %v1044 = vmax.f32 %v1041, %v1043
        %v1045 = vrot.slane %v1044, 2
        %v1046 = vmax.f32 %v1044, %v1045
        %v1047 = vrot.slane %v1046, 1
        %v1048 = vmax.f32 %v1046, %v1047
        %v1049 = vrot.slane %v1042, 4
        %v1050 = vmax.f32 %v1042, %v1049
        %v1051 = vrot.slane %v1050, 2
        %v1052 = vmax.f32 %v1050, %v1051
        %v1053 = vrot.slane %v1052, 1
        %v1054 = vmax.f32 %v1052, %v1053
        %v1055 = vsub.f32 %v1041, %v1048
        %v1056 = vsub.f32 %v1042, %v1054
        %v1057 = vmul.f32 %v1055, 1.442695
        %v1058 = vpow.pop %v1057
        %v1059 = vmul.f32 %v1056, 1.442695
        %v1060 = vpow.pop %v1059
        %v1061 = vrot.slane %v1058, 4
        %v1062 = vadd.f32 %v1058, %v1061
        %v1063 = vrot.slane %v1062, 2
        %v1064 = vadd.f32 %v1062, %v1063
        %v1065 = vrot.slane %v1064, 1
        %v1066 = vadd.f32 %v1064, %v1065
        %v1067 = vrot.slane %v1060, 4
        %v1068 = vadd.f32 %v1060, %v1067
        %v1069 = vrot.slane %v1068, 2
        %v1070 = vadd.f32 %v1068, %v1069
        %v1071 = vrot.slane %v1070, 1
        %v1072 = vadd.f32 %v1070, %v1071
        %v1073 = vrcp.pop %v1066
        %v1074 = vrcp.pop %v1072
        %v1075 = vmul.f32 %v1058, %v1073
        %v1076 = vmul.f32 %v1060, %v1074
        %v1077 = vpack.c.bf16 %v1075, %v1075
        %v1078 = vpack.c.bf16 %v1076, %v1076
        %vm1079 = vcmask 64512
        %v1081 = vsel %vm1079, %v980, 0
        %vm1083 = vcmask 1043456
        %v1085 = vsel %vm1083, %v1077, 0
        %v1088 = vsel %vm1083, %v1078, 0
        %1090 = vmatprep.subr.bf16.mxu0 %v1088
        %1091 = vmatpush1.bf16.msra.mxu0 %v1085
        %1092 = vmatprep.subr.bf16.mxu0 0
        %1093 = vmatpush1.bf16.msra.mxu0 0
        %1094 = vmatprep.subr.bf16.mxu0 0
        %1095 = vmatpush1.bf16.msra.mxu0 0
        %1096 = vmatprep.subr.bf16.mxu0 0
        %1097 = vmatpush1.bf16.msra.mxu0 0
        %1098 = vmatprep.subr.bf16.mxu0 0
        %1099 = vmatpush1.bf16.msra.mxu0 0
        %1100 = vmatprep.subr.bf16.mxu0 0
        %1101 = vmatpush1.bf16.msra.mxu0 0
        %1102 = vmatprep.subr.bf16.mxu0 0
        %1103 = vmatpush1.bf16.msra.mxu0 0
        %1104 = vmatprep.subr.bf16.mxu0 0
        %1105 = vmatpush1.bf16.msra.mxu0 0
        %1106 = vmatprep.subr.bf16.mxu0 0
        %1107 = vmatpush1.bf16.msra.mxu0 0
        %1108 = vmatprep.subr.bf16.mxu0 0
        %1109 = vmatpush1.bf16.msra.mxu0 0
        %1110 = vmatprep.subr.bf16.mxu0 0
        %1111 = vmatpush1.bf16.msra.mxu0 0
        %1112 = vmatprep.subr.bf16.mxu0 0
        %1113 = vmatpush1.bf16.msra.mxu0 0
        %1114 = vmatprep.subr.bf16.mxu0 0
        %1115 = vmatpush1.bf16.msra.mxu0 0
        %1116 = vmatprep.subr.bf16.mxu0 0
        %1117 = vmatpush1.bf16.msra.mxu0 0
        %1118 = vmatprep.subr.bf16.mxu0 0
        %1119 = vmatpush1.bf16.msra.mxu0 0
        %1120 = vmatprep.subr.bf16.mxu0 0
        %1121 = vmatpush1.bf16.msra.mxu0 0
        %1122 = vmatprep.mubr.bf16.mxu0 0
        %1123 = vmatmul.mubr.bf16.gmra.mrb[0].mxu0 %v1081
        %v1124 = vpop.f32.mrb[0].mxu0
        %v1125 = vadd.f32 0.0, %v1124
        %v1126 = vpop.f32.mrb[0].mxu0
        %v1127 = vadd.f32 0.0, %v1126
        %v1128 = vpop.f32.mrb[0].mxu0
        %v1129 = vadd.f32 0.0, %v1128
        %v1130 = vpop.f32.mrb[0].mxu0
        %v1131 = vadd.f32 0.0, %v1130
        %1132 = vdwg.mxu0
        %v1133 = vpack.c.bf16 %v1129, %v1125
        %v1134 = vpack.c.bf16 %v1131, %v1127
        %v1135 = vld [vmem:[%s12] sm:$0xf]
        %v1136 = vld [vmem:[%s12 + $0x4] sm:$0xf]
        %v1137 = vld [vmem:[%s12 + $0x8] sm:$0xf]
        %v1138 = vld [vmem:[%s12 + $0xc] sm:$0xf]
        %v1139 = vld [vmem:[%s13] sm:$0xff]
        %v1140 = vld [vmem:[%s13 + $0x8] sm:$0xff]
        %v1141 = vld [vmem:[%s13 + $0x10] sm:$0xff]
        %v1142 = vld [vmem:[%s13 + $0x18] sm:$0xff]
        %1144 = vset.pattern.permute.xlu0 0
        %1145 = vperm.xlu0 %1144, %v1139
        %v1146 = vpop.permute.xlu0 %1145
        %1149 = vset.pattern.permute.xlu0 0
        %1150 = vperm.xlu0 %1149, %v1140
        %v1151 = vpop.permute.xlu0 %1150
        %1154 = vset.pattern.permute.xlu0 0
        %1155 = vperm.xlu0 %1154, %v1141
        %v1156 = vpop.permute.xlu0 %1155
        %1159 = vset.pattern.permute.xlu0 0
        %1160 = vperm.xlu0 %1159, %v1142
        %v1161 = vpop.permute.xlu0 %1160
        %v1167 = vunpack.c.l.b16 %v1135
        %v1168 = vunpack.c.l.b16 %v1136
        %v1169 = vunpack.c.l.b16 %v1137
        %v1170 = vunpack.c.l.b16 %v1138
        %v1171 = vpack.c.b16 %v1168, %v1167
        %v1172 = vpack.c.b16 %v1170, %v1169
        %v1174 = vsel %vm718, %v1171, 0
        %v1177 = vsel %vm718, %v1172, 0
        %1179 = vmatprep.subr.bf16.mxu0 %v1134
        %1180 = vmatpush1.bf16.msra.mxu0 %v1133
        %1181 = vmatprep.subr.bf16.mxu0 0
        %1182 = vmatpush1.bf16.msra.mxu0 0
        %1183 = vmatprep.subr.bf16.mxu0 0
        %1184 = vmatpush1.bf16.msra.mxu0 0
        %1185 = vmatprep.subr.bf16.mxu0 0
        %1186 = vmatpush1.bf16.msra.mxu0 0
        %1187 = vmatprep.subr.bf16.mxu0 0
        %1188 = vmatpush1.bf16.msra.mxu0 0
        %1189 = vmatprep.subr.bf16.mxu0 0
        %1190 = vmatpush1.bf16.msra.mxu0 0
        %1191 = vmatprep.subr.bf16.mxu0 0
        %1192 = vmatpush1.bf16.msra.mxu0 0
        %1193 = vmatprep.subr.bf16.mxu0 0
        %1194 = vmatpush1.bf16.msra.mxu0 0
        %1195 = vmatprep.subr.bf16.mxu0 0
        %1196 = vmatpush1.bf16.msra.mxu0 0
        %1197 = vmatprep.subr.bf16.mxu0 0
        %1198 = vmatpush1.bf16.msra.mxu0 0
        %1199 = vmatprep.subr.bf16.mxu0 0
        %1200 = vmatpush1.bf16.msra.mxu0 0
        %1201 = vmatprep.subr.bf16.mxu0 0
        %1202 = vmatpush1.bf16.msra.mxu0 0
        %1203 = vmatprep.subr.bf16.mxu0 0
        %1204 = vmatpush1.bf16.msra.mxu0 0
        %1205 = vmatprep.subr.bf16.mxu0 0
        %1206 = vmatpush1.bf16.msra.mxu0 0
        %1207 = vmatprep.subr.bf16.mxu0 0
        %1208 = vmatpush1.bf16.msra.mxu0 0
        %1209 = vmatprep.subr.bf16.mxu0 0
        %1210 = vmatpush1.bf16.msra.mxu0 0
        %1211 = vmatprep.mubr.bf16.mxu0 0
        %1212 = vmatmul.mubr.bf16.gmra.mrb[0].mxu0 %v1174
        %v1213 = vpop.f32.mrb[0].mxu0
        %v1214 = vadd.f32 %v1146, %v1213
        %v1215 = vpop.f32.mrb[0].mxu0
        %v1216 = vadd.f32 %v1146, %v1215
        %v1217 = vpop.f32.mrb[0].mxu0
        %v1218 = vadd.f32 %v1151, %v1217
        %v1219 = vpop.f32.mrb[0].mxu0
        %v1220 = vadd.f32 %v1151, %v1219
        %1221 = vmatprep.mubr.bf16.mxu0 0
        %1222 = vmatmul.mubr.bf16.gmra.mrb[0].mxu0 %v1177
        %v1223 = vpop.f32.mrb[0].mxu0
        %v1224 = vadd.f32 %v1156, %v1223
        %v1225 = vpop.f32.mrb[0].mxu0
        %v1226 = vadd.f32 %v1156, %v1225
        %v1227 = vpop.f32.mrb[0].mxu0
        %v1228 = vadd.f32 %v1161, %v1227
        %v1229 = vpop.f32.mrb[0].mxu0
        %v1230 = vadd.f32 %v1161, %v1229
        %1231 = vdwg.mxu0
        %v1232 = vmax.f32 %v1214, 0.0
        %v1233 = vmax.f32 %v1216, 0.0
        %v1234 = vmax.f32 %v1218, 0.0
        %v1235 = vmax.f32 %v1220, 0.0
        %v1236 = vmax.f32 %v1224, 0.0
        %v1237 = vmax.f32 %v1226, 0.0
        %v1238 = vmax.f32 %v1228, 0.0
        %v1239 = vmax.f32 %v1230, 0.0
        %v1240 = vpack.c.bf16 %v1234, %v1232
        %v1241 = vpack.c.bf16 %v1235, %v1233
        %v1242 = vpack.c.bf16 %v1238, %v1236
        %v1243 = vpack.c.bf16 %v1239, %v1237
        %v1244 = vld [vmem:[%s14] sm:$0xf]
        %v1245 = vld [vmem:[%s14 + $0x4] sm:$0xf]
        %v1246 = vld [vmem:[%s14 + $0x8] sm:$0xf]
        %v1247 = vld [vmem:[%s14 + $0xc] sm:$0xf]
        %v1248 = vld [vmem:[%s15] sm:$0xf]
        %v1249 = vld [vmem:[%s15 + $0x4] sm:$0xf]
        %v1250 = vld [vmem:[%s15 + $0x8] sm:$0xf]
        %v1251 = vld [vmem:[%s15 + $0xc] sm:$0xf]
        %v1256 = vunpack.c.l.b16 %v1248
        %v1257 = vunpack.c.l.b16 %v1249
        %v1258 = vunpack.c.l.b16 %v1250
        %v1259 = vunpack.c.l.b16 %v1251
        %v1260 = vpack.c.b16 %v1257, %v1256
        %v1261 = vpack.c.b16 %v1259, %v1258
        %v1263 = vsel %vm646, %v1260, 0
        %v1266 = vsel %vm646, %v1261, 0
        %1268 = vmatprep.subr.bf16.mxu0 %v639
        %1269 = vmatpush1.bf16.msra.mxu0 %v638
        %1270 = vmatprep.subr.bf16.mxu0 %v641
        %1271 = vmatpush1.bf16.msra.mxu0 %v640
        %1272 = vmatprep.subr.bf16.mxu0 0
        %1273 = vmatpush1.bf16.msra.mxu0 0
        %1274 = vmatprep.subr.bf16.mxu0 0
        %1275 = vmatpush1.bf16.msra.mxu0 0
        %1276 = vmatprep.subr.bf16.mxu0 0
        %1277 = vmatpush1.bf16.msra.mxu0 0
        %1278 = vmatprep.subr.bf16.mxu0 0
        %1279 = vmatpush1.bf16.msra.mxu0 0
        %1280 = vmatprep.subr.bf16.mxu0 0
        %1281 = vmatpush1.bf16.msra.mxu0 0
        %1282 = vmatprep.subr.bf16.mxu0 0
        %1283 = vmatpush1.bf16.msra.mxu0 0
        %1284 = vmatprep.subr.bf16.mxu0 0
        %1285 = vmatpush1.bf16.msra.mxu0 0
        %1286 = vmatprep.subr.bf16.mxu0 0
        %1287 = vmatpush1.bf16.msra.mxu0 0
        %1288 = vmatprep.subr.bf16.mxu0 0
        %1289 = vmatpush1.bf16.msra.mxu0 0
        %1290 = vmatprep.subr.bf16.mxu0 0
        %1291 = vmatpush1.bf16.msra.mxu0 0
        %1292 = vmatprep.subr.bf16.mxu0 0
        %1293 = vmatpush1.bf16.msra.mxu0 0
        %1294 = vmatprep.subr.bf16.mxu0 0
        %1295 = vmatpush1.bf16.msra.mxu0 0
        %1296 = vmatprep.subr.bf16.mxu0 0
        %1297 = vmatpush1.bf16.msra.mxu0 0
        %1298 = vmatprep.subr.bf16.mxu0 0
        %1299 = vmatpush1.bf16.msra.mxu0 0
        %1300 = vmatprep.mubr.bf16.mxu0 0
        %1301 = vmatmul.mubr.bf16.gmra.mrb[0].mxu0 %v1263
        %v1302 = vpop.f32.mrb[0].mxu0
        %v1303 = vadd.f32 0.0, %v1302
        %v1304 = vpop.f32.mrb[0].mxu0
        %v1305 = vadd.f32 0.0, %v1304
        %v1306 = vpop.f32.mrb[0].mxu0
        %v1307 = vadd.f32 0.0, %v1306
        %v1308 = vpop.f32.mrb[0].mxu0
        %v1309 = vadd.f32 0.0, %v1308
        %1310 = vmatprep.mubr.bf16.mxu0 0
        %1311 = vmatmul.mubr.bf16.gmra.mrb[0].mxu0 %v1266
        %v1312 = vpop.f32.mrb[0].mxu0
        %v1313 = vadd.f32 0.0, %v1312
        %v1314 = vpop.f32.mrb[0].mxu0
        %v1315 = vadd.f32 0.0, %v1314
        %v1316 = vpop.f32.mrb[0].mxu0
        %v1317 = vadd.f32 0.0, %v1316
        %v1318 = vpop.f32.mrb[0].mxu0
        %v1319 = vadd.f32 0.0, %v1318
        %1320 = vdwg.mxu0
        %v1325 = vunpack.c.l.b16 %v1244
        %v1326 = vunpack.c.l.b16 %v1245
        %v1327 = vunpack.c.l.b16 %v1246
        %v1328 = vunpack.c.l.b16 %v1247
        %v1329 = vpack.c.b16 %v1326, %v1325
        %v1330 = vpack.c.b16 %v1328, %v1327
        %v1332 = vsel %vm646, %v1329, 0
        %v1335 = vsel %vm646, %v1330, 0
        %1337 = vmatprep.subr.bf16.mxu0 %v1241
        %1338 = vmatpush1.bf16.msra.mxu0 %v1240
        %1339 = vmatprep.subr.bf16.mxu0 %v1243
        %1340 = vmatpush1.bf16.msra.mxu0 %v1242
        %1341 = vmatprep.subr.bf16.mxu0 0
        %1342 = vmatpush1.bf16.msra.mxu0 0
        %1343 = vmatprep.subr.bf16.mxu0 0
        %1344 = vmatpush1.bf16.msra.mxu0 0
        %1345 = vmatprep.subr.bf16.mxu0 0
        %1346 = vmatpush1.bf16.msra.mxu0 0
        %1347 = vmatprep.subr.bf16.mxu0 0
        %1348 = vmatpush1.bf16.msra.mxu0 0
        %1349 = vmatprep.subr.bf16.mxu0 0
        %1350 = vmatpush1.bf16.msra.mxu0 0
        %1351 = vmatprep.subr.bf16.mxu0 0
        %1352 = vmatpush1.bf16.msra.mxu0 0
        %1353 = vmatprep.subr.bf16.mxu0 0
        %1354 = vmatpush1.bf16.msra.mxu0 0
        %1355 = vmatprep.subr.bf16.mxu0 0
        %1356 = vmatpush1.bf16.msra.mxu0 0
        %1357 = vmatprep.subr.bf16.mxu0 0
        %1358 = vmatpush1.bf16.msra.mxu0 0
        %1359 = vmatprep.subr.bf16.mxu0 0
        %1360 = vmatpush1.bf16.msra.mxu0 0
        %1361 = vmatprep.subr.bf16.mxu0 0
        %1362 = vmatpush1.bf16.msra.mxu0 0
        %1363 = vmatprep.subr.bf16.mxu0 0
        %1364 = vmatpush1.bf16.msra.mxu0 0
        %1365 = vmatprep.subr.bf16.mxu0 0
        %1366 = vmatpush1.bf16.msra.mxu0 0
        %1367 = vmatprep.subr.bf16.mxu0 0
        %1368 = vmatpush1.bf16.msra.mxu0 0
        %1369 = vmatprep.mubr.bf16.mxu0 0
        %1370 = vmatmul.mubr.bf16.gmra.mrb[0].mxu0 %v1332
        %v1371 = vpop.f32.mrb[0].mxu0
        %v1372 = vadd.f32 %v1303, %v1371
        %v1373 = vpop.f32.mrb[0].mxu0
        %v1374 = vadd.f32 %v1305, %v1373
        %v1375 = vpop.f32.mrb[0].mxu0
        %v1376 = vadd.f32 %v1307, %v1375
        %v1377 = vpop.f32.mrb[0].mxu0
        %v1378 = vadd.f32 %v1309, %v1377
        %1379 = vmatprep.mubr.bf16.mxu0 0
        %1380 = vmatmul.mubr.bf16.gmra.mrb[0].mxu0 %v1335
        %v1381 = vpop.f32.mrb[0].mxu0
        %v1382 = vadd.f32 %v1313, %v1381
        %v1383 = vpop.f32.mrb[0].mxu0
        %v1384 = vadd.f32 %v1315, %v1383
        %v1385 = vpop.f32.mrb[0].mxu0
        %v1386 = vadd.f32 %v1317, %v1385
        %v1387 = vpop.f32.mrb[0].mxu0
        %v1388 = vadd.f32 %v1319, %v1387
        %1389 = vdwg.mxu0
        %v1390 = vld [vmem:[%s16] sm:$0xff]
        %v1391 = vld [vmem:[%s16 + $0x8] sm:$0xff]
        %v1392 = vld [vmem:[%s16 + $0x10] sm:$0xff]
        %v1393 = vld [vmem:[%s16 + $0x18] sm:$0xff]
        %1395 = vset.pattern.permute.xlu0 0
        %1396 = vperm.xlu0 %1395, %v1390
        %v1397 = vpop.permute.xlu0 %1396
        %1400 = vset.pattern.permute.xlu0 0
        %1401 = vperm.xlu0 %1400, %v1391
        %v1402 = vpop.permute.xlu0 %1401
        %1405 = vset.pattern.permute.xlu0 0
        %1406 = vperm.xlu0 %1405, %v1392
        %v1407 = vpop.permute.xlu0 %1406
        %1410 = vset.pattern.permute.xlu0 0
        %1411 = vperm.xlu0 %1410, %v1393
        %v1412 = vpop.permute.xlu0 %1411
        %v1414 = vadd.f32 %v1372, %v1397
        %v1415 = vadd.f32 %v1374, %v1397
        %v1416 = vadd.f32 %v1376, %v1402
        %v1417 = vadd.f32 %v1378, %v1402
        %v1418 = vadd.f32 %v1382, %v1407
        %v1419 = vadd.f32 %v1384, %v1407
        %v1420 = vadd.f32 %v1386, %v1412
        %v1421 = vadd.f32 %v1388, %v1412
        %v1422 = vmax.f32 %v1414, 0.0
        %v1423 = vmax.f32 %v1415, 0.0
        %v1424 = vmax.f32 %v1416, 0.0
        %v1425 = vmax.f32 %v1417, 0.0
        %v1426 = vmax.f32 %v1418, 0.0
        %v1427 = vmax.f32 %v1419, 0.0
        %v1428 = vmax.f32 %v1420, 0.0
        %v1429 = vmax.f32 %v1421, 0.0
        %1430 = vst [vmem:[%s581] sm:$0xff] %v1422
        %1431 = vst [vmem:[%s581 + $0x8] sm:$0xff] %v1423
        %1432 = vst [vmem:[%s581 + $0x10] sm:$0xff] %v1424
        %1433 = vst [vmem:[%s581 + $0x18] sm:$0xff] %v1425
        %1434 = vst [vmem:[%s581 + $0x20] sm:$0xff] %v1426
        %1435 = vst [vmem:[%s581 + $0x28] sm:$0xff] %v1427
        %1436 = vst [vmem:[%s581 + $0x30] sm:$0xff] %v1428
        %1437 = vst [vmem:[%s581 + $0x38] sm:$0xff] %v1429
        %s1438 = sand.u32 %s422, 1
        %s1439 = scalar_lea.sflag [#allocation3], %s1438
        %s1440 = sand.u32 %s422, 1
        %s1441 = smul.addr %s1440, 64
        %s1442 = scalar_lea.vmem [#allocation2], %s1441
        // Predicated region
        $region89: #{tpu_custom_call.1} parent=87 // pred_check
          %p1443 = pneg %p432
        $region90: #{tpu_custom_call.1} parent=87 // pred_check_branch
          %1445 = sbr.rel (%p1443) target = $region92
        $region91: #{tpu_custom_call.1} parent=87 // pred_region
          %s1446 = smul.u32 2, %s36
          %s1448 = ssub.s32 1024, 1024
          %1449 = vsyncadd %s1439, %s1448
          %s1450 = smul.addr %s35, 8
          %s1451 = sadd.s32 %s1446, %s1450
          %s1452 = smul.addr %s1451, 128
          %s1453 = scalar_lea.hbm %s17, %s1452
          %s1454 = sshll.u32 %s1442, 4
          %s1455 = int_to_ptr.vmem [resolvable:$true] %s1454
          %1460 = dma.vmem_to_hbm [thread:$0]  %s1455, 1024, %s1453, %s1439, 256, 256, 16
        $region92: #{tpu_custom_call.1} parent=87 // pred_fallthru
          _
      $region88: #{tpu_custom_call.1} parent=5 // pred_fallthru
        _
      %p1461 = scmp.le.s32.totalorder 2, %s26
      // Predicated region
      $region93: #{tpu_custom_call.1} parent=5 // pred_check
        %p1462 = pneg %p1461
      $region94: #{tpu_custom_call.1} parent=5 // pred_check_branch
        %1464 = sbr.rel (%p1462) target = $region96
      $region95: #{tpu_custom_call.1} parent=5 // pred_region
        %s1465 = ssub.s32 %s26, 2
        // Predicated region
        $region97: #{tpu_custom_call.1} parent=95 // pred_check
          %p1466 = pneg %p438
        $region98: #{tpu_custom_call.1} parent=95 // pred_check_branch
          %1468 = sbr.rel (%p1466) target = $region100
        $region99: #{tpu_custom_call.1} parent=95 // pred_region
          %s1469 = sand.u32 %s423, 1
          %s1470 = scalar_lea.sflag [#allocation3], %s1469
          %s1471 = sand.u32 %s423, 1
          %s1472 = smul.addr %s1471, 64
          %s1473 = scalar_lea.vmem [#allocation2], %s1472
          %1474 = dma.done %s1470, 1024
        $region100: #{tpu_custom_call.1} parent=95 // pred_fallthru
          _
      $region96: #{tpu_custom_call.1} parent=5 // pred_fallthru
        _
    $region6: #{tpu_custom_call.1} parent=1 // loop_footer
      %s30 = sadd.s32 1, %s26
    $region7: #{tpu_custom_call.1} parent=1 // loop_footer_branch
      %25 = sbr.rel target = $region3
    $region8: #{tpu_custom_call.1} parent=1 // loop_exit
      _
    %1475 = vsyncpa [#allocation3], 1
    %s1476 = scalar_lea.sflag [#allocation3], 1
    %1477 = vsyncpa %s1476, 1

</llo_original>
